<compile_context>
chip_gen: v7x
topology: tpu7x:2x2x1
jax: 0.10.0
libtpu: 0.0.40
codegen_flags: <defaults>
</compile_context>

<pallas_src>
import jax
import jax.numpy as jnp
import numpy as np
from jax.experimental import pallas as pl
from jax.experimental.pallas import tpu as pltpu


# ---------------------------------------------------------------------------
# Pallas kernel
# ---------------------------------------------------------------------------
def _make_attn_head_kernel(H, W, Hp, Wp, Bt):
    """H, W: true spatial dims.  Hp, Wp: padded (even, 8-aligned) dims."""
    HW = H * W
    HWp = Hp * Wp
    H2, W2 = H // 2, W // 2          # torch floor-pooled grid on the true map
    Hp2, Wp2 = Hp // 2, Wp // 2      # pooled grid on the padded map
    KV = Hp2 * Wp2
    need_mask = (Hp != H) or (Wp != W)

    def _maxpool2x2(x4):
        """F.max_pool2d([2,2], stride=2) on a (Bt, Hp, Wp, C') channels-last map."""
        b, hp, wp, c = x4.shape
        m1 = jnp.max(x4.reshape(b, hp, wp // 2, 2, c), axis=3)       # pool along W
        m2 = jnp.max(m1.reshape(b, hp // 2, 2, wp // 2, c), axis=2)  # pool along H
        return m2.reshape(b, (hp // 2) * (wp // 2), c)

    def kernel(x_ref, wt_ref, wp_ref, wg_ref, ohalf_ref, xmean_ref):
        x = x_ref[...]                                   # (Bt, HWp, C)  bf16
        cdt = x.dtype
        C = x.shape[-1]

        # --- 1x1 convolutions == channel matmuls; batch folded into the MXU M dim
        x2 = x.reshape(Bt * HWp, C)
        theta = jnp.dot(x2, wt_ref[...], preferred_element_type=jnp.float32)  # (Bt*HWp, C/8)
        phi = jnp.dot(x2, wp_ref[...], preferred_element_type=jnp.float32)    # (Bt*HWp, C/8)
        g = jnp.dot(x2, wg_ref[...], preferred_element_type=jnp.float32)      # (Bt*HWp, C/2)

        # --- F.max_pool2d(..., [2, 2]) per image (padded map is even)
        phi_p = _maxpool2x2(phi.reshape(Bt, Hp, Wp, -1))              # (Bt, KV, C/8) f32
        g_p = _maxpool2x2(g.astype(cdt).reshape(Bt, Hp, Wp, -1))      # (Bt, KV, C/2) bf16

        # --- beta = softmax(theta^T . phi, axis=-1), batched; contraction written
        #     directly so phi_p is never transposed/materialised.
        theta_b = theta.reshape(Bt, HWp, -1).astype(cdt)
        logits = jnp.einsum("bqc,bkc->bqk", theta_b, phi_p.astype(cdt),
                            preferred_element_type=jnp.float32)       # (Bt, HWp, KV)
        if need_mask:
            # mask pooled keys whose 2x2 window falls outside torch's floor-pooled grid
            k_idx = jax.lax.broadcasted_iota(jnp.int32, (1, KV), 1).reshape(1, 1, KV)
            k_valid = ((k_idx // Wp2) < H2) & ((k_idx % Wp2) < W2)
            logits = jnp.where(k_valid, logits, jnp.float32(-1e30))
        m = jnp.max(logits, axis=-1, keepdims=True)
        e = jnp.exp(logits - m)
        beta = e * pl.reciprocal(jnp.sum(e, axis=-1, keepdims=True), approx=True)

        # --- global average pool commutes with the (linear) o-path -> pool beta first:
        #     mean_q(gamma*o + x) = mean_q(x) + gamma * (((mean_q beta) @ g_p) @ Wo)
        #     (the Wo and fc matmuls are hoisted to the wrapper.)
        if need_mask:
            # padded query rows carry junk (uniform) beta -> exclude from the q-mean
            q_idx = jax.lax.broadcasted_iota(jnp.int32, (HWp, 1), 0).reshape(1, HWp, 1)
            q_valid = ((q_idx // Wp) < H) & ((q_idx % Wp) < W)
            beta = jnp.where(q_valid, beta, jnp.float32(0.0))
        mean_beta = jnp.sum(beta, axis=1, keepdims=True) * jnp.float32(1.0 / HW)  # (Bt,1,KV)

        o_half = jnp.einsum("bqk,bkc->bqc", mean_beta.astype(cdt), g_p,
                            preferred_element_type=jnp.float32)        # (Bt, 1, C/2)
        ohalf_ref[...] = o_half.reshape(Bt, -1)

        # residual mean: padded positions of x are zero, so sum / true HW is exact;
        # dtype-accumulating sum avoids materialising an f32 copy of the x block.
        xmean_ref[...] = jnp.sum(x, axis=1, dtype=jnp.float32) * jnp.float32(1.0 / HW)

    return kernel


# ---------------------------------------------------------------------------
# Per-generation tuning (batch tile / VMEM scoped limit)
# ---------------------------------------------------------------------------
def _default_tuning(B):
    # v5e/v6e: 128 MiB VMEM -> bigger batch tile, raise scoped limit.
    # v7x: 64 MiB / TensorCore -> tighter budget.  Actual usage at these shapes is
    # far below the limit, so a misreported capacity only affects production tuning.
    vmem_cap = 64 * 1024 * 1024
    try:
        vmem_cap = int(pltpu.get_tpu_info().vmem_capacity_bytes)
    except Exception:
        pass
    if vmem_cap >= 100 * 1024 * 1024:           # v5e / v6e
        return min(B, 16), 96 * 1024 * 1024
    return min(B, 8), 44 * 1024 * 1024          # v7x


# ---------------------------------------------------------------------------
# Wrapper (plain-JAX glue: layout conversion, padding, BlockSpecs, pallas_call,
#          and the hoisted well-shaped Wo / fc matmuls over the full batch)
# ---------------------------------------------------------------------------
def resnet50_attn_head(x_nchw, params, *, batch_tile=None):
    """x_nchw: (B, C, H, W) backbone feature map. Returns (B, out_features)."""
    B, C, H, W = x_nchw.shape
    C8, C2 = C // 8, C // 2

    # spatial padding to an even, 8-aligned grid (keeps in-kernel reshapes free)
    Hp = H + (H % 2)
    Wp = W + (W % 2)
    if (Hp * Wp) % 8 != 0:
        Wp = ((Wp + 3) // 4) * 4    # Hp even & Wp multiple of 4 -> Hp*Wp multiple of 8
    HWp = Hp * Wp

    bt_default, vmem_limit = _default_tuning(B)
    Bt = bt_default if batch_tile is None else batch_tile
    G = -(-B // Bt)                 # number of batch groups (grid size)
    B_pad = G * Bt

    cdt = jnp.bfloat16              # MXU-native operand dtype; f32 accumulation

    # NCHW -> (B, Hp*Wp, C) zero-padded channels-last, bf16
    x = jnp.transpose(x_nchw, (0, 2, 3, 1))                  # (B, H, W, C)
    if (Hp, Wp) != (H, W):
        x = jnp.pad(x, ((0, 0), (0, Hp - H), (0, Wp - W), (0, 0)))
    x = x.reshape(B, HWp, C).astype(cdt)
    if B_pad != B:
        x = jnp.pad(x, ((0, B_pad - B), (0, 0), (0, 0)))

    # Torch conv weights (O, I, 1, 1) -> matmul weights (I, O)
    w_theta = params["theta_w"][:, :, 0, 0].T.astype(cdt)    # (C, C/8)
    w_phi = params["phi_w"][:, :, 0, 0].T.astype(cdt)        # (C, C/8)
    w_g = params["g_w"][:, :, 0, 0].T.astype(cdt)            # (C, C/2)

    o_half, x_mean = pl.pallas_call(
        _make_attn_head_kernel(H, W, Hp, Wp, Bt),
        out_shape=(jax.ShapeDtypeStruct((B_pad, C2), jnp.float32),
                   jax.ShapeDtypeStruct((B_pad, C), jnp.float32)),
        grid=(G,),
        in_specs=[
            pl.BlockSpec((Bt, HWp, C), lambda g: (g, 0, 0)),   # x (batch group)
            # grid-invariant weights: single-buffered (constant index_map)
            pl.BlockSpec((C, C8), lambda g: (0, 0), pipeline_mode=pl.Buffered(1)),
            pl.BlockSpec((C, C8), lambda g: (0, 0), pipeline_mode=pl.Buffered(1)),
            pl.BlockSpec((C, C2), lambda g: (0, 0), pipeline_mode=pl.Buffered(1)),
        ],
        out_specs=[pl.BlockSpec((Bt, C2), lambda g: (g, 0)),   # o_half
                   pl.BlockSpec((Bt, C), lambda g: (g, 0))],   # x_mean
        compiler_params=pltpu.CompilerParams(
            dimension_semantics=("parallel",),
            vmem_limit_bytes=vmem_limit),
    )(x, w_theta, w_phi, w_g)

    o_half = o_half[:B]
    x_mean = x_mean[:B]

    # Hoisted tiny-M matmuls: well-shaped XLA matmuls over the full batch (f32).
    gamma = jnp.asarray(params["gamma"], jnp.float32)
    w_o = params["o_w"][:, :, 0, 0].T.astype(jnp.float32)     # (C/2, C)
    feat = x_mean + gamma * (o_half @ w_o)                    # (B, C)
    w_fc = params["fc_w"].T.astype(jnp.float32)               # (C, F)
    b_fc = params["fc_b"].astype(jnp.float32)
    return feat @ w_fc + b_fc


# ---------------------------------------------------------------------------
# Deterministic parameter init (shapes follow the torch module __init__)
# ---------------------------------------------------------------------------
def init_params(key, ch, out_features):
    ks = jax.random.split(key, 6)
    s = 0.05
    return {
        "theta_w": s * jax.random.normal(ks[0], (ch // 8, ch, 1, 1), jnp.float32),
        "phi_w":   s * jax.random.normal(ks[1], (ch // 8, ch, 1, 1), jnp.float32),
        "g_w":     s * jax.random.normal(ks[2], (ch // 2, ch, 1, 1), jnp.float32),
        "o_w":     s * jax.random.normal(ks[3], (ch, ch // 2, 1, 1), jnp.float32),
        # torch init is gamma = 0.0; use a nonzero deterministic value so the
        # attention path actually contributes to the tested output.
        "gamma":   jnp.array(0.5, jnp.float32),
        "fc_w":    s * jax.random.normal(ks[4], (out_features, ch), jnp.float32),
        "fc_b":    s * jax.random.normal(ks[5], (out_features,), jnp.float32),
    }


# ---------------------------------------------------------------------------
# Pure-JAX reference (mirrors the torch forward math) for a correctness check
# ---------------------------------------------------------------------------
def _maxpool2x2_nchw(x):
    B, C, H, W = x.shape
    H2, W2 = H // 2, W // 2
    x = x[:, :, :2 * H2, :2 * W2]
    return x.reshape(B, C, H2, 2, W2, 2).max(axis=(3, 5))


def reference_forward(x_nchw, params):
    B, C, H, W = x_nchw.shape
    HW = H * W
    conv = lambda w, inp: jnp.einsum("oc,bchw->bohw", w[:, :, 0, 0], inp)
    theta = conv(params["theta_w"], x_nchw)                    # (B, C/8, H, W)
    phi = _maxpool2x2_nchw(conv(params["phi_w"], x_nchw))      # (B, C/8, H//2, W//2)
    g = _maxpool2x2_nchw(conv(params["g_w"], x_nchw))          # (B, C/2, H//2, W//2)
    theta_v = theta.reshape(B, C // 8, HW)
    phi_v = phi.reshape(B, C // 8, -1)
    g_v = g.reshape(B, C // 2, -1)
    beta = jax.nn.softmax(jnp.einsum("bcq,bck->bqk", theta_v, phi_v), axis=-1)
    o_pre = jnp.einsum("bck,bqk->bcq", g_v, beta).reshape(B, C // 2, H, W)
    o = conv(params["o_w"], o_pre)                             # (B, C, H, W)
    attn = params["gamma"] * o + x_nchw
    feat = attn.mean(axis=(2, 3))                              # global avg pool
    return feat @ params["fc_w"].T + params["fc_b"]


# ---------------------------------------------------------------------------
if __name__ == "__main__":
    key = jax.random.PRNGKey(0)
    B, CH = 2, 64
    OUT_FEATURES = 16
    k_params, k_x8, k_x7 = jax.random.split(key, 3)
    params = init_params(k_params, CH, OUT_FEATURES)

    # Test 1: even, 8-aligned spatial map (no padding / masking path).
    x8 = jax.random.normal(k_x8, (B, CH, 8, 8), jnp.float32)
    out8 = jax.block_until_ready(resnet50_attn_head(x8, params))
    ref8 = reference_forward(x8, params)
    if not np.allclose(np.asarray(out8), np.asarray(ref8), rtol=2e-2, atol=2e-2):
        err = np.max(np.abs(np.asarray(out8) - np.asarray(ref8)))
        raise AssertionError(f"8x8 mismatch: max abs err = {err}")

    # Test 2: odd 7x7 map (production spatial size) -> exercises the
    # pad-to-8x8 + pooled-key / query masking path.
    x7 = jax.random.normal(k_x7, (B, CH, 7, 7), jnp.float32)
    out7 = jax.block_until_ready(resnet50_attn_head(x7, params))
    ref7 = reference_forward(x7, params)
    if not np.allclose(np.asarray(out7), np.asarray(ref7), rtol=2e-2, atol=2e-2):
        err = np.max(np.abs(np.asarray(out7) - np.asarray(ref7)))
        raise AssertionError(f"7x7 mismatch: max abs err = {err}")

    print("KERNEL_OK")
</pallas_src>

<mosaic_0001>
module attributes {stable_mosaic.version = 11 : i64} {
  func.func @kernel(%arg0: i32, %arg1: memref<2x64x64xbf16, #tpu.memory_space<vmem>>, %arg2: memref<64x8xbf16, #tpu.memory_space<vmem>>, %arg3: memref<64x8xbf16, #tpu.memory_space<vmem>>, %arg4: memref<64x32xbf16, #tpu.memory_space<vmem>>, %arg5: memref<2x32xf32, #tpu.memory_space<vmem>>, %arg6: memref<2x64xf32, #tpu.memory_space<vmem>>) attributes {dimension_semantics = [#tpu.dimension_semantics<parallel>], iteration_bounds = array<i64: 1>, scalar_prefetch = 0 : i64, scratch_operands = 0 : i64, tpu.core_type = #tpu.core_type<tc>, window_params = [{transform_indices = @transform_0, window_bounds = array<i64: 2, 64, 64>}, {pipeline_mode = #tpu.pipeline_mode<synchronous>, transform_indices = @transform_1, window_bounds = array<i64: 64, 8>}, {pipeline_mode = #tpu.pipeline_mode<synchronous>, transform_indices = @transform_2, window_bounds = array<i64: 64, 8>}, {pipeline_mode = #tpu.pipeline_mode<synchronous>, transform_indices = @transform_3, window_bounds = array<i64: 64, 32>}, {transform_indices = @transform_4, window_bounds = array<i64: 2, 32>}, {transform_indices = @transform_5, window_bounds = array<i64: 2, 64>}]} {
    %c0 = arith.constant 0 : index
    %c0_0 = arith.constant 0 : index
    %c0_1 = arith.constant 0 : index
    %0 = vector.load %arg1[%c0, %c0_0, %c0_1] : memref<2x64x64xbf16, #tpu.memory_space<vmem>>, vector<2x64x64xbf16>
    %1 = vector.shape_cast %0 : vector<2x64x64xbf16> to vector<128x64xbf16>
    %c0_2 = arith.constant 0 : index
    %c0_3 = arith.constant 0 : index
    %2 = vector.load %arg2[%c0_2, %c0_3] : memref<64x8xbf16, #tpu.memory_space<vmem>>, vector<64x8xbf16>
    %cst = arith.constant dense<0.000000e+00> : vector<128x8xf32>
    %3 = tpu.matmul %1, %2, %cst {dimension_numbers = #tpu.dot_dimension_numbers<[1], [0], [0], [1], [0, 0, 1, 1], [], []>} : vector<128x64xbf16>, vector<64x8xbf16>, vector<128x8xf32> -> vector<128x8xf32>
    %c0_4 = arith.constant 0 : index
    %c0_5 = arith.constant 0 : index
    %4 = vector.load %arg3[%c0_4, %c0_5] : memref<64x8xbf16, #tpu.memory_space<vmem>>, vector<64x8xbf16>
    %cst_6 = arith.constant dense<0.000000e+00> : vector<128x8xf32>
    %5 = tpu.matmul %1, %4, %cst_6 {dimension_numbers = #tpu.dot_dimension_numbers<[1], [0], [0], [1], [0, 0, 1, 1], [], []>} : vector<128x64xbf16>, vector<64x8xbf16>, vector<128x8xf32> -> vector<128x8xf32>
    %c0_7 = arith.constant 0 : index
    %c0_8 = arith.constant 0 : index
    %6 = vector.load %arg4[%c0_7, %c0_8] : memref<64x32xbf16, #tpu.memory_space<vmem>>, vector<64x32xbf16>
    %cst_9 = arith.constant dense<0.000000e+00> : vector<128x32xf32>
    %7 = tpu.matmul %1, %6, %cst_9 {dimension_numbers = #tpu.dot_dimension_numbers<[1], [0], [0], [1], [0, 0, 1, 1], [], []>} : vector<128x64xbf16>, vector<64x32xbf16>, vector<128x32xf32> -> vector<128x32xf32>
    %8 = vector.shape_cast %5 : vector<128x8xf32> to vector<2x8x8x8xf32>
    %9 = vector.shape_cast %8 : vector<2x8x8x8xf32> to vector<2x8x4x2x8xf32>
    %cst_10 = arith.constant dense<0xFF800000> : vector<2x8x4x8xf32>
    %10 = vector.multi_reduction <maximumf>, %9, %cst_10 [3] : vector<2x8x4x2x8xf32> to vector<2x8x4x8xf32>
    %11 = vector.shape_cast %10 : vector<2x8x4x8xf32> to vector<2x4x2x4x8xf32>
    %cst_11 = arith.constant dense<0xFF800000> : vector<2x4x4x8xf32>
    %12 = vector.multi_reduction <maximumf>, %11, %cst_11 [2] : vector<2x4x2x4x8xf32> to vector<2x4x4x8xf32>
    %13 = vector.shape_cast %12 : vector<2x4x4x8xf32> to vector<2x16x8xf32>
    %14 = arith.truncf %7 : vector<128x32xf32> to vector<128x32xbf16>
    %15 = vector.shape_cast %14 : vector<128x32xbf16> to vector<2x8x8x32xbf16>
    %16 = vector.shape_cast %15 : vector<2x8x8x32xbf16> to vector<2x8x4x2x32xbf16>
    %cst_12 = arith.constant dense<0xFF80> : vector<2x8x4x32xbf16>
    %17 = vector.multi_reduction <maximumf>, %16, %cst_12 [3] : vector<2x8x4x2x32xbf16> to vector<2x8x4x32xbf16>
    %18 = vector.shape_cast %17 : vector<2x8x4x32xbf16> to vector<2x4x2x4x32xbf16>
    %cst_13 = arith.constant dense<0xFF80> : vector<2x4x4x32xbf16>
    %19 = vector.multi_reduction <maximumf>, %18, %cst_13 [2] : vector<2x4x2x4x32xbf16> to vector<2x4x4x32xbf16>
    %20 = vector.shape_cast %19 : vector<2x4x4x32xbf16> to vector<2x16x32xbf16>
    %21 = vector.shape_cast %3 : vector<128x8xf32> to vector<2x64x8xf32>
    %22 = arith.truncf %21 : vector<2x64x8xf32> to vector<2x64x8xbf16>
    %23 = arith.truncf %13 : vector<2x16x8xf32> to vector<2x16x8xbf16>
    "tpu.trace_start"() <{level = 10 : i32, message = "bqc,bkc->bqk"}> : () -> ()
    %cst_14 = arith.constant dense<0.000000e+00> : vector<2x64x16xf32>
    %24 = tpu.matmul %22, %23, %cst_14 {dimension_numbers = #tpu.dot_dimension_numbers<[2], [2], [1], [1], [0, 0, 0, 1, 1, 1], [0], [0]>} : vector<2x64x8xbf16>, vector<2x16x8xbf16>, vector<2x64x16xf32> -> vector<2x64x16xf32>
    "tpu.trace_stop"() : () -> ()
    %cst_15 = arith.constant dense<0xFF800000> : vector<2x64xf32>
    %25 = vector.multi_reduction <maximumf>, %24, %cst_15 [2] : vector<2x64x16xf32> to vector<2x64xf32>
    %26 = vector.shape_cast %25 : vector<2x64xf32> to vector<2x64x1xf32>
    %27 = vector.broadcast %26 : vector<2x64x1xf32> to vector<2x64x16xf32>
    %28 = arith.subf %24, %27 : vector<2x64x16xf32>
    %29 = math.exp %28 : vector<2x64x16xf32>
    %cst_16 = arith.constant dense<0.000000e+00> : vector<2x64xf32>
    %30 = vector.multi_reduction <add>, %29, %cst_16 [2] : vector<2x64x16xf32> to vector<2x64xf32>
    %31 = vector.shape_cast %30 : vector<2x64xf32> to vector<2x64x1xf32>
    %32 = tpu.reciprocal %31 {approx = true} : vector<2x64x1xf32> -> vector<2x64x1xf32>
    %33 = vector.broadcast %32 : vector<2x64x1xf32> to vector<2x64x16xf32>
    %34 = arith.mulf %29, %33 : vector<2x64x16xf32>
    %cst_17 = arith.constant dense<0.000000e+00> : vector<2x16xf32>
    %35 = vector.multi_reduction <add>, %34, %cst_17 [1] : vector<2x64x16xf32> to vector<2x16xf32>
    %36 = vector.shape_cast %35 : vector<2x16xf32> to vector<2x1x16xf32>
    %cst_18 = arith.constant 1.562500e-02 : f32
    %37 = vector.broadcast %cst_18 : f32 to vector<2x1x16xf32>
    %38 = arith.mulf %36, %37 : vector<2x1x16xf32>
    %39 = arith.truncf %38 : vector<2x1x16xf32> to vector<2x1x16xbf16>
    "tpu.trace_start"() <{level = 10 : i32, message = "bqk,bkc->bqc"}> : () -> ()
    %cst_19 = arith.constant dense<0.000000e+00> : vector<2x1x32xf32>
    %40 = tpu.matmul %39, %20, %cst_19 {dimension_numbers = #tpu.dot_dimension_numbers<[2], [1], [1], [2], [0, 0, 0, 1, 1, 2], [0], [0]>} : vector<2x1x16xbf16>, vector<2x16x32xbf16>, vector<2x1x32xf32> -> vector<2x1x32xf32>
    "tpu.trace_stop"() : () -> ()
    %41 = vector.shape_cast %40 : vector<2x1x32xf32> to vector<2x32xf32>
    %c0_20 = arith.constant 0 : index
    %c0_21 = arith.constant 0 : index
    %42 = vector.load %arg5[%c0_20, %c0_21] : memref<2x32xf32, #tpu.memory_space<vmem>>, vector<2x32xf32>
    tpu.vector_store %arg5[%c0_20, %c0_21], %41 {strides = array<i32>} : memref<2x32xf32, #tpu.memory_space<vmem>>, vector<2x32xf32>,
    %43 = arith.extf %0 : vector<2x64x64xbf16> to vector<2x64x64xf32>
    %cst_22 = arith.constant dense<0.000000e+00> : vector<2x64xf32>
    %44 = vector.multi_reduction <add>, %43, %cst_22 [1] : vector<2x64x64xf32> to vector<2x64xf32>
    %cst_23 = arith.constant 1.562500e-02 : f32
    %45 = vector.broadcast %cst_23 : f32 to vector<2x64xf32>
    %46 = arith.mulf %44, %45 : vector<2x64xf32>
    %c0_24 = arith.constant 0 : index
    %c0_25 = arith.constant 0 : index
    %47 = vector.load %arg6[%c0_24, %c0_25] : memref<2x64xf32, #tpu.memory_space<vmem>>, vector<2x64xf32>
    tpu.vector_store %arg6[%c0_24, %c0_25], %46 {strides = array<i32>} : memref<2x64xf32, #tpu.memory_space<vmem>>, vector<2x64xf32>,
    return
  }
  func.func @transform_0(%arg0: i32) -> (i32, i32, i32) {
    %c0_i32 = arith.constant 0 : i32
    %c0_i32_0 = arith.constant 0 : i32
    %c0_i32_1 = arith.constant 0 : i32
    return %arg0, %c0_i32, %c0_i32_0 : i32, i32, i32
  }
  func.func @transform_1(%arg0: i32) -> (i32, i32) {
    %c0_i32 = arith.constant 0 : i32
    %c0_i32_0 = arith.constant 0 : i32
    %c0_i32_1 = arith.constant 0 : i32
    return %c0_i32, %c0_i32_0 : i32, i32
  }
  func.func @transform_2(%arg0: i32) -> (i32, i32) {
    %c0_i32 = arith.constant 0 : i32
    %c0_i32_0 = arith.constant 0 : i32
    %c0_i32_1 = arith.constant 0 : i32
    return %c0_i32, %c0_i32_0 : i32, i32
  }
  func.func @transform_3(%arg0: i32) -> (i32, i32) {
    %c0_i32 = arith.constant 0 : i32
    %c0_i32_0 = arith.constant 0 : i32
    %c0_i32_1 = arith.constant 0 : i32
    return %c0_i32, %c0_i32_0 : i32, i32
  }
  func.func @transform_4(%arg0: i32) -> (i32, i32) {
    %c0_i32 = arith.constant 0 : i32
    %c0_i32_0 = arith.constant 0 : i32
    return %arg0, %c0_i32 : i32, i32
  }
  func.func @transform_5(%arg0: i32) -> (i32, i32) {
    %c0_i32 = arith.constant 0 : i32
    %c0_i32_0 = arith.constant 0 : i32
    return %arg0, %c0_i32 : i32, i32
  }
}

</mosaic_0001>

<llo_original>
// kernel: tpu_custom_call.1
$region0: #{tpu_custom_call.1}
  #allocation0 [shape = 'u32[]', space=smem, size = 0x4, offset = 0x4, fixed_abs, tag = 'smem constant byte address 0x4 - core index']
  #allocation1 [shape = 'u32[144,128]{1,0:T(1,128)}', space=vmem, size = 0x12000, scoped, tag = 'internal scratch']
  %s0 = inlined_call_operand.vmem [shape: bf16[2,64,64], index: 0, kind: input, shape index: {}]
  %s1 = inlined_call_operand.vmem [shape: bf16[64,8], index: 1, kind: input, shape index: {}]
  %s2 = inlined_call_operand.vmem [shape: bf16[64,8], index: 2, kind: input, shape index: {}]
  %s3 = inlined_call_operand.vmem [shape: bf16[64,32], index: 3, kind: input, shape index: {}]
  %s4 = inlined_call_operand.hbm [shape: f32[2,32], index: 4, kind: output, shape index: {0}]
  %s5 = inlined_call_operand.hbm [shape: f32[2,64], index: 5, kind: output, shape index: {1}]
  %6 = xla_tuple %s4, %s5
  %s7 = sld [smem:[#allocation0]]
  $region34: #{tpu_custom_call.1} parent=0
    _
  %s9 = ssub.s32 1, %s7
  %s10 = scalar_select 0, %s9, %s7
  $region1: #{tpu_custom_call.1} parent=0
    #allocation2 [shape = 'u8[1024]{0}', space=vmem, size = 0x400, scoped, tag = 'output window, operand 0, single buffered']
    #allocation3 [shape = 's32[1]{0}', space=sflag, size = 0x4, scoped, tag = 'scoped memory for tpu_custom_call.1']
    #allocation4 [shape = 'u8[1024]{0}', space=vmem, size = 0x400, scoped, tag = 'output window, operand 1, single buffered']
    #allocation5 [shape = 's32[1]{0}', space=sflag, size = 0x4, scoped, tag = 'scoped memory for tpu_custom_call.1']
    %11 = vsyncpa [#allocation3], 0
    %12 = vsyncpa [#allocation5], 0
    // Predicated region
    $region2: #{tpu_custom_call.1} parent=1 // pred_check
      _
    $region3: #{tpu_custom_call.1} parent=1 // pred_check_branch
      %14 = sbr.rel (0) target = $region5
    $region4: #{tpu_custom_call.1} parent=1 // pred_region
      _
    $region5: #{tpu_custom_call.1} parent=1 // pred_fallthru
      _
    // Predicated region
    $region6: #{tpu_custom_call.1} parent=1 // pred_check
      _
    $region7: #{tpu_custom_call.1} parent=1 // pred_check_branch
      %16 = sbr.rel (0) target = $region9
    $region8: #{tpu_custom_call.1} parent=1 // pred_region
      _
    $region9: #{tpu_custom_call.1} parent=1 // pred_fallthru
      _
    // Predicated region
    $region10: #{tpu_custom_call.1} parent=1 // pred_check
      _
    $region11: #{tpu_custom_call.1} parent=1 // pred_check_branch
      %18 = sbr.rel (0) target = $region13
    $region12: #{tpu_custom_call.1} parent=1 // pred_region
      _
    $region13: #{tpu_custom_call.1} parent=1 // pred_fallthru
      _
    // Predicated region
    $region14: #{tpu_custom_call.1} parent=1 // pred_check
      _
    $region15: #{tpu_custom_call.1} parent=1 // pred_check_branch
      %20 = sbr.rel (0) target = $region17
    $region16: #{tpu_custom_call.1} parent=1 // pred_region
      _
    $region17: #{tpu_custom_call.1} parent=1 // pred_fallthru
      _
    %v23 = vld [vmem:[%s0] sm:$0xf]
    %v24 = vld [vmem:[%s0 + $0x4] sm:$0xf]
    %v25 = vld [vmem:[%s0 + $0x8] sm:$0xf]
    %v26 = vld [vmem:[%s0 + $0xc] sm:$0xf]
    %v27 = vld [vmem:[%s0 + $0x10] sm:$0xf]
    %v28 = vld [vmem:[%s0 + $0x14] sm:$0xf]
    %v29 = vld [vmem:[%s0 + $0x18] sm:$0xf]
    %v30 = vld [vmem:[%s0 + $0x1c] sm:$0xf]
    %v31 = vld [vmem:[%s0 + $0x20] sm:$0xf]
    %v32 = vld [vmem:[%s0 + $0x24] sm:$0xf]
    %v33 = vld [vmem:[%s0 + $0x28] sm:$0xf]
    %v34 = vld [vmem:[%s0 + $0x2c] sm:$0xf]
    %v35 = vld [vmem:[%s0 + $0x30] sm:$0xf]
    %v36 = vld [vmem:[%s0 + $0x34] sm:$0xf]
    %v37 = vld [vmem:[%s0 + $0x38] sm:$0xf]
    %v38 = vld [vmem:[%s0 + $0x3c] sm:$0xf]
    %v39 = vld [vmem:[%s1] sm:$0xf]
    %v40 = vld [vmem:[%s1 + $0x4] sm:$0xf]
    %v41 = vld [vmem:[%s1 + $0x8] sm:$0xf]
    %v42 = vld [vmem:[%s1 + $0xc] sm:$0xf]
    %v43 = vld [vmem:[%s1 + $0x10] sm:$0xf]
    %v44 = vld [vmem:[%s1 + $0x14] sm:$0xf]
    %v45 = vld [vmem:[%s1 + $0x18] sm:$0xf]
    %v46 = vld [vmem:[%s1 + $0x1c] sm:$0xf]
    %v63 = vunpack.c.l.b16 %v23
    %v64 = vunpack.c.l.b16 %v24
    %v65 = vunpack.c.l.b16 %v25
    %v66 = vunpack.c.l.b16 %v26
    %v67 = vunpack.c.l.b16 %v27
    %v68 = vunpack.c.l.b16 %v28
    %v69 = vunpack.c.l.b16 %v29
    %v70 = vunpack.c.l.b16 %v30
    %v71 = vunpack.c.l.b16 %v31
    %v72 = vunpack.c.l.b16 %v32
    %v73 = vunpack.c.l.b16 %v33
    %v74 = vunpack.c.l.b16 %v34
    %v75 = vunpack.c.l.b16 %v35
    %v76 = vunpack.c.l.b16 %v36
    %v77 = vunpack.c.l.b16 %v37
    %v78 = vunpack.c.l.b16 %v38
    %v79 = vpack.c.b16 %v64, %v63
    %v80 = vpack.c.b16 %v66, %v65
    %v81 = vpack.c.b16 %v68, %v67
    %v82 = vpack.c.b16 %v70, %v69
    %v83 = vpack.c.b16 %v72, %v71
    %v84 = vpack.c.b16 %v74, %v73
    %v85 = vpack.c.b16 %v76, %v75
    %v86 = vpack.c.b16 %v78, %v77
    %v95 = vunpack.c.l.b16 %v39
    %v96 = vunpack.c.l.b16 %v40
    %v97 = vunpack.c.l.b16 %v41
    %v98 = vunpack.c.l.b16 %v42
    %v99 = vunpack.c.l.b16 %v43
    %v100 = vunpack.c.l.b16 %v44
    %v101 = vunpack.c.l.b16 %v45
    %v102 = vunpack.c.l.b16 %v46
    %v103 = vpack.c.b16 %v96, %v95
    %v104 = vpack.c.b16 %v98, %v97
    %v105 = vpack.c.b16 %v100, %v99
    %v106 = vpack.c.b16 %v102, %v101
    %vm111 = vcmask 523264
    %v113 = vsel %vm111, %v79, 0
    %v116 = vsel %vm111, %v80, 0
    %v119 = vsel %vm111, %v81, 0
    %v122 = vsel %vm111, %v82, 0
    %v125 = vsel %vm111, %v83, 0
    %v128 = vsel %vm111, %v84, 0
    %v131 = vsel %vm111, %v85, 0
    %v134 = vsel %vm111, %v86, 0
    %136 = vmatprep.subr.bf16.mxu0 0
    %137 = vmatpush1.bf16.msra.mxu0 %v103
    %138 = vmatprep.subr.bf16.mxu0 0
    %139 = vmatpush1.bf16.msra.mxu0 %v104
    %140 = vmatprep.subr.bf16.mxu0 0
    %141 = vmatpush1.bf16.msra.mxu0 %v105
    %142 = vmatprep.subr.bf16.mxu0 0
    %143 = vmatpush1.bf16.msra.mxu0 %v106
    %144 = vmatprep.subr.bf16.mxu0 0
    %145 = vmatpush1.bf16.msra.mxu0 0
    %146 = vmatprep.subr.bf16.mxu0 0
    %147 = vmatpush1.bf16.msra.mxu0 0
    %148 = vmatprep.subr.bf16.mxu0 0
    %149 = vmatpush1.bf16.msra.mxu0 0
    %150 = vmatprep.subr.bf16.mxu0 0
    %151 = vmatpush1.bf16.msra.mxu0 0
    %152 = vmatprep.subr.bf16.mxu0 0
    %153 = vmatpush1.bf16.msra.mxu0 0
    %154 = vmatprep.subr.bf16.mxu0 0
    %155 = vmatpush1.bf16.msra.mxu0 0
    %156 = vmatprep.subr.bf16.mxu0 0
    %157 = vmatpush1.bf16.msra.mxu0 0
    %158 = vmatprep.subr.bf16.mxu0 0
    %159 = vmatpush1.bf16.msra.mxu0 0
    %160 = vmatprep.subr.bf16.mxu0 0
    %161 = vmatpush1.bf16.msra.mxu0 0
    %162 = vmatprep.subr.bf16.mxu0 0
    %163 = vmatpush1.bf16.msra.mxu0 0
    %164 = vmatprep.subr.bf16.mxu0 0
    %165 = vmatpush1.bf16.msra.mxu0 0
    %166 = vmatprep.subr.bf16.mxu0 0
    %167 = vmatpush1.bf16.msra.mxu0 0
    %168 = vmatprep.mubr.bf16.mxu0 0
    %169 = vmatmul.mubr.bf16.gmra.mrb[0].mxu0 %v113
    %v170 = vpop.f32.mrb[0].mxu0
    %v171 = vadd.f32 0.0, %v170
    %v172 = vpop.f32.mrb[0].mxu0
    %v173 = vpop.f32.mrb[0].mxu0
    %v174 = vadd.f32 0.0, %v173
    %v175 = vpop.f32.mrb[0].mxu0
    %176 = vmatprep.mubr.bf16.mxu0 0
    %177 = vmatmul.mubr.bf16.gmra.mrb[0].mxu0 %v116
    %v178 = vpop.f32.mrb[0].mxu0
    %v179 = vadd.f32 0.0, %v178
    %v180 = vpop.f32.mrb[0].mxu0
    %v181 = vpop.f32.mrb[0].mxu0
    %v182 = vadd.f32 0.0, %v181
    %v183 = vpop.f32.mrb[0].mxu0
    %184 = vmatprep.mubr.bf16.mxu0 0
    %185 = vmatmul.mubr.bf16.gmra.mrb[0].mxu0 %v119
    %v186 = vpop.f32.mrb[0].mxu0
    %v187 = vadd.f32 0.0, %v186
    %v188 = vpop.f32.mrb[0].mxu0
    %v189 = vpop.f32.mrb[0].mxu0
    %v190 = vadd.f32 0.0, %v189
    %v191 = vpop.f32.mrb[0].mxu0
    %192 = vmatprep.mubr.bf16.mxu0 0
    %193 = vmatmul.mubr.bf16.gmra.mrb[0].mxu0 %v122
    %v194 = vpop.f32.mrb[0].mxu0
    %v195 = vadd.f32 0.0, %v194
    %v196 = vpop.f32.mrb[0].mxu0
    %v197 = vpop.f32.mrb[0].mxu0
    %v198 = vadd.f32 0.0, %v197
    %v199 = vpop.f32.mrb[0].mxu0
    %200 = vmatprep.mubr.bf16.mxu0 0
    %201 = vmatmul.mubr.bf16.gmra.mrb[0].mxu0 %v125
    %v202 = vpop.f32.mrb[0].mxu0
    %v203 = vadd.f32 0.0, %v202
    %v204 = vpop.f32.mrb[0].mxu0
    %v205 = vpop.f32.mrb[0].mxu0
    %v206 = vadd.f32 0.0, %v205
    %v207 = vpop.f32.mrb[0].mxu0
    %208 = vmatprep.mubr.bf16.mxu0 0
    %209 = vmatmul.mubr.bf16.gmra.mrb[0].mxu0 %v128
    %v210 = vpop.f32.mrb[0].mxu0
    %v211 = vadd.f32 0.0, %v210
    %v212 = vpop.f32.mrb[0].mxu0
    %v213 = vpop.f32.mrb[0].mxu0
    %v214 = vadd.f32 0.0, %v213
    %v215 = vpop.f32.mrb[0].mxu0
    %216 = vmatprep.mubr.bf16.mxu0 0
    %217 = vmatmul.mubr.bf16.gmra.mrb[0].mxu0 %v131
    %v218 = vpop.f32.mrb[0].mxu0
    %v219 = vadd.f32 0.0, %v218
    %v220 = vpop.f32.mrb[0].mxu0
    %v221 = vpop.f32.mrb[0].mxu0
    %v222 = vadd.f32 0.0, %v221
    %v223 = vpop.f32.mrb[0].mxu0
    %224 = vmatprep.mubr.bf16.mxu0 0
    %225 = vmatmul.mubr.bf16.gmra.mrb[0].mxu0 %v134
    %v226 = vpop.f32.mrb[0].mxu0
    %v227 = vadd.f32 0.0, %v226
    %v228 = vpop.f32.mrb[0].mxu0
    %v229 = vpop.f32.mrb[0].mxu0
    %v230 = vadd.f32 0.0, %v229
    %v231 = vpop.f32.mrb[0].mxu0
    %232 = vdwg.mxu0
    %v233 = vld [vmem:[%s2] sm:$0xf]
    %v234 = vld [vmem:[%s2 + $0x4] sm:$0xf]
    %v235 = vld [vmem:[%s2 + $0x8] sm:$0xf]
    %v236 = vld [vmem:[%s2 + $0xc] sm:$0xf]
    %v237 = vld [vmem:[%s2 + $0x10] sm:$0xf]
    %v238 = vld [vmem:[%s2 + $0x14] sm:$0xf]
    %v239 = vld [vmem:[%s2 + $0x18] sm:$0xf]
    %v240 = vld [vmem:[%s2 + $0x1c] sm:$0xf]
    %v249 = vunpack.c.l.b16 %v233
    %v250 = vunpack.c.l.b16 %v234
    %v251 = vunpack.c.l.b16 %v235
    %v252 = vunpack.c.l.b16 %v236
    %v253 = vunpack.c.l.b16 %v237
    %v254 = vunpack.c.l.b16 %v238
    %v255 = vunpack.c.l.b16 %v239
    %v256 = vunpack.c.l.b16 %v240
    %v257 = vpack.c.b16 %v250, %v249
    %v258 = vpack.c.b16 %v252, %v251
    %v259 = vpack.c.b16 %v254, %v253
    %v260 = vpack.c.b16 %v256, %v255
    %265 = vmatprep.subr.bf16.mxu0 0
    %266 = vmatpush1.bf16.msra.mxu0 %v257
    %267 = vmatprep.subr.bf16.mxu0 0
    %268 = vmatpush1.bf16.msra.mxu0 %v258
    %269 = vmatprep.subr.bf16.mxu0 0
    %270 = vmatpush1.bf16.msra.mxu0 %v259
    %271 = vmatprep.subr.bf16.mxu0 0
    %272 = vmatpush1.bf16.msra.mxu0 %v260
    %273 = vmatprep.subr.bf16.mxu0 0
    %274 = vmatpush1.bf16.msra.mxu0 0
    %275 = vmatprep.subr.bf16.mxu0 0
    %276 = vmatpush1.bf16.msra.mxu0 0
    %277 = vmatprep.subr.bf16.mxu0 0
    %278 = vmatpush1.bf16.msra.mxu0 0
    %279 = vmatprep.subr.bf16.mxu0 0
    %280 = vmatpush1.bf16.msra.mxu0 0
    %281 = vmatprep.subr.bf16.mxu0 0
    %282 = vmatpush1.bf16.msra.mxu0 0
    %283 = vmatprep.subr.bf16.mxu0 0
    %284 = vmatpush1.bf16.msra.mxu0 0
    %285 = vmatprep.subr.bf16.mxu0 0
    %286 = vmatpush1.bf16.msra.mxu0 0
    %287 = vmatprep.subr.bf16.mxu0 0
    %288 = vmatpush1.bf16.msra.mxu0 0
    %289 = vmatprep.subr.bf16.mxu0 0
    %290 = vmatpush1.bf16.msra.mxu0 0
    %291 = vmatprep.subr.bf16.mxu0 0
    %292 = vmatpush1.bf16.msra.mxu0 0
    %293 = vmatprep.subr.bf16.mxu0 0
    %294 = vmatpush1.bf16.msra.mxu0 0
    %295 = vmatprep.subr.bf16.mxu0 0
    %296 = vmatpush1.bf16.msra.mxu0 0
    %297 = vmatprep.mubr.bf16.mxu0 0
    %298 = vmatmul.mubr.bf16.gmra.mrb[0].mxu0 %v113
    %v299 = vpop.f32.mrb[0].mxu0
    %v300 = vadd.f32 0.0, %v299
    %v301 = vpop.f32.mrb[0].mxu0
    %v302 = vpop.f32.mrb[0].mxu0
    %v303 = vadd.f32 0.0, %v302
    %v304 = vpop.f32.mrb[0].mxu0
    %305 = vmatprep.mubr.bf16.mxu0 0
    %306 = vmatmul.mubr.bf16.gmra.mrb[0].mxu0 %v116
    %v307 = vpop.f32.mrb[0].mxu0
    %v308 = vadd.f32 0.0, %v307
    %v309 = vpop.f32.mrb[0].mxu0
    %v310 = vpop.f32.mrb[0].mxu0
    %v311 = vadd.f32 0.0, %v310
    %v312 = vpop.f32.mrb[0].mxu0
    %313 = vmatprep.mubr.bf16.mxu0 0
    %314 = vmatmul.mubr.bf16.gmra.mrb[0].mxu0 %v119
    %v315 = vpop.f32.mrb[0].mxu0
    %v316 = vadd.f32 0.0, %v315
    %v317 = vpop.f32.mrb[0].mxu0
    %v318 = vpop.f32.mrb[0].mxu0
    %v319 = vadd.f32 0.0, %v318
    %v320 = vpop.f32.mrb[0].mxu0
    %321 = vmatprep.mubr.bf16.mxu0 0
    %322 = vmatmul.mubr.bf16.gmra.mrb[0].mxu0 %v122
    %v323 = vpop.f32.mrb[0].mxu0
    %v324 = vadd.f32 0.0, %v323
    %v325 = vpop.f32.mrb[0].mxu0
    %v326 = vpop.f32.mrb[0].mxu0
    %v327 = vadd.f32 0.0, %v326
    %v328 = vpop.f32.mrb[0].mxu0
    %329 = vmatprep.mubr.bf16.mxu0 0
    %330 = vmatmul.mubr.bf16.gmra.mrb[0].mxu0 %v125
    %v331 = vpop.f32.mrb[0].mxu0
    %v332 = vadd.f32 0.0, %v331
    %v333 = vpop.f32.mrb[0].mxu0
    %v334 = vpop.f32.mrb[0].mxu0
    %v335 = vadd.f32 0.0, %v334
    %v336 = vpop.f32.mrb[0].mxu0
    %337 = vmatprep.mubr.bf16.mxu0 0
    %338 = vmatmul.mubr.bf16.gmra.mrb[0].mxu0 %v128
    %v339 = vpop.f32.mrb[0].mxu0
    %v340 = vadd.f32 0.0, %v339
    %v341 = vpop.f32.mrb[0].mxu0
    %v342 = vpop.f32.mrb[0].mxu0
    %v343 = vadd.f32 0.0, %v342
    %v344 = vpop.f32.mrb[0].mxu0
    %345 = vmatprep.mubr.bf16.mxu0 0
    %346 = vmatmul.mubr.bf16.gmra.mrb[0].mxu0 %v131
    %v347 = vpop.f32.mrb[0].mxu0
    %v348 = vadd.f32 0.0, %v347
    %v349 = vpop.f32.mrb[0].mxu0
    %v350 = vpop.f32.mrb[0].mxu0
    %v351 = vadd.f32 0.0, %v350
    %v352 = vpop.f32.mrb[0].mxu0
    %353 = vmatprep.mubr.bf16.mxu0 0
    %354 = vmatmul.mubr.bf16.gmra.mrb[0].mxu0 %v134
    %v355 = vpop.f32.mrb[0].mxu0
    %v356 = vadd.f32 0.0, %v355
    %v357 = vpop.f32.mrb[0].mxu0
    %v358 = vpop.f32.mrb[0].mxu0
    %v359 = vadd.f32 0.0, %v358
    %v360 = vpop.f32.mrb[0].mxu0
    %361 = vdwg.mxu0
    %v362 = vld [vmem:[%s3] sm:$0xf]
    %v363 = vld [vmem:[%s3 + $0x4] sm:$0xf]
    %v364 = vld [vmem:[%s3 + $0x8] sm:$0xf]
    %v365 = vld [vmem:[%s3 + $0xc] sm:$0xf]
    %v366 = vld [vmem:[%s3 + $0x10] sm:$0xf]
    %v367 = vld [vmem:[%s3 + $0x14] sm:$0xf]
    %v368 = vld [vmem:[%s3 + $0x18] sm:$0xf]
    %v369 = vld [vmem:[%s3 + $0x1c] sm:$0xf]
    %v378 = vunpack.c.l.b16 %v362
    %v379 = vunpack.c.l.b16 %v363
    %v380 = vunpack.c.l.b16 %v364
    %v381 = vunpack.c.l.b16 %v365
    %v382 = vunpack.c.l.b16 %v366
    %v383 = vunpack.c.l.b16 %v367
    %v384 = vunpack.c.l.b16 %v368
    %v385 = vunpack.c.l.b16 %v369
    %v386 = vpack.c.b16 %v379, %v378
    %v387 = vpack.c.b16 %v381, %v380
    %v388 = vpack.c.b16 %v383, %v382
    %v389 = vpack.c.b16 %v385, %v384
    %394 = vmatprep.subr.bf16.mxu0 0
    %395 = vmatpush1.bf16.msra.mxu0 %v386
    %396 = vmatprep.subr.bf16.mxu0 0
    %397 = vmatpush1.bf16.msra.mxu0 %v387
    %398 = vmatprep.subr.bf16.mxu0 0
    %399 = vmatpush1.bf16.msra.mxu0 %v388
    %400 = vmatprep.subr.bf16.mxu0 0
    %401 = vmatpush1.bf16.msra.mxu0 %v389
    %402 = vmatprep.subr.bf16.mxu0 0
    %403 = vmatpush1.bf16.msra.mxu0 0
    %404 = vmatprep.subr.bf16.mxu0 0
    %405 = vmatpush1.bf16.msra.mxu0 0
    %406 = vmatprep.subr.bf16.mxu0 0
    %407 = vmatpush1.bf16.msra.mxu0 0
    %408 = vmatprep.subr.bf16.mxu0 0
    %409 = vmatpush1.bf16.msra.mxu0 0
    %410 = vmatprep.subr.bf16.mxu0 0
    %411 = vmatpush1.bf16.msra.mxu0 0
    %412 = vmatprep.subr.bf16.mxu0 0
    %413 = vmatpush1.bf16.msra.mxu0 0
    %414 = vmatprep.subr.bf16.mxu0 0
    %415 = vmatpush1.bf16.msra.mxu0 0
    %416 = vmatprep.subr.bf16.mxu0 0
    %417 = vmatpush1.bf16.msra.mxu0 0
    %418 = vmatprep.subr.bf16.mxu0 0
    %419 = vmatpush1.bf16.msra.mxu0 0
    %420 = vmatprep.subr.bf16.mxu0 0
    %421 = vmatpush1.bf16.msra.mxu0 0
    %422 = vmatprep.subr.bf16.mxu0 0
    %423 = vmatpush1.bf16.msra.mxu0 0
    %424 = vmatprep.subr.bf16.mxu0 0
    %425 = vmatpush1.bf16.msra.mxu0 0
    %426 = vmatprep.mubr.bf16.mxu0 0
    %427 = vmatmul.mubr.bf16.gmra.mrb[0].mxu0 %v113
    %v428 = vpop.f32.mrb[0].mxu0
    %v429 = vadd.f32 0.0, %v428
    %v430 = vpop.f32.mrb[0].mxu0
    %v431 = vpop.f32.mrb[0].mxu0
    %v432 = vadd.f32 0.0, %v431
    %v433 = vpop.f32.mrb[0].mxu0
    %434 = vmatprep.mubr.bf16.mxu0 0
    %435 = vmatmul.mubr.bf16.gmra.mrb[0].mxu0 %v116
    %v436 = vpop.f32.mrb[0].mxu0
    %v437 = vadd.f32 0.0, %v436
    %v438 = vpop.f32.mrb[0].mxu0
    %v439 = vpop.f32.mrb[0].mxu0
    %v440 = vadd.f32 0.0, %v439
    %v441 = vpop.f32.mrb[0].mxu0
    %442 = vmatprep.mubr.bf16.mxu0 0
    %443 = vmatmul.mubr.bf16.gmra.mrb[0].mxu0 %v119
    %v444 = vpop.f32.mrb[0].mxu0
    %v445 = vadd.f32 0.0, %v444
    %v446 = vpop.f32.mrb[0].mxu0
    %v447 = vpop.f32.mrb[0].mxu0
    %v448 = vadd.f32 0.0, %v447
    %v449 = vpop.f32.mrb[0].mxu0
    %450 = vmatprep.mubr.bf16.mxu0 0
    %451 = vmatmul.mubr.bf16.gmra.mrb[0].mxu0 %v122
    %v452 = vpop.f32.mrb[0].mxu0
    %v453 = vadd.f32 0.0, %v452
    %v454 = vpop.f32.mrb[0].mxu0
    %v455 = vpop.f32.mrb[0].mxu0
    %v456 = vadd.f32 0.0, %v455
    %v457 = vpop.f32.mrb[0].mxu0
    %458 = vmatprep.mubr.bf16.mxu0 0
    %459 = vmatmul.mubr.bf16.gmra.mrb[0].mxu0 %v125
    %v460 = vpop.f32.mrb[0].mxu0
    %v461 = vadd.f32 0.0, %v460
    %v462 = vpop.f32.mrb[0].mxu0
    %v463 = vpop.f32.mrb[0].mxu0
    %v464 = vadd.f32 0.0, %v463
    %v465 = vpop.f32.mrb[0].mxu0
    %466 = vmatprep.mubr.bf16.mxu0 0
    %467 = vmatmul.mubr.bf16.gmra.mrb[0].mxu0 %v128
    %v468 = vpop.f32.mrb[0].mxu0
    %v469 = vadd.f32 0.0, %v468
    %v470 = vpop.f32.mrb[0].mxu0
    %v471 = vpop.f32.mrb[0].mxu0
    %v472 = vadd.f32 0.0, %v471
    %v473 = vpop.f32.mrb[0].mxu0
    %474 = vmatprep.mubr.bf16.mxu0 0
    %475 = vmatmul.mubr.bf16.gmra.mrb[0].mxu0 %v131
    %v476 = vpop.f32.mrb[0].mxu0
    %v477 = vadd.f32 0.0, %v476
    %v478 = vpop.f32.mrb[0].mxu0
    %v479 = vpop.f32.mrb[0].mxu0
    %v480 = vadd.f32 0.0, %v479
    %v481 = vpop.f32.mrb[0].mxu0
    %482 = vmatprep.mubr.bf16.mxu0 0
    %483 = vmatmul.mubr.bf16.gmra.mrb[0].mxu0 %v134
    %v484 = vpop.f32.mrb[0].mxu0
    %v485 = vadd.f32 0.0, %v484
    %v486 = vpop.f32.mrb[0].mxu0
    %v487 = vpop.f32.mrb[0].mxu0
    %v488 = vadd.f32 0.0, %v487
    %v489 = vpop.f32.mrb[0].mxu0
    %490 = vdwg.mxu0
    %v507 = vcombine.high %v300, %v300
    %v509 = vunpack.c.l.s4 1983009808
    %v510 = vunpack.c.0.s8 %v509
    %v511 = vlaneseq
    %v512 = vshrl.u32 %v511, 7
    %v513 = vsub.s32 %v510, %v512
    %v514 = vrot.slane %v300, %v513
    %v516 = vunpack.c.l.s4 1983009808
    %v517 = vunpack.c.0.s8 %v516
    %v518 = vlaneseq
    %v519 = vshrl.u32 %v518, 7
    %v520 = vsub.s32 %v517, %v519
    %v521 = vrot.slane %v507, %v520
    %v522 = vcombine.high %v514, %v514
    %v523 = vcombine.high %v521, %v521
    %v524 = vcombine.high %v303, %v303
    %v526 = vunpack.c.l.s4 1983009808
    %v527 = vunpack.c.0.s8 %v526
    %v528 = vlaneseq
    %v529 = vshrl.u32 %v528, 7
    %v530 = vsub.s32 %v527, %v529
    %v531 = vrot.slane %v303, %v530
    %v533 = vunpack.c.l.s4 1983009808
    %v534 = vunpack.c.0.s8 %v533
    %v535 = vlaneseq
    %v536 = vshrl.u32 %v535, 7
    %v537 = vsub.s32 %v534, %v536
    %v538 = vrot.slane %v524, %v537
    %v539 = vcombine.high %v531, %v531
    %v540 = vcombine.high %v538, %v538
    %v541 = vcombine.high %v308, %v308
    %v543 = vunpack.c.l.s4 1983009808
    %v544 = vunpack.c.0.s8 %v543
    %v545 = vlaneseq
    %v546 = vshrl.u32 %v545, 7
    %v547 = vsub.s32 %v544, %v546
    %v548 = vrot.slane %v308, %v547
    %v550 = vunpack.c.l.s4 1983009808
    %v551 = vunpack.c.0.s8 %v550
    %v552 = vlaneseq
    %v553 = vshrl.u32 %v552, 7
    %v554 = vsub.s32 %v551, %v553
    %v555 = vrot.slane %v541, %v554
    %v556 = vcombine.high %v548, %v548
    %v557 = vcombine.high %v555, %v555
    %v558 = vcombine.high %v311, %v311
    %v560 = vunpack.c.l.s4 1983009808
    %v561 = vunpack.c.0.s8 %v560
    %v562 = vlaneseq
    %v563 = vshrl.u32 %v562, 7
    %v564 = vsub.s32 %v561, %v563
    %v565 = vrot.slane %v311, %v564
    %v567 = vunpack.c.l.s4 1983009808
    %v568 = vunpack.c.0.s8 %v567
    %v569 = vlaneseq
    %v570 = vshrl.u32 %v569, 7
    %v571 = vsub.s32 %v568, %v570
    %v572 = vrot.slane %v558, %v571
    %v573 = vcombine.high %v565, %v565
    %v574 = vcombine.high %v572, %v572
    %v575 = vcombine.high %v316, %v316
    %v577 = vunpack.c.l.s4 1983009808
    %v578 = vunpack.c.0.s8 %v577
    %v579 = vlaneseq
    %v580 = vshrl.u32 %v579, 7
    %v581 = vsub.s32 %v578, %v580
    %v582 = vrot.slane %v316, %v581
    %v584 = vunpack.c.l.s4 1983009808
    %v585 = vunpack.c.0.s8 %v584
    %v586 = vlaneseq
    %v587 = vshrl.u32 %v586, 7
    %v588 = vsub.s32 %v585, %v587
    %v589 = vrot.slane %v575, %v588
    %v590 = vcombine.high %v582, %v582
    %v591 = vcombine.high %v589, %v589
    %v592 = vcombine.high %v319, %v319
    %v594 = vunpack.c.l.s4 1983009808
    %v595 = vunpack.c.0.s8 %v594
    %v596 = vlaneseq
    %v597 = vshrl.u32 %v596, 7
    %v598 = vsub.s32 %v595, %v597
    %v599 = vrot.slane %v319, %v598
    %v601 = vunpack.c.l.s4 1983009808
    %v602 = vunpack.c.0.s8 %v601
    %v603 = vlaneseq
    %v604 = vshrl.u32 %v603, 7
    %v605 = vsub.s32 %v602, %v604
    %v606 = vrot.slane %v592, %v605
    %v607 = vcombine.high %v599, %v599
    %v608 = vcombine.high %v606, %v606
    %v609 = vcombine.high %v324, %v324
    %v611 = vunpack.c.l.s4 1983009808
    %v612 = vunpack.c.0.s8 %v611
    %v613 = vlaneseq
    %v614 = vshrl.u32 %v613, 7
    %v615 = vsub.s32 %v612, %v614
    %v616 = vrot.slane %v324, %v615
    %v618 = vunpack.c.l.s4 1983009808
    %v619 = vunpack.c.0.s8 %v618
    %v620 = vlaneseq
    %v621 = vshrl.u32 %v620, 7
    %v622 = vsub.s32 %v619, %v621
    %v623 = vrot.slane %v609, %v622
    %v624 = vcombine.high %v616, %v616
    %v625 = vcombine.high %v623, %v623
    %v626 = vcombine.high %v327, %v327
    %v628 = vunpack.c.l.s4 1983009808
    %v629 = vunpack.c.0.s8 %v628
    %v630 = vlaneseq
    %v631 = vshrl.u32 %v630, 7
    %v632 = vsub.s32 %v629, %v631
    %v633 = vrot.slane %v327, %v632
    %v635 = vunpack.c.l.s4 1983009808
    %v636 = vunpack.c.0.s8 %v635
    %v637 = vlaneseq
    %v638 = vshrl.u32 %v637, 7
    %v639 = vsub.s32 %v636, %v638
    %v640 = vrot.slane %v626, %v639
    %v641 = vcombine.high %v633, %v633
    %v642 = vcombine.high %v640, %v640
    %v643 = vcombine.high %v332, %v332
    %v645 = vunpack.c.l.s4 1983009808
    %v646 = vunpack.c.0.s8 %v645
    %v647 = vlaneseq
    %v648 = vshrl.u32 %v647, 7
    %v649 = vsub.s32 %v646, %v648
    %v650 = vrot.slane %v332, %v649
    %v652 = vunpack.c.l.s4 1983009808
    %v653 = vunpack.c.0.s8 %v652
    %v654 = vlaneseq
    %v655 = vshrl.u32 %v654, 7
    %v656 = vsub.s32 %v653, %v655
    %v657 = vrot.slane %v643, %v656
    %v658 = vcombine.high %v650, %v650
    %v659 = vcombine.high %v657, %v657
    %v660 = vcombine.high %v335, %v335
    %v662 = vunpack.c.l.s4 1983009808
    %v663 = vunpack.c.0.s8 %v662
    %v664 = vlaneseq
    %v665 = vshrl.u32 %v664, 7
    %v666 = vsub.s32 %v663, %v665
    %v667 = vrot.slane %v335, %v666
    %v669 = vunpack.c.l.s4 1983009808
    %v670 = vunpack.c.0.s8 %v669
    %v671 = vlaneseq
    %v672 = vshrl.u32 %v671, 7
    %v673 = vsub.s32 %v670, %v672
    %v674 = vrot.slane %v660, %v673
    %v675 = vcombine.high %v667, %v667
    %v676 = vcombine.high %v674, %v674
    %v677 = vcombine.high %v340, %v340
    %v679 = vunpack.c.l.s4 1983009808
    %v680 = vunpack.c.0.s8 %v679
    %v681 = vlaneseq
    %v682 = vshrl.u32 %v681, 7
    %v683 = vsub.s32 %v680, %v682
    %v684 = vrot.slane %v340, %v683
    %v686 = vunpack.c.l.s4 1983009808
    %v687 = vunpack.c.0.s8 %v686
    %v688 = vlaneseq
    %v689 = vshrl.u32 %v688, 7
    %v690 = vsub.s32 %v687, %v689
    %v691 = vrot.slane %v677, %v690
    %v692 = vcombine.high %v684, %v684
    %v693 = vcombine.high %v691, %v691
    %v694 = vcombine.high %v343, %v343
    %v696 = vunpack.c.l.s4 1983009808
    %v697 = vunpack.c.0.s8 %v696
    %v698 = vlaneseq
    %v699 = vshrl.u32 %v698, 7
    %v700 = vsub.s32 %v697, %v699
    %v701 = vrot.slane %v343, %v700
    %v703 = vunpack.c.l.s4 1983009808
    %v704 = vunpack.c.0.s8 %v703
    %v705 = vlaneseq
    %v706 = vshrl.u32 %v705, 7
    %v707 = vsub.s32 %v704, %v706
    %v708 = vrot.slane %v694, %v707
    %v709 = vcombine.high %v701, %v701
    %v710 = vcombine.high %v708, %v708
    %v711 = vcombine.high %v348, %v348
    %v713 = vunpack.c.l.s4 1983009808
    %v714 = vunpack.c.0.s8 %v713
    %v715 = vlaneseq
    %v716 = vshrl.u32 %v715, 7
    %v717 = vsub.s32 %v714, %v716
    %v718 = vrot.slane %v348, %v717
    %v720 = vunpack.c.l.s4 1983009808
    %v721 = vunpack.c.0.s8 %v720
    %v722 = vlaneseq
    %v723 = vshrl.u32 %v722, 7
    %v724 = vsub.s32 %v721, %v723
    %v725 = vrot.slane %v711, %v724
    %v726 = vcombine.high %v718, %v718
    %v727 = vcombine.high %v725, %v725
    %v728 = vcombine.high %v351, %v351
    %v730 = vunpack.c.l.s4 1983009808
    %v731 = vunpack.c.0.s8 %v730
    %v732 = vlaneseq
    %v733 = vshrl.u32 %v732, 7
    %v734 = vsub.s32 %v731, %v733
    %v735 = vrot.slane %v351, %v734
    %v737 = vunpack.c.l.s4 1983009808
    %v738 = vunpack.c.0.s8 %v737
    %v739 = vlaneseq
    %v740 = vshrl.u32 %v739, 7
    %v741 = vsub.s32 %v738, %v740
    %v742 = vrot.slane %v728, %v741
    %v743 = vcombine.high %v735, %v735
    %v744 = vcombine.high %v742, %v742
    %v745 = vcombine.high %v356, %v356
    %v747 = vunpack.c.l.s4 1983009808
    %v748 = vunpack.c.0.s8 %v747
    %v749 = vlaneseq
    %v750 = vshrl.u32 %v749, 7
    %v751 = vsub.s32 %v748, %v750
    %v752 = vrot.slane %v356, %v751
    %v754 = vunpack.c.l.s4 1983009808
    %v755 = vunpack.c.0.s8 %v754
    %v756 = vlaneseq
    %v757 = vshrl.u32 %v756, 7
    %v758 = vsub.s32 %v755, %v757
    %v759 = vrot.slane %v745, %v758
    %v760 = vcombine.high %v752, %v752
    %v761 = vcombine.high %v759, %v759
    %v762 = vcombine.high %v359, %v359
    %v764 = vunpack.c.l.s4 1983009808
    %v765 = vunpack.c.0.s8 %v764
    %v766 = vlaneseq
    %v767 = vshrl.u32 %v766, 7
    %v768 = vsub.s32 %v765, %v767
    %v769 = vrot.slane %v359, %v768
    %v771 = vunpack.c.l.s4 1983009808
    %v772 = vunpack.c.0.s8 %v771
    %v773 = vlaneseq
    %v774 = vshrl.u32 %v773, 7
    %v775 = vsub.s32 %v772, %v774
    %v776 = vrot.slane %v762, %v775
    %v777 = vcombine.high %v769, %v769
    %v778 = vcombine.high %v776, %v776
    %vm843 = vcmask 58368
    %v844 = vsel %vm843, %v514, -inf
    %v845 = vrot.slane %v844, 4
    %v846 = vmax.f32 %v844, %v845
    %v847 = vrot.slane %v846, 2
    %v848 = vmax.f32 %v846, %v847
    %v849 = vrot.slane %v848, 1
    %v850 = vmax.f32 %v848, %v849
    %v851 = vsel %vm843, %v522, -inf
    %v852 = vrot.slane %v851, 4
    %v853 = vmax.f32 %v851, %v852
    %v854 = vrot.slane %v853, 2
    %v855 = vmax.f32 %v853, %v854
    %v856 = vrot.slane %v855, 1
    %v857 = vmax.f32 %v855, %v856
    %v858 = vsel %vm843, %v521, -inf
    %v859 = vrot.slane %v858, 4
    %v860 = vmax.f32 %v858, %v859
    %v861 = vrot.slane %v860, 2
    %v862 = vmax.f32 %v860, %v861
    %v863 = vrot.slane %v862, 1
    %v864 = vmax.f32 %v862, %v863
    %v865 = vsel %vm843, %v523, -inf
    %v866 = vrot.slane %v865, 4
    %v867 = vmax.f32 %v865, %v866
    %v868 = vrot.slane %v867, 2
    %v869 = vmax.f32 %v867, %v868
    %v870 = vrot.slane %v869, 1
    %v871 = vmax.f32 %v869, %v870
    %v872 = vsel %vm843, %v531, -inf
    %v873 = vrot.slane %v872, 4
    %v874 = vmax.f32 %v872, %v873
    %v875 = vrot.slane %v874, 2
    %v876 = vmax.f32 %v874, %v875
    %v877 = vrot.slane %v876, 1
    %v878 = vmax.f32 %v876, %v877
    %v879 = vsel %vm843, %v539, -inf
    %v880 = vrot.slane %v879, 4
    %v881 = vmax.f32 %v879, %v880
    %v882 = vrot.slane %v881, 2
    %v883 = vmax.f32 %v881, %v882
    %v884 = vrot.slane %v883, 1
    %v885 = vmax.f32 %v883, %v884
    %v886 = vsel %vm843, %v538, -inf
    %v887 = vrot.slane %v886, 4
    %v888 = vmax.f32 %v886, %v887
    %v889 = vrot.slane %v888, 2
    %v890 = vmax.f32 %v888, %v889
    %v891 = vrot.slane %v890, 1
    %v892 = vmax.f32 %v890, %v891
    %v893 = vsel %vm843, %v540, -inf
    %v894 = vrot.slane %v893, 4
    %v895 = vmax.f32 %v893, %v894
    %v896 = vrot.slane %v895, 2
    %v897 = vmax.f32 %v895, %v896
    %v898 = vrot.slane %v897, 1
    %v899 = vmax.f32 %v897, %v898
    %v900 = vsel %vm843, %v548, -inf
    %v901 = vrot.slane %v900, 4
    %v902 = vmax.f32 %v900, %v901
    %v903 = vrot.slane %v902, 2
    %v904 = vmax.f32 %v902, %v903
    %v905 = vrot.slane %v904, 1
    %v906 = vmax.f32 %v904, %v905
    %v907 = vsel %vm843, %v556, -inf
    %v908 = vrot.slane %v907, 4
    %v909 = vmax.f32 %v907, %v908
    %v910 = vrot.slane %v909, 2
    %v911 = vmax.f32 %v909, %v910
    %v912 = vrot.slane %v911, 1
    %v913 = vmax.f32 %v911, %v912
    %v914 = vsel %vm843, %v555, -inf
    %v915 = vrot.slane %v914, 4
    %v916 = vmax.f32 %v914, %v915
    %v917 = vrot.slane %v916, 2
    %v918 = vmax.f32 %v916, %v917
    %v919 = vrot.slane %v918, 1
    %v920 = vmax.f32 %v918, %v919
    %v921 = vsel %vm843, %v557, -inf
    %v922 = vrot.slane %v921, 4
    %v923 = vmax.f32 %v921, %v922
    %v924 = vrot.slane %v923, 2
    %v925 = vmax.f32 %v923, %v924
    %v926 = vrot.slane %v925, 1
    %v927 = vmax.f32 %v925, %v926
    %v928 = vsel %vm843, %v565, -inf
    %v929 = vrot.slane %v928, 4
    %v930 = vmax.f32 %v928, %v929
    %v931 = vrot.slane %v930, 2
    %v932 = vmax.f32 %v930, %v931
    %v933 = vrot.slane %v932, 1
    %v934 = vmax.f32 %v932, %v933
    %v935 = vsel %vm843, %v573, -inf
    %v936 = vrot.slane %v935, 4
    %v937 = vmax.f32 %v935, %v936
    %v938 = vrot.slane %v937, 2
    %v939 = vmax.f32 %v937, %v938
    %v940 = vrot.slane %v939, 1
    %v941 = vmax.f32 %v939, %v940
    %v942 = vsel %vm843, %v572, -inf
    %v943 = vrot.slane %v942, 4
    %v944 = vmax.f32 %v942, %v943
    %v945 = vrot.slane %v944, 2
    %v946 = vmax.f32 %v944, %v945
    %v947 = vrot.slane %v946, 1
    %v948 = vmax.f32 %v946, %v947
    %v949 = vsel %vm843, %v574, -inf
    %v950 = vrot.slane %v949, 4
    %v951 = vmax.f32 %v949, %v950
    %v952 = vrot.slane %v951, 2
    %v953 = vmax.f32 %v951, %v952
    %v954 = vrot.slane %v953, 1
    %v955 = vmax.f32 %v953, %v954
    %v956 = vsel %vm843, %v582, -inf
    %v957 = vrot.slane %v956, 4
    %v958 = vmax.f32 %v956, %v957
    %v959 = vrot.slane %v958, 2
    %v960 = vmax.f32 %v958, %v959
    %v961 = vrot.slane %v960, 1
    %v962 = vmax.f32 %v960, %v961
    %v963 = vsel %vm843, %v590, -inf
    %v964 = vrot.slane %v963, 4
    %v965 = vmax.f32 %v963, %v964
    %v966 = vrot.slane %v965, 2
    %v967 = vmax.f32 %v965, %v966
    %v968 = vrot.slane %v967, 1
    %v969 = vmax.f32 %v967, %v968
    %v970 = vsel %vm843, %v589, -inf
    %v971 = vrot.slane %v970, 4
    %v972 = vmax.f32 %v970, %v971
    %v973 = vrot.slane %v972, 2
    %v974 = vmax.f32 %v972, %v973
    %v975 = vrot.slane %v974, 1
    %v976 = vmax.f32 %v974, %v975
    %v977 = vsel %vm843, %v591, -inf
    %v978 = vrot.slane %v977, 4
    %v979 = vmax.f32 %v977, %v978
    %v980 = vrot.slane %v979, 2
    %v981 = vmax.f32 %v979, %v980
    %v982 = vrot.slane %v981, 1
    %v983 = vmax.f32 %v981, %v982
    %v984 = vsel %vm843, %v599, -inf
    %v985 = vrot.slane %v984, 4
    %v986 = vmax.f32 %v984, %v985
    %v987 = vrot.slane %v986, 2
    %v988 = vmax.f32 %v986, %v987
    %v989 = vrot.slane %v988, 1
    %v990 = vmax.f32 %v988, %v989
    %v991 = vsel %vm843, %v607, -inf
    %v992 = vrot.slane %v991, 4
    %v993 = vmax.f32 %v991, %v992
    %v994 = vrot.slane %v993, 2
    %v995 = vmax.f32 %v993, %v994
    %v996 = vrot.slane %v995, 1
    %v997 = vmax.f32 %v995, %v996
    %v998 = vsel %vm843, %v606, -inf
    %v999 = vrot.slane %v998, 4
    %v1000 = vmax.f32 %v998, %v999
    %v1001 = vrot.slane %v1000, 2
    %v1002 = vmax.f32 %v1000, %v1001
    %v1003 = vrot.slane %v1002, 1
    %v1004 = vmax.f32 %v1002, %v1003
    %v1005 = vsel %vm843, %v608, -inf
    %v1006 = vrot.slane %v1005, 4
    %v1007 = vmax.f32 %v1005, %v1006
    %v1008 = vrot.slane %v1007, 2
    %v1009 = vmax.f32 %v1007, %v1008
    %v1010 = vrot.slane %v1009, 1
    %v1011 = vmax.f32 %v1009, %v1010
    %v1012 = vsel %vm843, %v616, -inf
    %v1013 = vrot.slane %v1012, 4
    %v1014 = vmax.f32 %v1012, %v1013
    %v1015 = vrot.slane %v1014, 2
    %v1016 = vmax.f32 %v1014, %v1015
    %v1017 = vrot.slane %v1016, 1
    %v1018 = vmax.f32 %v1016, %v1017
    %v1019 = vsel %vm843, %v624, -inf
    %v1020 = vrot.slane %v1019, 4
    %v1021 = vmax.f32 %v1019, %v1020
    %v1022 = vrot.slane %v1021, 2
    %v1023 = vmax.f32 %v1021, %v1022
    %v1024 = vrot.slane %v1023, 1
    %v1025 = vmax.f32 %v1023, %v1024
    %v1026 = vsel %vm843, %v623, -inf
    %v1027 = vrot.slane %v1026, 4
    %v1028 = vmax.f32 %v1026, %v1027
    %v1029 = vrot.slane %v1028, 2
    %v1030 = vmax.f32 %v1028, %v1029
    %v1031 = vrot.slane %v1030, 1
    %v1032 = vmax.f32 %v1030, %v1031
    %v1033 = vsel %vm843, %v625, -inf
    %v1034 = vrot.slane %v1033, 4
    %v1035 = vmax.f32 %v1033, %v1034
    %v1036 = vrot.slane %v1035, 2
    %v1037 = vmax.f32 %v1035, %v1036
    %v1038 = vrot.slane %v1037, 1
    %v1039 = vmax.f32 %v1037, %v1038
    %v1040 = vsel %vm843, %v633, -inf
    %v1041 = vrot.slane %v1040, 4
    %v1042 = vmax.f32 %v1040, %v1041
    %v1043 = vrot.slane %v1042, 2
    %v1044 = vmax.f32 %v1042, %v1043
    %v1045 = vrot.slane %v1044, 1
    %v1046 = vmax.f32 %v1044, %v1045
    %v1047 = vsel %vm843, %v641, -inf
    %v1048 = vrot.slane %v1047, 4
    %v1049 = vmax.f32 %v1047, %v1048
    %v1050 = vrot.slane %v1049, 2
    %v1051 = vmax.f32 %v1049, %v1050
    %v1052 = vrot.slane %v1051, 1
    %v1053 = vmax.f32 %v1051, %v1052
    %v1054 = vsel %vm843, %v640, -inf
    %v1055 = vrot.slane %v1054, 4
    %v1056 = vmax.f32 %v1054, %v1055
    %v1057 = vrot.slane %v1056, 2
    %v1058 = vmax.f32 %v1056, %v1057
    %v1059 = vrot.slane %v1058, 1
    %v1060 = vmax.f32 %v1058, %v1059
    %v1061 = vsel %vm843, %v642, -inf
    %v1062 = vrot.slane %v1061, 4
    %v1063 = vmax.f32 %v1061, %v1062
    %v1064 = vrot.slane %v1063, 2
    %v1065 = vmax.f32 %v1063, %v1064
    %v1066 = vrot.slane %v1065, 1
    %v1067 = vmax.f32 %v1065, %v1066
    %v1068 = vsel %vm843, %v650, -inf
    %v1069 = vrot.slane %v1068, 4
    %v1070 = vmax.f32 %v1068, %v1069
    %v1071 = vrot.slane %v1070, 2
    %v1072 = vmax.f32 %v1070, %v1071
    %v1073 = vrot.slane %v1072, 1
    %v1074 = vmax.f32 %v1072, %v1073
    %v1075 = vsel %vm843, %v658, -inf
    %v1076 = vrot.slane %v1075, 4
    %v1077 = vmax.f32 %v1075, %v1076
    %v1078 = vrot.slane %v1077, 2
    %v1079 = vmax.f32 %v1077, %v1078
    %v1080 = vrot.slane %v1079, 1
    %v1081 = vmax.f32 %v1079, %v1080
    %v1082 = vsel %vm843, %v657, -inf
    %v1083 = vrot.slane %v1082, 4
    %v1084 = vmax.f32 %v1082, %v1083
    %v1085 = vrot.slane %v1084, 2
    %v1086 = vmax.f32 %v1084, %v1085
    %v1087 = vrot.slane %v1086, 1
    %v1088 = vmax.f32 %v1086, %v1087
    %v1089 = vsel %vm843, %v659, -inf
    %v1090 = vrot.slane %v1089, 4
    %v1091 = vmax.f32 %v1089, %v1090
    %v1092 = vrot.slane %v1091, 2
    %v1093 = vmax.f32 %v1091, %v1092
    %v1094 = vrot.slane %v1093, 1
    %v1095 = vmax.f32 %v1093, %v1094
    %v1096 = vsel %vm843, %v667, -inf
    %v1097 = vrot.slane %v1096, 4
    %v1098 = vmax.f32 %v1096, %v1097
    %v1099 = vrot.slane %v1098, 2
    %v1100 = vmax.f32 %v1098, %v1099
    %v1101 = vrot.slane %v1100, 1
    %v1102 = vmax.f32 %v1100, %v1101
    %v1103 = vsel %vm843, %v675, -inf
    %v1104 = vrot.slane %v1103, 4
    %v1105 = vmax.f32 %v1103, %v1104
    %v1106 = vrot.slane %v1105, 2
    %v1107 = vmax.f32 %v1105, %v1106
    %v1108 = vrot.slane %v1107, 1
    %v1109 = vmax.f32 %v1107, %v1108
    %v1110 = vsel %vm843, %v674, -inf
    %v1111 = vrot.slane %v1110, 4
    %v1112 = vmax.f32 %v1110, %v1111
    %v1113 = vrot.slane %v1112, 2
    %v1114 = vmax.f32 %v1112, %v1113
    %v1115 = vrot.slane %v1114, 1
    %v1116 = vmax.f32 %v1114, %v1115
    %v1117 = vsel %vm843, %v676, -inf
    %v1118 = vrot.slane %v1117, 4
    %v1119 = vmax.f32 %v1117, %v1118
    %v1120 = vrot.slane %v1119, 2
    %v1121 = vmax.f32 %v1119, %v1120
    %v1122 = vrot.slane %v1121, 1
    %v1123 = vmax.f32 %v1121, %v1122
    %v1124 = vsel %vm843, %v684, -inf
    %v1125 = vrot.slane %v1124, 4
    %v1126 = vmax.f32 %v1124, %v1125
    %v1127 = vrot.slane %v1126, 2
    %v1128 = vmax.f32 %v1126, %v1127
    %v1129 = vrot.slane %v1128, 1
    %v1130 = vmax.f32 %v1128, %v1129
    %v1131 = vsel %vm843, %v692, -inf
    %v1132 = vrot.slane %v1131, 4
    %v1133 = vmax.f32 %v1131, %v1132
    %v1134 = vrot.slane %v1133, 2
    %v1135 = vmax.f32 %v1133, %v1134
    %v1136 = vrot.slane %v1135, 1
    %v1137 = vmax.f32 %v1135, %v1136
    %v1138 = vsel %vm843, %v691, -inf
    %v1139 = vrot.slane %v1138, 4
    %v1140 = vmax.f32 %v1138, %v1139
    %v1141 = vrot.slane %v1140, 2
    %v1142 = vmax.f32 %v1140, %v1141
    %v1143 = vrot.slane %v1142, 1
    %v1144 = vmax.f32 %v1142, %v1143
    %v1145 = vsel %vm843, %v693, -inf
    %v1146 = vrot.slane %v1145, 4
    %v1147 = vmax.f32 %v1145, %v1146
    %v1148 = vrot.slane %v1147, 2
    %v1149 = vmax.f32 %v1147, %v1148
    %v1150 = vrot.slane %v1149, 1
    %v1151 = vmax.f32 %v1149, %v1150
    %v1152 = vsel %vm843, %v701, -inf
    %v1153 = vrot.slane %v1152, 4
    %v1154 = vmax.f32 %v1152, %v1153
    %v1155 = vrot.slane %v1154, 2
    %v1156 = vmax.f32 %v1154, %v1155
    %v1157 = vrot.slane %v1156, 1
    %v1158 = vmax.f32 %v1156, %v1157
    %v1159 = vsel %vm843, %v709, -inf
    %v1160 = vrot.slane %v1159, 4
    %v1161 = vmax.f32 %v1159, %v1160
    %v1162 = vrot.slane %v1161, 2
    %v1163 = vmax.f32 %v1161, %v1162
    %v1164 = vrot.slane %v1163, 1
    %v1165 = vmax.f32 %v1163, %v1164
    %v1166 = vsel %vm843, %v708, -inf
    %v1167 = vrot.slane %v1166, 4
    %v1168 = vmax.f32 %v1166, %v1167
    %v1169 = vrot.slane %v1168, 2
    %v1170 = vmax.f32 %v1168, %v1169
    %v1171 = vrot.slane %v1170, 1
    %v1172 = vmax.f32 %v1170, %v1171
    %v1173 = vsel %vm843, %v710, -inf
    %v1174 = vrot.slane %v1173, 4
    %v1175 = vmax.f32 %v1173, %v1174
    %v1176 = vrot.slane %v1175, 2
    %v1177 = vmax.f32 %v1175, %v1176
    %v1178 = vrot.slane %v1177, 1
    %v1179 = vmax.f32 %v1177, %v1178
    %v1180 = vsel %vm843, %v718, -inf
    %v1181 = vrot.slane %v1180, 4
    %v1182 = vmax.f32 %v1180, %v1181
    %v1183 = vrot.slane %v1182, 2
    %v1184 = vmax.f32 %v1182, %v1183
    %v1185 = vrot.slane %v1184, 1
    %v1186 = vmax.f32 %v1184, %v1185
    %v1187 = vsel %vm843, %v726, -inf
    %v1188 = vrot.slane %v1187, 4
    %v1189 = vmax.f32 %v1187, %v1188
    %v1190 = vrot.slane %v1189, 2
    %v1191 = vmax.f32 %v1189, %v1190
    %v1192 = vrot.slane %v1191, 1
    %v1193 = vmax.f32 %v1191, %v1192
    %v1194 = vsel %vm843, %v725, -inf
    %v1195 = vrot.slane %v1194, 4
    %v1196 = vmax.f32 %v1194, %v1195
    %v1197 = vrot.slane %v1196, 2
    %v1198 = vmax.f32 %v1196, %v1197
    %v1199 = vrot.slane %v1198, 1
    %v1200 = vmax.f32 %v1198, %v1199
    %v1201 = vsel %vm843, %v727, -inf
    %v1202 = vrot.slane %v1201, 4
    %v1203 = vmax.f32 %v1201, %v1202
    %v1204 = vrot.slane %v1203, 2
    %v1205 = vmax.f32 %v1203, %v1204
    %v1206 = vrot.slane %v1205, 1
    %v1207 = vmax.f32 %v1205, %v1206
    %v1208 = vsel %vm843, %v735, -inf
    %v1209 = vrot.slane %v1208, 4
    %v1210 = vmax.f32 %v1208, %v1209
    %v1211 = vrot.slane %v1210, 2
    %v1212 = vmax.f32 %v1210, %v1211
    %v1213 = vrot.slane %v1212, 1
    %v1214 = vmax.f32 %v1212, %v1213
    %v1215 = vsel %vm843, %v743, -inf
    %v1216 = vrot.slane %v1215, 4
    %v1217 = vmax.f32 %v1215, %v1216
    %v1218 = vrot.slane %v1217, 2
    %v1219 = vmax.f32 %v1217, %v1218
    %v1220 = vrot.slane %v1219, 1
    %v1221 = vmax.f32 %v1219, %v1220
    %v1222 = vsel %vm843, %v742, -inf
    %v1223 = vrot.slane %v1222, 4
    %v1224 = vmax.f32 %v1222, %v1223
    %v1225 = vrot.slane %v1224, 2
    %v1226 = vmax.f32 %v1224, %v1225
    %v1227 = vrot.slane %v1226, 1
    %v1228 = vmax.f32 %v1226, %v1227
    %v1229 = vsel %vm843, %v744, -inf
    %v1230 = vrot.slane %v1229, 4
    %v1231 = vmax.f32 %v1229, %v1230
    %v1232 = vrot.slane %v1231, 2
    %v1233 = vmax.f32 %v1231, %v1232
    %v1234 = vrot.slane %v1233, 1
    %v1235 = vmax.f32 %v1233, %v1234
    %v1236 = vsel %vm843, %v752, -inf
    %v1237 = vrot.slane %v1236, 4
    %v1238 = vmax.f32 %v1236, %v1237
    %v1239 = vrot.slane %v1238, 2
    %v1240 = vmax.f32 %v1238, %v1239
    %v1241 = vrot.slane %v1240, 1
    %v1242 = vmax.f32 %v1240, %v1241
    %v1243 = vsel %vm843, %v760, -inf
    %v1244 = vrot.slane %v1243, 4
    %v1245 = vmax.f32 %v1243, %v1244
    %v1246 = vrot.slane %v1245, 2
    %v1247 = vmax.f32 %v1245, %v1246
    %v1248 = vrot.slane %v1247, 1
    %v1249 = vmax.f32 %v1247, %v1248
    %v1250 = vsel %vm843, %v759, -inf
    %v1251 = vrot.slane %v1250, 4
    %v1252 = vmax.f32 %v1250, %v1251
    %v1253 = vrot.slane %v1252, 2
    %v1254 = vmax.f32 %v1252, %v1253
    %v1255 = vrot.slane %v1254, 1
    %v1256 = vmax.f32 %v1254, %v1255
    %v1257 = vsel %vm843, %v761, -inf
    %v1258 = vrot.slane %v1257, 4
    %v1259 = vmax.f32 %v1257, %v1258
    %v1260 = vrot.slane %v1259, 2
    %v1261 = vmax.f32 %v1259, %v1260
    %v1262 = vrot.slane %v1261, 1
    %v1263 = vmax.f32 %v1261, %v1262
    %v1264 = vsel %vm843, %v769, -inf
    %v1265 = vrot.slane %v1264, 4
    %v1266 = vmax.f32 %v1264, %v1265
    %v1267 = vrot.slane %v1266, 2
    %v1268 = vmax.f32 %v1266, %v1267
    %v1269 = vrot.slane %v1268, 1
    %v1270 = vmax.f32 %v1268, %v1269
    %v1271 = vsel %vm843, %v777, -inf
    %v1272 = vrot.slane %v1271, 4
    %v1273 = vmax.f32 %v1271, %v1272
    %v1274 = vrot.slane %v1273, 2
    %v1275 = vmax.f32 %v1273, %v1274
    %v1276 = vrot.slane %v1275, 1
    %v1277 = vmax.f32 %v1275, %v1276
    %v1278 = vsel %vm843, %v776, -inf
    %v1279 = vrot.slane %v1278, 4
    %v1280 = vmax.f32 %v1278, %v1279
    %v1281 = vrot.slane %v1280, 2
    %v1282 = vmax.f32 %v1280, %v1281
    %v1283 = vrot.slane %v1282, 1
    %v1284 = vmax.f32 %v1282, %v1283
    %v1285 = vsel %vm843, %v778, -inf
    %v1286 = vrot.slane %v1285, 4
    %v1287 = vmax.f32 %v1285, %v1286
    %v1288 = vrot.slane %v1287, 2
    %v1289 = vmax.f32 %v1287, %v1288
    %v1290 = vrot.slane %v1289, 1
    %v1291 = vmax.f32 %v1289, %v1290
    %vm1292 = vcmask 64512
    %v1293 = vsel %vm1292, %v850, -inf
    %v1294 = vsel %vm1292, %v878, -inf
    %v1295 = vmax.f32 %v1293, %v1294
    %v1296 = vsel %vm1292, %v857, -inf
    %v1297 = vsel %vm1292, %v885, -inf
    %v1298 = vmax.f32 %v1296, %v1297
    %v1299 = vsel %vm1292, %v864, -inf
    %v1300 = vsel %vm1292, %v892, -inf
    %v1301 = vmax.f32 %v1299, %v1300
    %v1302 = vsel %vm1292, %v871, -inf
    %v1303 = vsel %vm1292, %v899, -inf
    %v1304 = vmax.f32 %v1302, %v1303
    %v1305 = vsel %vm1292, %v906, -inf
    %v1306 = vsel %vm1292, %v934, -inf
    %v1307 = vmax.f32 %v1305, %v1306
    %v1308 = vsel %vm1292, %v913, -inf
    %v1309 = vsel %vm1292, %v941, -inf
    %v1310 = vmax.f32 %v1308, %v1309
    %v1311 = vsel %vm1292, %v920, -inf
    %v1312 = vsel %vm1292, %v948, -inf
    %v1313 = vmax.f32 %v1311, %v1312
    %v1314 = vsel %vm1292, %v927, -inf
    %v1315 = vsel %vm1292, %v955, -inf
    %v1316 = vmax.f32 %v1314, %v1315
    %v1317 = vsel %vm1292, %v962, -inf
    %v1318 = vsel %vm1292, %v990, -inf
    %v1319 = vmax.f32 %v1317, %v1318
    %v1320 = vsel %vm1292, %v969, -inf
    %v1321 = vsel %vm1292, %v997, -inf
    %v1322 = vmax.f32 %v1320, %v1321
    %v1323 = vsel %vm1292, %v976, -inf
    %v1324 = vsel %vm1292, %v1004, -inf
    %v1325 = vmax.f32 %v1323, %v1324
    %v1326 = vsel %vm1292, %v983, -inf
    %v1327 = vsel %vm1292, %v1011, -inf
    %v1328 = vmax.f32 %v1326, %v1327
    %v1329 = vsel %vm1292, %v1018, -inf
    %v1330 = vsel %vm1292, %v1046, -inf
    %v1331 = vmax.f32 %v1329, %v1330
    %v1332 = vsel %vm1292, %v1025, -inf
    %v1333 = vsel %vm1292, %v1053, -inf
    %v1334 = vmax.f32 %v1332, %v1333
    %v1335 = vsel %vm1292, %v1032, -inf
    %v1336 = vsel %vm1292, %v1060, -inf
    %v1337 = vmax.f32 %v1335, %v1336
    %v1338 = vsel %vm1292, %v1039, -inf
    %v1339 = vsel %vm1292, %v1067, -inf
    %v1340 = vmax.f32 %v1338, %v1339
    %v1341 = vsel %vm1292, %v1074, -inf
    %v1342 = vsel %vm1292, %v1102, -inf
    %v1343 = vmax.f32 %v1341, %v1342
    %v1344 = vsel %vm1292, %v1081, -inf
    %v1345 = vsel %vm1292, %v1109, -inf
    %v1346 = vmax.f32 %v1344, %v1345
    %v1347 = vsel %vm1292, %v1088, -inf
    %v1348 = vsel %vm1292, %v1116, -inf
    %v1349 = vmax.f32 %v1347, %v1348
    %v1350 = vsel %vm1292, %v1095, -inf
    %v1351 = vsel %vm1292, %v1123, -inf
    %v1352 = vmax.f32 %v1350, %v1351
    %v1353 = vsel %vm1292, %v1130, -inf
    %v1354 = vsel %vm1292, %v1158, -inf
    %v1355 = vmax.f32 %v1353, %v1354
    %v1356 = vsel %vm1292, %v1137, -inf
    %v1357 = vsel %vm1292, %v1165, -inf
    %v1358 = vmax.f32 %v1356, %v1357
    %v1359 = vsel %vm1292, %v1144, -inf
    %v1360 = vsel %vm1292, %v1172, -inf
    %v1361 = vmax.f32 %v1359, %v1360
    %v1362 = vsel %vm1292, %v1151, -inf
    %v1363 = vsel %vm1292, %v1179, -inf
    %v1364 = vmax.f32 %v1362, %v1363
    %v1365 = vsel %vm1292, %v1186, -inf
    %v1366 = vsel %vm1292, %v1214, -inf
    %v1367 = vmax.f32 %v1365, %v1366
    %v1368 = vsel %vm1292, %v1193, -inf
    %v1369 = vsel %vm1292, %v1221, -inf
    %v1370 = vmax.f32 %v1368, %v1369
    %v1371 = vsel %vm1292, %v1200, -inf
    %v1372 = vsel %vm1292, %v1228, -inf
    %v1373 = vmax.f32 %v1371, %v1372
    %v1374 = vsel %vm1292, %v1207, -inf
    %v1375 = vsel %vm1292, %v1235, -inf
    %v1376 = vmax.f32 %v1374, %v1375
    %v1377 = vsel %vm1292, %v1242, -inf
    %v1378 = vsel %vm1292, %v1270, -inf
    %v1379 = vmax.f32 %v1377, %v1378
    %v1380 = vsel %vm1292, %v1249, -inf
    %v1381 = vsel %vm1292, %v1277, -inf
    %v1382 = vmax.f32 %v1380, %v1381
    %v1383 = vsel %vm1292, %v1256, -inf
    %v1384 = vsel %vm1292, %v1284, -inf
    %v1385 = vmax.f32 %v1383, %v1384
    %v1386 = vsel %vm1292, %v1263, -inf
    %v1387 = vsel %vm1292, %v1291, -inf
    %v1388 = vmax.f32 %v1386, %v1387
    %v1389 = vpack.c.bf16 %v432, %v429
    %v1390 = vpack.c.bf16 %v440, %v437
    %v1391 = vpack.c.bf16 %v448, %v445
    %v1392 = vpack.c.bf16 %v456, %v453
    %v1393 = vpack.c.bf16 %v464, %v461
    %v1394 = vpack.c.bf16 %v472, %v469
    %v1395 = vpack.c.bf16 %v480, %v477
    %v1396 = vpack.c.bf16 %v488, %v485
    %v1405 = vcombine.high %v1389, %v1389
    %v1407 = vunpack.c.l.s4 1966171168
    %v1408 = vunpack.c.0.s8 %v1407
    %v1409 = vlaneseq
    %v1410 = vshrl.u32 %v1409, 7
    %v1411 = vsub.s32 %v1408, %v1410
    %v1412 = vrot.slane %v1389, %v1411
    %v1414 = vunpack.c.l.s4 1966171168
    %v1415 = vunpack.c.0.s8 %v1414
    %v1416 = vlaneseq
    %v1417 = vshrl.u32 %v1416, 7
    %v1418 = vsub.s32 %v1415, %v1417
    %v1419 = vrot.slane %v1405, %v1418
    %v1420 = vcombine.high %v1412, %v1412
    %v1421 = vcombine.high %v1419, %v1419
    %v1423 = vunpack.c.l.s4 1966171168
    %v1424 = vunpack.c.0.s8 %v1423
    %v1425 = vlaneseq
    %v1426 = vshrl.u32 %v1425, 7
    %v1427 = vsub.s32 %v1424, %v1426
    %v1428 = vrot.slane %v1412, %v1427
    %v1430 = vunpack.c.l.s4 1966171168
    %v1431 = vunpack.c.0.s8 %v1430
    %v1432 = vlaneseq
    %v1433 = vshrl.u32 %v1432, 7
    %v1434 = vsub.s32 %v1431, %v1433
    %v1435 = vrot.slane %v1419, %v1434
    %v1437 = vunpack.c.l.s4 1966171168
    %v1438 = vunpack.c.0.s8 %v1437
    %v1439 = vlaneseq
    %v1440 = vshrl.u32 %v1439, 7
    %v1441 = vsub.s32 %v1438, %v1440
    %v1442 = vrot.slane %v1420, %v1441
    %v1444 = vunpack.c.l.s4 1966171168
    %v1445 = vunpack.c.0.s8 %v1444
    %v1446 = vlaneseq
    %v1447 = vshrl.u32 %v1446, 7
    %v1448 = vsub.s32 %v1445, %v1447
    %v1449 = vrot.slane %v1421, %v1448
    %v1450 = vcombine.high %v1428, %v1428
    %v1451 = vcombine.high %v1435, %v1435
    %v1452 = vcombine.high %v1442, %v1442
    %v1453 = vcombine.high %v1449, %v1449
    %v1454 = vcombine.high %v1390, %v1390
    %v1456 = vunpack.c.l.s4 1966171168
    %v1457 = vunpack.c.0.s8 %v1456
    %v1458 = vlaneseq
    %v1459 = vshrl.u32 %v1458, 7
    %v1460 = vsub.s32 %v1457, %v1459
    %v1461 = vrot.slane %v1390, %v1460
    %v1463 = vunpack.c.l.s4 1966171168
    %v1464 = vunpack.c.0.s8 %v1463
    %v1465 = vlaneseq
    %v1466 = vshrl.u32 %v1465, 7
    %v1467 = vsub.s32 %v1464, %v1466
    %v1468 = vrot.slane %v1454, %v1467
    %v1469 = vcombine.high %v1461, %v1461
    %v1470 = vcombine.high %v1468, %v1468
    %v1472 = vunpack.c.l.s4 1966171168
    %v1473 = vunpack.c.0.s8 %v1472
    %v1474 = vlaneseq
    %v1475 = vshrl.u32 %v1474, 7
    %v1476 = vsub.s32 %v1473, %v1475
    %v1477 = vrot.slane %v1461, %v1476
    %v1479 = vunpack.c.l.s4 1966171168
    %v1480 = vunpack.c.0.s8 %v1479
    %v1481 = vlaneseq
    %v1482 = vshrl.u32 %v1481, 7
    %v1483 = vsub.s32 %v1480, %v1482
    %v1484 = vrot.slane %v1468, %v1483
    %v1486 = vunpack.c.l.s4 1966171168
    %v1487 = vunpack.c.0.s8 %v1486
    %v1488 = vlaneseq
    %v1489 = vshrl.u32 %v1488, 7
    %v1490 = vsub.s32 %v1487, %v1489
    %v1491 = vrot.slane %v1469, %v1490
    %v1493 = vunpack.c.l.s4 1966171168
    %v1494 = vunpack.c.0.s8 %v1493
    %v1495 = vlaneseq
    %v1496 = vshrl.u32 %v1495, 7
    %v1497 = vsub.s32 %v1494, %v1496
    %v1498 = vrot.slane %v1470, %v1497
    %v1499 = vcombine.high %v1477, %v1477
    %v1500 = vcombine.high %v1484, %v1484
    %v1501 = vcombine.high %v1491, %v1491
    %v1502 = vcombine.high %v1498, %v1498
    %v1503 = vcombine.high %v1391, %v1391
    %v1505 = vunpack.c.l.s4 1966171168
    %v1506 = vunpack.c.0.s8 %v1505
    %v1507 = vlaneseq
    %v1508 = vshrl.u32 %v1507, 7
    %v1509 = vsub.s32 %v1506, %v1508
    %v1510 = vrot.slane %v1391, %v1509
    %v1512 = vunpack.c.l.s4 1966171168
    %v1513 = vunpack.c.0.s8 %v1512
    %v1514 = vlaneseq
    %v1515 = vshrl.u32 %v1514, 7
    %v1516 = vsub.s32 %v1513, %v1515
    %v1517 = vrot.slane %v1503, %v1516
    %v1518 = vcombine.high %v1510, %v1510
    %v1519 = vcombine.high %v1517, %v1517
    %v1521 = vunpack.c.l.s4 1966171168
    %v1522 = vunpack.c.0.s8 %v1521
    %v1523 = vlaneseq
    %v1524 = vshrl.u32 %v1523, 7
    %v1525 = vsub.s32 %v1522, %v1524
    %v1526 = vrot.slane %v1510, %v1525
    %v1528 = vunpack.c.l.s4 1966171168
    %v1529 = vunpack.c.0.s8 %v1528
    %v1530 = vlaneseq
    %v1531 = vshrl.u32 %v1530, 7
    %v1532 = vsub.s32 %v1529, %v1531
    %v1533 = vrot.slane %v1517, %v1532
    %v1535 = vunpack.c.l.s4 1966171168
    %v1536 = vunpack.c.0.s8 %v1535
    %v1537 = vlaneseq
    %v1538 = vshrl.u32 %v1537, 7
    %v1539 = vsub.s32 %v1536, %v1538
    %v1540 = vrot.slane %v1518, %v1539
    %v1542 = vunpack.c.l.s4 1966171168
    %v1543 = vunpack.c.0.s8 %v1542
    %v1544 = vlaneseq
    %v1545 = vshrl.u32 %v1544, 7
    %v1546 = vsub.s32 %v1543, %v1545
    %v1547 = vrot.slane %v1519, %v1546
    %v1548 = vcombine.high %v1526, %v1526
    %v1549 = vcombine.high %v1533, %v1533
    %v1550 = vcombine.high %v1540, %v1540
    %v1551 = vcombine.high %v1547, %v1547
    %v1552 = vcombine.high %v1392, %v1392
    %v1554 = vunpack.c.l.s4 1966171168
    %v1555 = vunpack.c.0.s8 %v1554
    %v1556 = vlaneseq
    %v1557 = vshrl.u32 %v1556, 7
    %v1558 = vsub.s32 %v1555, %v1557
    %v1559 = vrot.slane %v1392, %v1558
    %v1561 = vunpack.c.l.s4 1966171168
    %v1562 = vunpack.c.0.s8 %v1561
    %v1563 = vlaneseq
    %v1564 = vshrl.u32 %v1563, 7
    %v1565 = vsub.s32 %v1562, %v1564
    %v1566 = vrot.slane %v1552, %v1565
    %v1567 = vcombine.high %v1559, %v1559
    %v1568 = vcombine.high %v1566, %v1566
    %v1570 = vunpack.c.l.s4 1966171168
    %v1571 = vunpack.c.0.s8 %v1570
    %v1572 = vlaneseq
    %v1573 = vshrl.u32 %v1572, 7
    %v1574 = vsub.s32 %v1571, %v1573
    %v1575 = vrot.slane %v1559, %v1574
    %v1577 = vunpack.c.l.s4 1966171168
    %v1578 = vunpack.c.0.s8 %v1577
    %v1579 = vlaneseq
    %v1580 = vshrl.u32 %v1579, 7
    %v1581 = vsub.s32 %v1578, %v1580
    %v1582 = vrot.slane %v1566, %v1581
    %v1584 = vunpack.c.l.s4 1966171168
    %v1585 = vunpack.c.0.s8 %v1584
    %v1586 = vlaneseq
    %v1587 = vshrl.u32 %v1586, 7
    %v1588 = vsub.s32 %v1585, %v1587
    %v1589 = vrot.slane %v1567, %v1588
    %v1591 = vunpack.c.l.s4 1966171168
    %v1592 = vunpack.c.0.s8 %v1591
    %v1593 = vlaneseq
    %v1594 = vshrl.u32 %v1593, 7
    %v1595 = vsub.s32 %v1592, %v1594
    %v1596 = vrot.slane %v1568, %v1595
    %v1597 = vcombine.high %v1575, %v1575
    %v1598 = vcombine.high %v1582, %v1582
    %v1599 = vcombine.high %v1589, %v1589
    %v1600 = vcombine.high %v1596, %v1596
    %v1601 = vcombine.high %v1393, %v1393
    %v1603 = vunpack.c.l.s4 1966171168
    %v1604 = vunpack.c.0.s8 %v1603
    %v1605 = vlaneseq
    %v1606 = vshrl.u32 %v1605, 7
    %v1607 = vsub.s32 %v1604, %v1606
    %v1608 = vrot.slane %v1393, %v1607
    %v1610 = vunpack.c.l.s4 1966171168
    %v1611 = vunpack.c.0.s8 %v1610
    %v1612 = vlaneseq
    %v1613 = vshrl.u32 %v1612, 7
    %v1614 = vsub.s32 %v1611, %v1613
    %v1615 = vrot.slane %v1601, %v1614
    %v1616 = vcombine.high %v1608, %v1608
    %v1617 = vcombine.high %v1615, %v1615
    %v1619 = vunpack.c.l.s4 1966171168
    %v1620 = vunpack.c.0.s8 %v1619
    %v1621 = vlaneseq
    %v1622 = vshrl.u32 %v1621, 7
    %v1623 = vsub.s32 %v1620, %v1622
    %v1624 = vrot.slane %v1608, %v1623
    %v1626 = vunpack.c.l.s4 1966171168
    %v1627 = vunpack.c.0.s8 %v1626
    %v1628 = vlaneseq
    %v1629 = vshrl.u32 %v1628, 7
    %v1630 = vsub.s32 %v1627, %v1629
    %v1631 = vrot.slane %v1615, %v1630
    %v1633 = vunpack.c.l.s4 1966171168
    %v1634 = vunpack.c.0.s8 %v1633
    %v1635 = vlaneseq
    %v1636 = vshrl.u32 %v1635, 7
    %v1637 = vsub.s32 %v1634, %v1636
    %v1638 = vrot.slane %v1616, %v1637
    %v1640 = vunpack.c.l.s4 1966171168
    %v1641 = vunpack.c.0.s8 %v1640
    %v1642 = vlaneseq
    %v1643 = vshrl.u32 %v1642, 7
    %v1644 = vsub.s32 %v1641, %v1643
    %v1645 = vrot.slane %v1617, %v1644
    %v1646 = vcombine.high %v1624, %v1624
    %v1647 = vcombine.high %v1631, %v1631
    %v1648 = vcombine.high %v1638, %v1638
    %v1649 = vcombine.high %v1645, %v1645
    %v1650 = vcombine.high %v1394, %v1394
    %v1652 = vunpack.c.l.s4 1966171168
    %v1653 = vunpack.c.0.s8 %v1652
    %v1654 = vlaneseq
    %v1655 = vshrl.u32 %v1654, 7
    %v1656 = vsub.s32 %v1653, %v1655
    %v1657 = vrot.slane %v1394, %v1656
    %v1659 = vunpack.c.l.s4 1966171168
    %v1660 = vunpack.c.0.s8 %v1659
    %v1661 = vlaneseq
    %v1662 = vshrl.u32 %v1661, 7
    %v1663 = vsub.s32 %v1660, %v1662
    %v1664 = vrot.slane %v1650, %v1663
    %v1665 = vcombine.high %v1657, %v1657
    %v1666 = vcombine.high %v1664, %v1664
    %v1668 = vunpack.c.l.s4 1966171168
    %v1669 = vunpack.c.0.s8 %v1668
    %v1670 = vlaneseq
    %v1671 = vshrl.u32 %v1670, 7
    %v1672 = vsub.s32 %v1669, %v1671
    %v1673 = vrot.slane %v1657, %v1672
    %v1675 = vunpack.c.l.s4 1966171168
    %v1676 = vunpack.c.0.s8 %v1675
    %v1677 = vlaneseq
    %v1678 = vshrl.u32 %v1677, 7
    %v1679 = vsub.s32 %v1676, %v1678
    %v1680 = vrot.slane %v1664, %v1679
    %v1682 = vunpack.c.l.s4 1966171168
    %v1683 = vunpack.c.0.s8 %v1682
    %v1684 = vlaneseq
    %v1685 = vshrl.u32 %v1684, 7
    %v1686 = vsub.s32 %v1683, %v1685
    %v1687 = vrot.slane %v1665, %v1686
    %v1689 = vunpack.c.l.s4 1966171168
    %v1690 = vunpack.c.0.s8 %v1689
    %v1691 = vlaneseq
    %v1692 = vshrl.u32 %v1691, 7
    %v1693 = vsub.s32 %v1690, %v1692
    %v1694 = vrot.slane %v1666, %v1693
    %v1695 = vcombine.high %v1673, %v1673
    %v1696 = vcombine.high %v1680, %v1680
    %v1697 = vcombine.high %v1687, %v1687
    %v1698 = vcombine.high %v1694, %v1694
    %v1699 = vcombine.high %v1395, %v1395
    %v1701 = vunpack.c.l.s4 1966171168
    %v1702 = vunpack.c.0.s8 %v1701
    %v1703 = vlaneseq
    %v1704 = vshrl.u32 %v1703, 7
    %v1705 = vsub.s32 %v1702, %v1704
    %v1706 = vrot.slane %v1395, %v1705
    %v1708 = vunpack.c.l.s4 1966171168
    %v1709 = vunpack.c.0.s8 %v1708
    %v1710 = vlaneseq
    %v1711 = vshrl.u32 %v1710, 7
    %v1712 = vsub.s32 %v1709, %v1711
    %v1713 = vrot.slane %v1699, %v1712
    %v1714 = vcombine.high %v1706, %v1706
    %v1715 = vcombine.high %v1713, %v1713
    %v1717 = vunpack.c.l.s4 1966171168
    %v1718 = vunpack.c.0.s8 %v1717
    %v1719 = vlaneseq
    %v1720 = vshrl.u32 %v1719, 7
    %v1721 = vsub.s32 %v1718, %v1720
    %v1722 = vrot.slane %v1706, %v1721
    %v1724 = vunpack.c.l.s4 1966171168
    %v1725 = vunpack.c.0.s8 %v1724
    %v1726 = vlaneseq
    %v1727 = vshrl.u32 %v1726, 7
    %v1728 = vsub.s32 %v1725, %v1727
    %v1729 = vrot.slane %v1713, %v1728
    %v1731 = vunpack.c.l.s4 1966171168
    %v1732 = vunpack.c.0.s8 %v1731
    %v1733 = vlaneseq
    %v1734 = vshrl.u32 %v1733, 7
    %v1735 = vsub.s32 %v1732, %v1734
    %v1736 = vrot.slane %v1714, %v1735
    %v1738 = vunpack.c.l.s4 1966171168
    %v1739 = vunpack.c.0.s8 %v1738
    %v1740 = vlaneseq
    %v1741 = vshrl.u32 %v1740, 7
    %v1742 = vsub.s32 %v1739, %v1741
    %v1743 = vrot.slane %v1715, %v1742
    %v1744 = vcombine.high %v1722, %v1722
    %v1745 = vcombine.high %v1729, %v1729
    %v1746 = vcombine.high %v1736, %v1736
    %v1747 = vcombine.high %v1743, %v1743
    %v1748 = vcombine.high %v1396, %v1396
    %v1750 = vunpack.c.l.s4 1966171168
    %v1751 = vunpack.c.0.s8 %v1750
    %v1752 = vlaneseq
    %v1753 = vshrl.u32 %v1752, 7
    %v1754 = vsub.s32 %v1751, %v1753
    %v1755 = vrot.slane %v1396, %v1754
    %v1757 = vunpack.c.l.s4 1966171168
    %v1758 = vunpack.c.0.s8 %v1757
    %v1759 = vlaneseq
    %v1760 = vshrl.u32 %v1759, 7
    %v1761 = vsub.s32 %v1758, %v1760
    %v1762 = vrot.slane %v1748, %v1761
    %v1763 = vcombine.high %v1755, %v1755
    %v1764 = vcombine.high %v1762, %v1762
    %v1766 = vunpack.c.l.s4 1966171168
    %v1767 = vunpack.c.0.s8 %v1766
    %v1768 = vlaneseq
    %v1769 = vshrl.u32 %v1768, 7
    %v1770 = vsub.s32 %v1767, %v1769
    %v1771 = vrot.slane %v1755, %v1770
    %v1773 = vunpack.c.l.s4 1966171168
    %v1774 = vunpack.c.0.s8 %v1773
    %v1775 = vlaneseq
    %v1776 = vshrl.u32 %v1775, 7
    %v1777 = vsub.s32 %v1774, %v1776
    %v1778 = vrot.slane %v1762, %v1777
    %v1780 = vunpack.c.l.s4 1966171168
    %v1781 = vunpack.c.0.s8 %v1780
    %v1782 = vlaneseq
    %v1783 = vshrl.u32 %v1782, 7
    %v1784 = vsub.s32 %v1781, %v1783
    %v1785 = vrot.slane %v1763, %v1784
    %v1787 = vunpack.c.l.s4 1966171168
    %v1788 = vunpack.c.0.s8 %v1787
    %v1789 = vlaneseq
    %v1790 = vshrl.u32 %v1789, 7
    %v1791 = vsub.s32 %v1788, %v1790
    %v1792 = vrot.slane %v1764, %v1791
    %v1793 = vcombine.high %v1771, %v1771
    %v1794 = vcombine.high %v1778, %v1778
    %v1795 = vcombine.high %v1785, %v1785
    %v1796 = vcombine.high %v1792, %v1792
    %vm1797 = vcmask 253952
    %v1800 = vsel %vm1797, %v1428, 4286644096
    %v1802 = vunpack.i.l.bf16 %v1800
    %v1803 = vunpack.i.h.bf16 %v1800
    %v1804 = vmax.f32 %v1802, %v1803
    %v1805 = vrot.slane %v1804, 4
    %v1806 = vmax.f32 %v1804, %v1805
    %v1807 = vrot.slane %v1806, 2
    %v1808 = vmax.f32 %v1806, %v1807
    %v1809 = vrot.slane %v1808, 1
    %v1810 = vmax.f32 %v1808, %v1809
    %v1811 = vpack.i.bf16 %v1810, %v1810
    %v1813 = vsel %vm1797, %v1442, 4286644096
    %v1815 = vunpack.i.l.bf16 %v1813
    %v1816 = vunpack.i.h.bf16 %v1813
    %v1817 = vmax.f32 %v1815, %v1816
    %v1818 = vrot.slane %v1817, 4
    %v1819 = vmax.f32 %v1817, %v1818
    %v1820 = vrot.slane %v1819, 2
    %v1821 = vmax.f32 %v1819, %v1820
    %v1822 = vrot.slane %v1821, 1
    %v1823 = vmax.f32 %v1821, %v1822
    %v1824 = vpack.i.bf16 %v1823, %v1823
    %v1826 = vsel %vm1797, %v1450, 4286644096
    %v1828 = vunpack.i.l.bf16 %v1826
    %v1829 = vunpack.i.h.bf16 %v1826
    %v1830 = vmax.f32 %v1828, %v1829
    %v1831 = vrot.slane %v1830, 4
    %v1832 = vmax.f32 %v1830, %v1831
    %v1833 = vrot.slane %v1832, 2
    %v1834 = vmax.f32 %v1832, %v1833
    %v1835 = vrot.slane %v1834, 1
    %v1836 = vmax.f32 %v1834, %v1835
    %v1837 = vpack.i.bf16 %v1836, %v1836
    %v1839 = vsel %vm1797, %v1452, 4286644096
    %v1841 = vunpack.i.l.bf16 %v1839
    %v1842 = vunpack.i.h.bf16 %v1839
    %v1843 = vmax.f32 %v1841, %v1842
    %v1844 = vrot.slane %v1843, 4
    %v1845 = vmax.f32 %v1843, %v1844
    %v1846 = vrot.slane %v1845, 2
    %v1847 = vmax.f32 %v1845, %v1846
    %v1848 = vrot.slane %v1847, 1
    %v1849 = vmax.f32 %v1847, %v1848
    %v1850 = vpack.i.bf16 %v1849, %v1849
    %v1852 = vsel %vm1797, %v1435, 4286644096
    %v1854 = vunpack.i.l.bf16 %v1852
    %v1855 = vunpack.i.h.bf16 %v1852
    %v1856 = vmax.f32 %v1854, %v1855
    %v1857 = vrot.slane %v1856, 4
    %v1858 = vmax.f32 %v1856, %v1857
    %v1859 = vrot.slane %v1858, 2
    %v1860 = vmax.f32 %v1858, %v1859
    %v1861 = vrot.slane %v1860, 1
    %v1862 = vmax.f32 %v1860, %v1861
    %v1863 = vpack.i.bf16 %v1862, %v1862
    %v1865 = vsel %vm1797, %v1449, 4286644096
    %v1867 = vunpack.i.l.bf16 %v1865
    %v1868 = vunpack.i.h.bf16 %v1865
    %v1869 = vmax.f32 %v1867, %v1868
    %v1870 = vrot.slane %v1869, 4
    %v1871 = vmax.f32 %v1869, %v1870
    %v1872 = vrot.slane %v1871, 2
    %v1873 = vmax.f32 %v1871, %v1872
    %v1874 = vrot.slane %v1873, 1
    %v1875 = vmax.f32 %v1873, %v1874
    %v1876 = vpack.i.bf16 %v1875, %v1875
    %v1878 = vsel %vm1797, %v1451, 4286644096
    %v1880 = vunpack.i.l.bf16 %v1878
    %v1881 = vunpack.i.h.bf16 %v1878
    %v1882 = vmax.f32 %v1880, %v1881
    %v1883 = vrot.slane %v1882, 4
    %v1884 = vmax.f32 %v1882, %v1883
    %v1885 = vrot.slane %v1884, 2
    %v1886 = vmax.f32 %v1884, %v1885
    %v1887 = vrot.slane %v1886, 1
    %v1888 = vmax.f32 %v1886, %v1887
    %v1889 = vpack.i.bf16 %v1888, %v1888
    %v1891 = vsel %vm1797, %v1453, 4286644096
    %v1893 = vunpack.i.l.bf16 %v1891
    %v1894 = vunpack.i.h.bf16 %v1891
    %v1895 = vmax.f32 %v1893, %v1894
    %v1896 = vrot.slane %v1895, 4
    %v1897 = vmax.f32 %v1895, %v1896
    %v1898 = vrot.slane %v1897, 2
    %v1899 = vmax.f32 %v1897, %v1898
    %v1900 = vrot.slane %v1899, 1
    %v1901 = vmax.f32 %v1899, %v1900
    %v1902 = vpack.i.bf16 %v1901, %v1901
    %v1904 = vsel %vm1797, %v1477, 4286644096
    %v1906 = vunpack.i.l.bf16 %v1904
    %v1907 = vunpack.i.h.bf16 %v1904
    %v1908 = vmax.f32 %v1906, %v1907
    %v1909 = vrot.slane %v1908, 4
    %v1910 = vmax.f32 %v1908, %v1909
    %v1911 = vrot.slane %v1910, 2
    %v1912 = vmax.f32 %v1910, %v1911
    %v1913 = vrot.slane %v1912, 1
    %v1914 = vmax.f32 %v1912, %v1913
    %v1915 = vpack.i.bf16 %v1914, %v1914
    %v1917 = vsel %vm1797, %v1491, 4286644096
    %v1919 = vunpack.i.l.bf16 %v1917
    %v1920 = vunpack.i.h.bf16 %v1917
    %v1921 = vmax.f32 %v1919, %v1920
    %v1922 = vrot.slane %v1921, 4
    %v1923 = vmax.f32 %v1921, %v1922
    %v1924 = vrot.slane %v1923, 2
    %v1925 = vmax.f32 %v1923, %v1924
    %v1926 = vrot.slane %v1925, 1
    %v1927 = vmax.f32 %v1925, %v1926
    %v1928 = vpack.i.bf16 %v1927, %v1927
    %v1930 = vsel %vm1797, %v1499, 4286644096
    %v1932 = vunpack.i.l.bf16 %v1930
    %v1933 = vunpack.i.h.bf16 %v1930
    %v1934 = vmax.f32 %v1932, %v1933
    %v1935 = vrot.slane %v1934, 4
    %v1936 = vmax.f32 %v1934, %v1935
    %v1937 = vrot.slane %v1936, 2
    %v1938 = vmax.f32 %v1936, %v1937
    %v1939 = vrot.slane %v1938, 1
    %v1940 = vmax.f32 %v1938, %v1939
    %v1941 = vpack.i.bf16 %v1940, %v1940
    %v1943 = vsel %vm1797, %v1501, 4286644096
    %v1945 = vunpack.i.l.bf16 %v1943
    %v1946 = vunpack.i.h.bf16 %v1943
    %v1947 = vmax.f32 %v1945, %v1946
    %v1948 = vrot.slane %v1947, 4
    %v1949 = vmax.f32 %v1947, %v1948
    %v1950 = vrot.slane %v1949, 2
    %v1951 = vmax.f32 %v1949, %v1950
    %v1952 = vrot.slane %v1951, 1
    %v1953 = vmax.f32 %v1951, %v1952
    %v1954 = vpack.i.bf16 %v1953, %v1953
    %v1956 = vsel %vm1797, %v1484, 4286644096
    %v1958 = vunpack.i.l.bf16 %v1956
    %v1959 = vunpack.i.h.bf16 %v1956
    %v1960 = vmax.f32 %v1958, %v1959
    %v1961 = vrot.slane %v1960, 4
    %v1962 = vmax.f32 %v1960, %v1961
    %v1963 = vrot.slane %v1962, 2
    %v1964 = vmax.f32 %v1962, %v1963
    %v1965 = vrot.slane %v1964, 1
    %v1966 = vmax.f32 %v1964, %v1965
    %v1967 = vpack.i.bf16 %v1966, %v1966
    %v1969 = vsel %vm1797, %v1498, 4286644096
    %v1971 = vunpack.i.l.bf16 %v1969
    %v1972 = vunpack.i.h.bf16 %v1969
    %v1973 = vmax.f32 %v1971, %v1972
    %v1974 = vrot.slane %v1973, 4
    %v1975 = vmax.f32 %v1973, %v1974
    %v1976 = vrot.slane %v1975, 2
    %v1977 = vmax.f32 %v1975, %v1976
    %v1978 = vrot.slane %v1977, 1
    %v1979 = vmax.f32 %v1977, %v1978
    %v1980 = vpack.i.bf16 %v1979, %v1979
    %v1982 = vsel %vm1797, %v1500, 4286644096
    %v1984 = vunpack.i.l.bf16 %v1982
    %v1985 = vunpack.i.h.bf16 %v1982
    %v1986 = vmax.f32 %v1984, %v1985
    %v1987 = vrot.slane %v1986, 4
    %v1988 = vmax.f32 %v1986, %v1987
    %v1989 = vrot.slane %v1988, 2
    %v1990 = vmax.f32 %v1988, %v1989
    %v1991 = vrot.slane %v1990, 1
    %v1992 = vmax.f32 %v1990, %v1991
    %v1993 = vpack.i.bf16 %v1992, %v1992
    %v1995 = vsel %vm1797, %v1502, 4286644096
    %v1997 = vunpack.i.l.bf16 %v1995
    %v1998 = vunpack.i.h.bf16 %v1995
    %v1999 = vmax.f32 %v1997, %v1998
    %v2000 = vrot.slane %v1999, 4
    %v2001 = vmax.f32 %v1999, %v2000
    %v2002 = vrot.slane %v2001, 2
    %v2003 = vmax.f32 %v2001, %v2002
    %v2004 = vrot.slane %v2003, 1
    %v2005 = vmax.f32 %v2003, %v2004
    %v2006 = vpack.i.bf16 %v2005, %v2005
    %v2008 = vsel %vm1797, %v1526, 4286644096
    %v2010 = vunpack.i.l.bf16 %v2008
    %v2011 = vunpack.i.h.bf16 %v2008
    %v2012 = vmax.f32 %v2010, %v2011
    %v2013 = vrot.slane %v2012, 4
    %v2014 = vmax.f32 %v2012, %v2013
    %v2015 = vrot.slane %v2014, 2
    %v2016 = vmax.f32 %v2014, %v2015
    %v2017 = vrot.slane %v2016, 1
    %v2018 = vmax.f32 %v2016, %v2017
    %v2019 = vpack.i.bf16 %v2018, %v2018
    %v2021 = vsel %vm1797, %v1540, 4286644096
    %v2023 = vunpack.i.l.bf16 %v2021
    %v2024 = vunpack.i.h.bf16 %v2021
    %v2025 = vmax.f32 %v2023, %v2024
    %v2026 = vrot.slane %v2025, 4
    %v2027 = vmax.f32 %v2025, %v2026
    %v2028 = vrot.slane %v2027, 2
    %v2029 = vmax.f32 %v2027, %v2028
    %v2030 = vrot.slane %v2029, 1
    %v2031 = vmax.f32 %v2029, %v2030
    %v2032 = vpack.i.bf16 %v2031, %v2031
    %v2034 = vsel %vm1797, %v1548, 4286644096
    %v2036 = vunpack.i.l.bf16 %v2034
    %v2037 = vunpack.i.h.bf16 %v2034
    %v2038 = vmax.f32 %v2036, %v2037
    %v2039 = vrot.slane %v2038, 4
    %v2040 = vmax.f32 %v2038, %v2039
    %v2041 = vrot.slane %v2040, 2
    %v2042 = vmax.f32 %v2040, %v2041
    %v2043 = vrot.slane %v2042, 1
    %v2044 = vmax.f32 %v2042, %v2043
    %v2045 = vpack.i.bf16 %v2044, %v2044
    %v2047 = vsel %vm1797, %v1550, 4286644096
    %v2049 = vunpack.i.l.bf16 %v2047
    %v2050 = vunpack.i.h.bf16 %v2047
    %v2051 = vmax.f32 %v2049, %v2050
    %v2052 = vrot.slane %v2051, 4
    %v2053 = vmax.f32 %v2051, %v2052
    %v2054 = vrot.slane %v2053, 2
    %v2055 = vmax.f32 %v2053, %v2054
    %v2056 = vrot.slane %v2055, 1
    %v2057 = vmax.f32 %v2055, %v2056
    %v2058 = vpack.i.bf16 %v2057, %v2057
    %v2060 = vsel %vm1797, %v1533, 4286644096
    %v2062 = vunpack.i.l.bf16 %v2060
    %v2063 = vunpack.i.h.bf16 %v2060
    %v2064 = vmax.f32 %v2062, %v2063
    %v2065 = vrot.slane %v2064, 4
    %v2066 = vmax.f32 %v2064, %v2065
    %v2067 = vrot.slane %v2066, 2
    %v2068 = vmax.f32 %v2066, %v2067
    %v2069 = vrot.slane %v2068, 1
    %v2070 = vmax.f32 %v2068, %v2069
    %v2071 = vpack.i.bf16 %v2070, %v2070
    %v2073 = vsel %vm1797, %v1547, 4286644096
    %v2075 = vunpack.i.l.bf16 %v2073
    %v2076 = vunpack.i.h.bf16 %v2073
    %v2077 = vmax.f32 %v2075, %v2076
    %v2078 = vrot.slane %v2077, 4
    %v2079 = vmax.f32 %v2077, %v2078
    %v2080 = vrot.slane %v2079, 2
    %v2081 = vmax.f32 %v2079, %v2080
    %v2082 = vrot.slane %v2081, 1
    %v2083 = vmax.f32 %v2081, %v2082
    %v2084 = vpack.i.bf16 %v2083, %v2083
    %v2086 = vsel %vm1797, %v1549, 4286644096
    %v2088 = vunpack.i.l.bf16 %v2086
    %v2089 = vunpack.i.h.bf16 %v2086
    %v2090 = vmax.f32 %v2088, %v2089
    %v2091 = vrot.slane %v2090, 4
    %v2092 = vmax.f32 %v2090, %v2091
    %v2093 = vrot.slane %v2092, 2
    %v2094 = vmax.f32 %v2092, %v2093
    %v2095 = vrot.slane %v2094, 1
    %v2096 = vmax.f32 %v2094, %v2095
    %v2097 = vpack.i.bf16 %v2096, %v2096
    %v2099 = vsel %vm1797, %v1551, 4286644096
    %v2101 = vunpack.i.l.bf16 %v2099
    %v2102 = vunpack.i.h.bf16 %v2099
    %v2103 = vmax.f32 %v2101, %v2102
    %v2104 = vrot.slane %v2103, 4
    %v2105 = vmax.f32 %v2103, %v2104
    %v2106 = vrot.slane %v2105, 2
    %v2107 = vmax.f32 %v2105, %v2106
    %v2108 = vrot.slane %v2107, 1
    %v2109 = vmax.f32 %v2107, %v2108
    %v2110 = vpack.i.bf16 %v2109, %v2109
    %v2112 = vsel %vm1797, %v1575, 4286644096
    %v2114 = vunpack.i.l.bf16 %v2112
    %v2115 = vunpack.i.h.bf16 %v2112
    %v2116 = vmax.f32 %v2114, %v2115
    %v2117 = vrot.slane %v2116, 4
    %v2118 = vmax.f32 %v2116, %v2117
    %v2119 = vrot.slane %v2118, 2
    %v2120 = vmax.f32 %v2118, %v2119
    %v2121 = vrot.slane %v2120, 1
    %v2122 = vmax.f32 %v2120, %v2121
    %v2123 = vpack.i.bf16 %v2122, %v2122
    %v2125 = vsel %vm1797, %v1589, 4286644096
    %v2127 = vunpack.i.l.bf16 %v2125
    %v2128 = vunpack.i.h.bf16 %v2125
    %v2129 = vmax.f32 %v2127, %v2128
    %v2130 = vrot.slane %v2129, 4
    %v2131 = vmax.f32 %v2129, %v2130
    %v2132 = vrot.slane %v2131, 2
    %v2133 = vmax.f32 %v2131, %v2132
    %v2134 = vrot.slane %v2133, 1
    %v2135 = vmax.f32 %v2133, %v2134
    %v2136 = vpack.i.bf16 %v2135, %v2135
    %v2138 = vsel %vm1797, %v1597, 4286644096
    %v2140 = vunpack.i.l.bf16 %v2138
    %v2141 = vunpack.i.h.bf16 %v2138
    %v2142 = vmax.f32 %v2140, %v2141
    %v2143 = vrot.slane %v2142, 4
    %v2144 = vmax.f32 %v2142, %v2143
    %v2145 = vrot.slane %v2144, 2
    %v2146 = vmax.f32 %v2144, %v2145
    %v2147 = vrot.slane %v2146, 1
    %v2148 = vmax.f32 %v2146, %v2147
    %v2149 = vpack.i.bf16 %v2148, %v2148
    %v2151 = vsel %vm1797, %v1599, 4286644096
    %v2153 = vunpack.i.l.bf16 %v2151
    %v2154 = vunpack.i.h.bf16 %v2151
    %v2155 = vmax.f32 %v2153, %v2154
    %v2156 = vrot.slane %v2155, 4
    %v2157 = vmax.f32 %v2155, %v2156
    %v2158 = vrot.slane %v2157, 2
    %v2159 = vmax.f32 %v2157, %v2158
    %v2160 = vrot.slane %v2159, 1
    %v2161 = vmax.f32 %v2159, %v2160
    %v2162 = vpack.i.bf16 %v2161, %v2161
    %v2164 = vsel %vm1797, %v1582, 4286644096
    %v2166 = vunpack.i.l.bf16 %v2164
    %v2167 = vunpack.i.h.bf16 %v2164
    %v2168 = vmax.f32 %v2166, %v2167
    %v2169 = vrot.slane %v2168, 4
    %v2170 = vmax.f32 %v2168, %v2169
    %v2171 = vrot.slane %v2170, 2
    %v2172 = vmax.f32 %v2170, %v2171
    %v2173 = vrot.slane %v2172, 1
    %v2174 = vmax.f32 %v2172, %v2173
    %v2175 = vpack.i.bf16 %v2174, %v2174
    %v2177 = vsel %vm1797, %v1596, 4286644096
    %v2179 = vunpack.i.l.bf16 %v2177
    %v2180 = vunpack.i.h.bf16 %v2177
    %v2181 = vmax.f32 %v2179, %v2180
    %v2182 = vrot.slane %v2181, 4
    %v2183 = vmax.f32 %v2181, %v2182
    %v2184 = vrot.slane %v2183, 2
    %v2185 = vmax.f32 %v2183, %v2184
    %v2186 = vrot.slane %v2185, 1
    %v2187 = vmax.f32 %v2185, %v2186
    %v2188 = vpack.i.bf16 %v2187, %v2187
    %v2190 = vsel %vm1797, %v1598, 4286644096
    %v2192 = vunpack.i.l.bf16 %v2190
    %v2193 = vunpack.i.h.bf16 %v2190
    %v2194 = vmax.f32 %v2192, %v2193
    %v2195 = vrot.slane %v2194, 4
    %v2196 = vmax.f32 %v2194, %v2195
    %v2197 = vrot.slane %v2196, 2
    %v2198 = vmax.f32 %v2196, %v2197
    %v2199 = vrot.slane %v2198, 1
    %v2200 = vmax.f32 %v2198, %v2199
    %v2201 = vpack.i.bf16 %v2200, %v2200
    %v2203 = vsel %vm1797, %v1600, 4286644096
    %v2205 = vunpack.i.l.bf16 %v2203
    %v2206 = vunpack.i.h.bf16 %v2203
    %v2207 = vmax.f32 %v2205, %v2206
    %v2208 = vrot.slane %v2207, 4
    %v2209 = vmax.f32 %v2207, %v2208
    %v2210 = vrot.slane %v2209, 2
    %v2211 = vmax.f32 %v2209, %v2210
    %v2212 = vrot.slane %v2211, 1
    %v2213 = vmax.f32 %v2211, %v2212
    %v2214 = vpack.i.bf16 %v2213, %v2213
    %v2216 = vsel %vm1797, %v1624, 4286644096
    %v2218 = vunpack.i.l.bf16 %v2216
    %v2219 = vunpack.i.h.bf16 %v2216
    %v2220 = vmax.f32 %v2218, %v2219
    %v2221 = vrot.slane %v2220, 4
    %v2222 = vmax.f32 %v2220, %v2221
    %v2223 = vrot.slane %v2222, 2
    %v2224 = vmax.f32 %v2222, %v2223
    %v2225 = vrot.slane %v2224, 1
    %v2226 = vmax.f32 %v2224, %v2225
    %v2227 = vpack.i.bf16 %v2226, %v2226
    %v2229 = vsel %vm1797, %v1638, 4286644096
    %v2231 = vunpack.i.l.bf16 %v2229
    %v2232 = vunpack.i.h.bf16 %v2229
    %v2233 = vmax.f32 %v2231, %v2232
    %v2234 = vrot.slane %v2233, 4
    %v2235 = vmax.f32 %v2233, %v2234
    %v2236 = vrot.slane %v2235, 2
    %v2237 = vmax.f32 %v2235, %v2236
    %v2238 = vrot.slane %v2237, 1
    %v2239 = vmax.f32 %v2237, %v2238
    %v2240 = vpack.i.bf16 %v2239, %v2239
    %v2242 = vsel %vm1797, %v1646, 4286644096
    %v2244 = vunpack.i.l.bf16 %v2242
    %v2245 = vunpack.i.h.bf16 %v2242
    %v2246 = vmax.f32 %v2244, %v2245
    %v2247 = vrot.slane %v2246, 4
    %v2248 = vmax.f32 %v2246, %v2247
    %v2249 = vrot.slane %v2248, 2
    %v2250 = vmax.f32 %v2248, %v2249
    %v2251 = vrot.slane %v2250, 1
    %v2252 = vmax.f32 %v2250, %v2251
    %v2253 = vpack.i.bf16 %v2252, %v2252
    %v2255 = vsel %vm1797, %v1648, 4286644096
    %v2257 = vunpack.i.l.bf16 %v2255
    %v2258 = vunpack.i.h.bf16 %v2255
    %v2259 = vmax.f32 %v2257, %v2258
    %v2260 = vrot.slane %v2259, 4
    %v2261 = vmax.f32 %v2259, %v2260
    %v2262 = vrot.slane %v2261, 2
    %v2263 = vmax.f32 %v2261, %v2262
    %v2264 = vrot.slane %v2263, 1
    %v2265 = vmax.f32 %v2263, %v2264
    %v2266 = vpack.i.bf16 %v2265, %v2265
    %v2268 = vsel %vm1797, %v1631, 4286644096
    %v2270 = vunpack.i.l.bf16 %v2268
    %v2271 = vunpack.i.h.bf16 %v2268
    %v2272 = vmax.f32 %v2270, %v2271
    %v2273 = vrot.slane %v2272, 4
    %v2274 = vmax.f32 %v2272, %v2273
    %v2275 = vrot.slane %v2274, 2
    %v2276 = vmax.f32 %v2274, %v2275
    %v2277 = vrot.slane %v2276, 1
    %v2278 = vmax.f32 %v2276, %v2277
    %v2279 = vpack.i.bf16 %v2278, %v2278
    %v2281 = vsel %vm1797, %v1645, 4286644096
    %v2283 = vunpack.i.l.bf16 %v2281
    %v2284 = vunpack.i.h.bf16 %v2281
    %v2285 = vmax.f32 %v2283, %v2284
    %v2286 = vrot.slane %v2285, 4
    %v2287 = vmax.f32 %v2285, %v2286
    %v2288 = vrot.slane %v2287, 2
    %v2289 = vmax.f32 %v2287, %v2288
    %v2290 = vrot.slane %v2289, 1
    %v2291 = vmax.f32 %v2289, %v2290
    %v2292 = vpack.i.bf16 %v2291, %v2291
    %v2294 = vsel %vm1797, %v1647, 4286644096
    %v2296 = vunpack.i.l.bf16 %v2294
    %v2297 = vunpack.i.h.bf16 %v2294
    %v2298 = vmax.f32 %v2296, %v2297
    %v2299 = vrot.slane %v2298, 4
    %v2300 = vmax.f32 %v2298, %v2299
    %v2301 = vrot.slane %v2300, 2
    %v2302 = vmax.f32 %v2300, %v2301
    %v2303 = vrot.slane %v2302, 1
    %v2304 = vmax.f32 %v2302, %v2303
    %v2305 = vpack.i.bf16 %v2304, %v2304
    %v2307 = vsel %vm1797, %v1649, 4286644096
    %v2309 = vunpack.i.l.bf16 %v2307
    %v2310 = vunpack.i.h.bf16 %v2307
    %v2311 = vmax.f32 %v2309, %v2310
    %v2312 = vrot.slane %v2311, 4
    %v2313 = vmax.f32 %v2311, %v2312
    %v2314 = vrot.slane %v2313, 2
    %v2315 = vmax.f32 %v2313, %v2314
    %v2316 = vrot.slane %v2315, 1
    %v2317 = vmax.f32 %v2315, %v2316
    %v2318 = vpack.i.bf16 %v2317, %v2317
    %v2320 = vsel %vm1797, %v1673, 4286644096
    %v2322 = vunpack.i.l.bf16 %v2320
    %v2323 = vunpack.i.h.bf16 %v2320
    %v2324 = vmax.f32 %v2322, %v2323
    %v2325 = vrot.slane %v2324, 4
    %v2326 = vmax.f32 %v2324, %v2325
    %v2327 = vrot.slane %v2326, 2
    %v2328 = vmax.f32 %v2326, %v2327
    %v2329 = vrot.slane %v2328, 1
    %v2330 = vmax.f32 %v2328, %v2329
    %v2331 = vpack.i.bf16 %v2330, %v2330
    %v2333 = vsel %vm1797, %v1687, 4286644096
    %v2335 = vunpack.i.l.bf16 %v2333
    %v2336 = vunpack.i.h.bf16 %v2333
    %v2337 = vmax.f32 %v2335, %v2336
    %v2338 = vrot.slane %v2337, 4
    %v2339 = vmax.f32 %v2337, %v2338
    %v2340 = vrot.slane %v2339, 2
    %v2341 = vmax.f32 %v2339, %v2340
    %v2342 = vrot.slane %v2341, 1
    %v2343 = vmax.f32 %v2341, %v2342
    %v2344 = vpack.i.bf16 %v2343, %v2343
    %v2346 = vsel %vm1797, %v1695, 4286644096
    %v2348 = vunpack.i.l.bf16 %v2346
    %v2349 = vunpack.i.h.bf16 %v2346
    %v2350 = vmax.f32 %v2348, %v2349
    %v2351 = vrot.slane %v2350, 4
    %v2352 = vmax.f32 %v2350, %v2351
    %v2353 = vrot.slane %v2352, 2
    %v2354 = vmax.f32 %v2352, %v2353
    %v2355 = vrot.slane %v2354, 1
    %v2356 = vmax.f32 %v2354, %v2355
    %v2357 = vpack.i.bf16 %v2356, %v2356
    %v2359 = vsel %vm1797, %v1697, 4286644096
    %v2361 = vunpack.i.l.bf16 %v2359
    %v2362 = vunpack.i.h.bf16 %v2359
    %v2363 = vmax.f32 %v2361, %v2362
    %v2364 = vrot.slane %v2363, 4
    %v2365 = vmax.f32 %v2363, %v2364
    %v2366 = vrot.slane %v2365, 2
    %v2367 = vmax.f32 %v2365, %v2366
    %v2368 = vrot.slane %v2367, 1
    %v2369 = vmax.f32 %v2367, %v2368
    %v2370 = vpack.i.bf16 %v2369, %v2369
    %v2372 = vsel %vm1797, %v1680, 4286644096
    %v2374 = vunpack.i.l.bf16 %v2372
    %v2375 = vunpack.i.h.bf16 %v2372
    %v2376 = vmax.f32 %v2374, %v2375
    %v2377 = vrot.slane %v2376, 4
    %v2378 = vmax.f32 %v2376, %v2377
    %v2379 = vrot.slane %v2378, 2
    %v2380 = vmax.f32 %v2378, %v2379
    %v2381 = vrot.slane %v2380, 1
    %v2382 = vmax.f32 %v2380, %v2381
    %v2383 = vpack.i.bf16 %v2382, %v2382
    %v2385 = vsel %vm1797, %v1694, 4286644096
    %v2387 = vunpack.i.l.bf16 %v2385
    %v2388 = vunpack.i.h.bf16 %v2385
    %v2389 = vmax.f32 %v2387, %v2388
    %v2390 = vrot.slane %v2389, 4
    %v2391 = vmax.f32 %v2389, %v2390
    %v2392 = vrot.slane %v2391, 2
    %v2393 = vmax.f32 %v2391, %v2392
    %v2394 = vrot.slane %v2393, 1
    %v2395 = vmax.f32 %v2393, %v2394
    %v2396 = vpack.i.bf16 %v2395, %v2395
    %v2398 = vsel %vm1797, %v1696, 4286644096
    %v2400 = vunpack.i.l.bf16 %v2398
    %v2401 = vunpack.i.h.bf16 %v2398
    %v2402 = vmax.f32 %v2400, %v2401
    %v2403 = vrot.slane %v2402, 4
    %v2404 = vmax.f32 %v2402, %v2403
    %v2405 = vrot.slane %v2404, 2
    %v2406 = vmax.f32 %v2404, %v2405
    %v2407 = vrot.slane %v2406, 1
    %v2408 = vmax.f32 %v2406, %v2407
    %v2409 = vpack.i.bf16 %v2408, %v2408
    %v2411 = vsel %vm1797, %v1698, 4286644096
    %v2413 = vunpack.i.l.bf16 %v2411
    %v2414 = vunpack.i.h.bf16 %v2411
    %v2415 = vmax.f32 %v2413, %v2414
    %v2416 = vrot.slane %v2415, 4
    %v2417 = vmax.f32 %v2415, %v2416
    %v2418 = vrot.slane %v2417, 2
    %v2419 = vmax.f32 %v2417, %v2418
    %v2420 = vrot.slane %v2419, 1
    %v2421 = vmax.f32 %v2419, %v2420
    %v2422 = vpack.i.bf16 %v2421, %v2421
    %v2424 = vsel %vm1797, %v1722, 4286644096
    %v2426 = vunpack.i.l.bf16 %v2424
    %v2427 = vunpack.i.h.bf16 %v2424
    %v2428 = vmax.f32 %v2426, %v2427
    %v2429 = vrot.slane %v2428, 4
    %v2430 = vmax.f32 %v2428, %v2429
    %v2431 = vrot.slane %v2430, 2
    %v2432 = vmax.f32 %v2430, %v2431
    %v2433 = vrot.slane %v2432, 1
    %v2434 = vmax.f32 %v2432, %v2433
    %v2435 = vpack.i.bf16 %v2434, %v2434
    %v2437 = vsel %vm1797, %v1736, 4286644096
    %v2439 = vunpack.i.l.bf16 %v2437
    %v2440 = vunpack.i.h.bf16 %v2437
    %v2441 = vmax.f32 %v2439, %v2440
    %v2442 = vrot.slane %v2441, 4
    %v2443 = vmax.f32 %v2441, %v2442
    %v2444 = vrot.slane %v2443, 2
    %v2445 = vmax.f32 %v2443, %v2444
    %v2446 = vrot.slane %v2445, 1
    %v2447 = vmax.f32 %v2445, %v2446
    %v2448 = vpack.i.bf16 %v2447, %v2447
    %v2450 = vsel %vm1797, %v1744, 4286644096
    %v2452 = vunpack.i.l.bf16 %v2450
    %v2453 = vunpack.i.h.bf16 %v2450
    %v2454 = vmax.f32 %v2452, %v2453
    %v2455 = vrot.slane %v2454, 4
    %v2456 = vmax.f32 %v2454, %v2455
    %v2457 = vrot.slane %v2456, 2
    %v2458 = vmax.f32 %v2456, %v2457
    %v2459 = vrot.slane %v2458, 1
    %v2460 = vmax.f32 %v2458, %v2459
    %v2461 = vpack.i.bf16 %v2460, %v2460
    %v2463 = vsel %vm1797, %v1746, 4286644096
    %v2465 = vunpack.i.l.bf16 %v2463
    %v2466 = vunpack.i.h.bf16 %v2463
    %v2467 = vmax.f32 %v2465, %v2466
    %v2468 = vrot.slane %v2467, 4
    %v2469 = vmax.f32 %v2467, %v2468
    %v2470 = vrot.slane %v2469, 2
    %v2471 = vmax.f32 %v2469, %v2470
    %v2472 = vrot.slane %v2471, 1
    %v2473 = vmax.f32 %v2471, %v2472
    %v2474 = vpack.i.bf16 %v2473, %v2473
    %v2476 = vsel %vm1797, %v1729, 4286644096
    %v2478 = vunpack.i.l.bf16 %v2476
    %v2479 = vunpack.i.h.bf16 %v2476
    %v2480 = vmax.f32 %v2478, %v2479
    %v2481 = vrot.slane %v2480, 4
    %v2482 = vmax.f32 %v2480, %v2481
    %v2483 = vrot.slane %v2482, 2
    %v2484 = vmax.f32 %v2482, %v2483
    %v2485 = vrot.slane %v2484, 1
    %v2486 = vmax.f32 %v2484, %v2485
    %v2487 = vpack.i.bf16 %v2486, %v2486
    %v2489 = vsel %vm1797, %v1743, 4286644096
    %v2491 = vunpack.i.l.bf16 %v2489
    %v2492 = vunpack.i.h.bf16 %v2489
    %v2493 = vmax.f32 %v2491, %v2492
    %v2494 = vrot.slane %v2493, 4
    %v2495 = vmax.f32 %v2493, %v2494
    %v2496 = vrot.slane %v2495, 2
    %v2497 = vmax.f32 %v2495, %v2496
    %v2498 = vrot.slane %v2497, 1
    %v2499 = vmax.f32 %v2497, %v2498
    %v2500 = vpack.i.bf16 %v2499, %v2499
    %v2502 = vsel %vm1797, %v1745, 4286644096
    %v2504 = vunpack.i.l.bf16 %v2502
    %v2505 = vunpack.i.h.bf16 %v2502
    %v2506 = vmax.f32 %v2504, %v2505
    %v2507 = vrot.slane %v2506, 4
    %v2508 = vmax.f32 %v2506, %v2507
    %v2509 = vrot.slane %v2508, 2
    %v2510 = vmax.f32 %v2508, %v2509
    %v2511 = vrot.slane %v2510, 1
    %v2512 = vmax.f32 %v2510, %v2511
    %v2513 = vpack.i.bf16 %v2512, %v2512
    %v2515 = vsel %vm1797, %v1747, 4286644096
    %v2517 = vunpack.i.l.bf16 %v2515
    %v2518 = vunpack.i.h.bf16 %v2515
    %v2519 = vmax.f32 %v2517, %v2518
    %v2520 = vrot.slane %v2519, 4
    %v2521 = vmax.f32 %v2519, %v2520
    %v2522 = vrot.slane %v2521, 2
    %v2523 = vmax.f32 %v2521, %v2522
    %v2524 = vrot.slane %v2523, 1
    %v2525 = vmax.f32 %v2523, %v2524
    %v2526 = vpack.i.bf16 %v2525, %v2525
    %v2528 = vsel %vm1797, %v1771, 4286644096
    %v2530 = vunpack.i.l.bf16 %v2528
    %v2531 = vunpack.i.h.bf16 %v2528
    %v2532 = vmax.f32 %v2530, %v2531
    %v2533 = vrot.slane %v2532, 4
    %v2534 = vmax.f32 %v2532, %v2533
    %v2535 = vrot.slane %v2534, 2
    %v2536 = vmax.f32 %v2534, %v2535
    %v2537 = vrot.slane %v2536, 1
    %v2538 = vmax.f32 %v2536, %v2537
    %v2539 = vpack.i.bf16 %v2538, %v2538
    %v2541 = vsel %vm1797, %v1785, 4286644096
    %v2543 = vunpack.i.l.bf16 %v2541
    %v2544 = vunpack.i.h.bf16 %v2541
    %v2545 = vmax.f32 %v2543, %v2544
    %v2546 = vrot.slane %v2545, 4
    %v2547 = vmax.f32 %v2545, %v2546
    %v2548 = vrot.slane %v2547, 2
    %v2549 = vmax.f32 %v2547, %v2548
    %v2550 = vrot.slane %v2549, 1
    %v2551 = vmax.f32 %v2549, %v2550
    %v2552 = vpack.i.bf16 %v2551, %v2551
    %v2554 = vsel %vm1797, %v1793, 4286644096
    %v2556 = vunpack.i.l.bf16 %v2554
    %v2557 = vunpack.i.h.bf16 %v2554
    %v2558 = vmax.f32 %v2556, %v2557
    %v2559 = vrot.slane %v2558, 4
    %v2560 = vmax.f32 %v2558, %v2559
    %v2561 = vrot.slane %v2560, 2
    %v2562 = vmax.f32 %v2560, %v2561
    %v2563 = vrot.slane %v2562, 1
    %v2564 = vmax.f32 %v2562, %v2563
    %v2565 = vpack.i.bf16 %v2564, %v2564
    %v2567 = vsel %vm1797, %v1795, 4286644096
    %v2569 = vunpack.i.l.bf16 %v2567
    %v2570 = vunpack.i.h.bf16 %v2567
    %v2571 = vmax.f32 %v2569, %v2570
    %v2572 = vrot.slane %v2571, 4
    %v2573 = vmax.f32 %v2571, %v2572
    %v2574 = vrot.slane %v2573, 2
    %v2575 = vmax.f32 %v2573, %v2574
    %v2576 = vrot.slane %v2575, 1
    %v2577 = vmax.f32 %v2575, %v2576
    %v2578 = vpack.i.bf16 %v2577, %v2577
    %v2580 = vsel %vm1797, %v1778, 4286644096
    %v2582 = vunpack.i.l.bf16 %v2580
    %v2583 = vunpack.i.h.bf16 %v2580
    %v2584 = vmax.f32 %v2582, %v2583
    %v2585 = vrot.slane %v2584, 4
    %v2586 = vmax.f32 %v2584, %v2585
    %v2587 = vrot.slane %v2586, 2
    %v2588 = vmax.f32 %v2586, %v2587
    %v2589 = vrot.slane %v2588, 1
    %v2590 = vmax.f32 %v2588, %v2589
    %v2591 = vpack.i.bf16 %v2590, %v2590
    %v2593 = vsel %vm1797, %v1792, 4286644096
    %v2595 = vunpack.i.l.bf16 %v2593
    %v2596 = vunpack.i.h.bf16 %v2593
    %v2597 = vmax.f32 %v2595, %v2596
    %v2598 = vrot.slane %v2597, 4
    %v2599 = vmax.f32 %v2597, %v2598
    %v2600 = vrot.slane %v2599, 2
    %v2601 = vmax.f32 %v2599, %v2600
    %v2602 = vrot.slane %v2601, 1
    %v2603 = vmax.f32 %v2601, %v2602
    %v2604 = vpack.i.bf16 %v2603, %v2603
    %v2606 = vsel %vm1797, %v1794, 4286644096
    %v2608 = vunpack.i.l.bf16 %v2606
    %v2609 = vunpack.i.h.bf16 %v2606
    %v2610 = vmax.f32 %v2608, %v2609
    %v2611 = vrot.slane %v2610, 4
    %v2612 = vmax.f32 %v2610, %v2611
    %v2613 = vrot.slane %v2612, 2
    %v2614 = vmax.f32 %v2612, %v2613
    %v2615 = vrot.slane %v2614, 1
    %v2616 = vmax.f32 %v2614, %v2615
    %v2617 = vpack.i.bf16 %v2616, %v2616
    %v2619 = vsel %vm1797, %v1796, 4286644096
    %v2621 = vunpack.i.l.bf16 %v2619
    %v2622 = vunpack.i.h.bf16 %v2619
    %v2623 = vmax.f32 %v2621, %v2622
    %v2624 = vrot.slane %v2623, 4
    %v2625 = vmax.f32 %v2623, %v2624
    %v2626 = vrot.slane %v2625, 2
    %v2627 = vmax.f32 %v2625, %v2626
    %v2628 = vrot.slane %v2627, 1
    %v2629 = vmax.f32 %v2627, %v2628
    %v2630 = vpack.i.bf16 %v2629, %v2629
    %vm2631 = vcmask 261120
    %v2633 = vsel %vm2631, %v1811, 4286644096
    %v2636 = vsel %vm2631, %v1863, 4286644096
    %v2638 = vmax.bf16 %v2633, %v2636
    %v2640 = vsel %vm2631, %v1824, 4286644096
    %v2643 = vsel %vm2631, %v1876, 4286644096
    %v2645 = vmax.bf16 %v2640, %v2643
    %v2647 = vsel %vm2631, %v1837, 4286644096
    %v2650 = vsel %vm2631, %v1889, 4286644096
    %v2652 = vmax.bf16 %v2647, %v2650
    %v2654 = vsel %vm2631, %v1850, 4286644096
    %v2657 = vsel %vm2631, %v1902, 4286644096
    %v2659 = vmax.bf16 %v2654, %v2657
    %v2661 = vsel %vm2631, %v1915, 4286644096
    %v2664 = vsel %vm2631, %v1967, 4286644096
    %v2666 = vmax.bf16 %v2661, %v2664
    %v2668 = vsel %vm2631, %v1928, 4286644096
    %v2671 = vsel %vm2631, %v1980, 4286644096
    %v2673 = vmax.bf16 %v2668, %v2671
    %v2675 = vsel %vm2631, %v1941, 4286644096
    %v2678 = vsel %vm2631, %v1993, 4286644096
    %v2680 = vmax.bf16 %v2675, %v2678
    %v2682 = vsel %vm2631, %v1954, 4286644096
    %v2685 = vsel %vm2631, %v2006, 4286644096
    %v2687 = vmax.bf16 %v2682, %v2685
    %v2689 = vsel %vm2631, %v2019, 4286644096
    %v2692 = vsel %vm2631, %v2071, 4286644096
    %v2694 = vmax.bf16 %v2689, %v2692
    %v2696 = vsel %vm2631, %v2032, 4286644096
    %v2699 = vsel %vm2631, %v2084, 4286644096
    %v2701 = vmax.bf16 %v2696, %v2699
    %v2703 = vsel %vm2631, %v2045, 4286644096
    %v2706 = vsel %vm2631, %v2097, 4286644096
    %v2708 = vmax.bf16 %v2703, %v2706
    %v2710 = vsel %vm2631, %v2058, 4286644096
    %v2713 = vsel %vm2631, %v2110, 4286644096
    %v2715 = vmax.bf16 %v2710, %v2713
    %v2717 = vsel %vm2631, %v2123, 4286644096
    %v2720 = vsel %vm2631, %v2175, 4286644096
    %v2722 = vmax.bf16 %v2717, %v2720
    %v2724 = vsel %vm2631, %v2136, 4286644096
    %v2727 = vsel %vm2631, %v2188, 4286644096
    %v2729 = vmax.bf16 %v2724, %v2727
    %v2731 = vsel %vm2631, %v2149, 4286644096
    %v2734 = vsel %vm2631, %v2201, 4286644096
    %v2736 = vmax.bf16 %v2731, %v2734
    %v2738 = vsel %vm2631, %v2162, 4286644096
    %v2741 = vsel %vm2631, %v2214, 4286644096
    %v2743 = vmax.bf16 %v2738, %v2741
    %v2745 = vsel %vm2631, %v2227, 4286644096
    %v2748 = vsel %vm2631, %v2279, 4286644096
    %v2750 = vmax.bf16 %v2745, %v2748
    %v2752 = vsel %vm2631, %v2240, 4286644096
    %v2755 = vsel %vm2631, %v2292, 4286644096
    %v2757 = vmax.bf16 %v2752, %v2755
    %v2759 = vsel %vm2631, %v2253, 4286644096
    %v2762 = vsel %vm2631, %v2305, 4286644096
    %v2764 = vmax.bf16 %v2759, %v2762
    %v2766 = vsel %vm2631, %v2266, 4286644096
    %v2769 = vsel %vm2631, %v2318, 4286644096
    %v2771 = vmax.bf16 %v2766, %v2769
    %v2773 = vsel %vm2631, %v2331, 4286644096
    %v2776 = vsel %vm2631, %v2383, 4286644096
    %v2778 = vmax.bf16 %v2773, %v2776
    %v2780 = vsel %vm2631, %v2344, 4286644096
    %v2783 = vsel %vm2631, %v2396, 4286644096
    %v2785 = vmax.bf16 %v2780, %v2783
    %v2787 = vsel %vm2631, %v2357, 4286644096
    %v2790 = vsel %vm2631, %v2409, 4286644096
    %v2792 = vmax.bf16 %v2787, %v2790
    %v2794 = vsel %vm2631, %v2370, 4286644096
    %v2797 = vsel %vm2631, %v2422, 4286644096
    %v2799 = vmax.bf16 %v2794, %v2797
    %v2801 = vsel %vm2631, %v2435, 4286644096
    %v2804 = vsel %vm2631, %v2487, 4286644096
    %v2806 = vmax.bf16 %v2801, %v2804
    %v2808 = vsel %vm2631, %v2448, 4286644096
    %v2811 = vsel %vm2631, %v2500, 4286644096
    %v2813 = vmax.bf16 %v2808, %v2811
    %v2815 = vsel %vm2631, %v2461, 4286644096
    %v2818 = vsel %vm2631, %v2513, 4286644096
    %v2820 = vmax.bf16 %v2815, %v2818
    %v2822 = vsel %vm2631, %v2474, 4286644096
    %v2825 = vsel %vm2631, %v2526, 4286644096
    %v2827 = vmax.bf16 %v2822, %v2825
    %v2829 = vsel %vm2631, %v2539, 4286644096
    %v2832 = vsel %vm2631, %v2591, 4286644096
    %v2834 = vmax.bf16 %v2829, %v2832
    %v2836 = vsel %vm2631, %v2552, 4286644096
    %v2839 = vsel %vm2631, %v2604, 4286644096
    %v2841 = vmax.bf16 %v2836, %v2839
    %v2843 = vsel %vm2631, %v2565, 4286644096
    %v2846 = vsel %vm2631, %v2617, 4286644096
    %v2848 = vmax.bf16 %v2843, %v2846
    %v2850 = vsel %vm2631, %v2578, 4286644096
    %v2853 = vsel %vm2631, %v2630, 4286644096
    %v2855 = vmax.bf16 %v2850, %v2853
    %v2856 = vpack.c.bf16 %v174, %v171
    %v2857 = vpack.c.bf16 %v182, %v179
    %v2858 = vpack.c.bf16 %v190, %v187
    %v2859 = vpack.c.bf16 %v198, %v195
    %v2860 = vpack.c.bf16 %v206, %v203
    %v2861 = vpack.c.bf16 %v214, %v211
    %v2862 = vpack.c.bf16 %v222, %v219
    %v2863 = vpack.c.bf16 %v230, %v227
    %v2864 = vpack.c.bf16 %v1295, %v1295
    %v2865 = vpack.c.bf16 %v1298, %v1298
    %v2866 = vpack.c.bf16 %v1301, %v1301
    %v2867 = vpack.c.bf16 %v1304, %v1304
    %v2868 = vpack.c.bf16 %v1307, %v1307
    %v2869 = vpack.c.bf16 %v1310, %v1310
    %v2870 = vpack.c.bf16 %v1313, %v1313
    %v2871 = vpack.c.bf16 %v1316, %v1316
    %v2872 = vpack.c.bf16 %v1319, %v1319
    %v2873 = vpack.c.bf16 %v1322, %v1322
    %v2874 = vpack.c.bf16 %v1325, %v1325
    %v2875 = vpack.c.bf16 %v1328, %v1328
    %v2876 = vpack.c.bf16 %v1331, %v1331
    %v2877 = vpack.c.bf16 %v1334, %v1334
    %v2878 = vpack.c.bf16 %v1337, %v1337
    %v2879 = vpack.c.bf16 %v1340, %v1340
    %v2880 = vpack.c.bf16 %v1343, %v1343
    %v2881 = vpack.c.bf16 %v1346, %v1346
    %v2882 = vpack.c.bf16 %v1349, %v1349
    %v2883 = vpack.c.bf16 %v1352, %v1352
    %v2884 = vpack.c.bf16 %v1355, %v1355
    %v2885 = vpack.c.bf16 %v1358, %v1358
    %v2886 = vpack.c.bf16 %v1361, %v1361
    %v2887 = vpack.c.bf16 %v1364, %v1364
    %v2888 = vpack.c.bf16 %v1367, %v1367
    %v2889 = vpack.c.bf16 %v1370, %v1370
    %v2890 = vpack.c.bf16 %v1373, %v1373
    %v2891 = vpack.c.bf16 %v1376, %v1376
    %v2892 = vpack.c.bf16 %v1379, %v1379
    %v2893 = vpack.c.bf16 %v1382, %v1382
    %v2894 = vpack.c.bf16 %v1385, %v1385
    %v2895 = vpack.c.bf16 %v1388, %v1388
    %v2912 = vunpack.c.l.b16 %v2864
    %v2913 = vunpack.c.l.b16 %v2865
    %v2914 = vunpack.c.l.b16 %v2866
    %v2915 = vunpack.c.l.b16 %v2867
    %v2916 = vunpack.c.l.b16 %v2868
    %v2917 = vunpack.c.l.b16 %v2869
    %v2918 = vunpack.c.l.b16 %v2870
    %v2919 = vunpack.c.l.b16 %v2871
    %v2920 = vunpack.c.l.b16 %v2872
    %v2921 = vunpack.c.l.b16 %v2873
    %v2922 = vunpack.c.l.b16 %v2874
    %v2923 = vunpack.c.l.b16 %v2875
    %v2924 = vunpack.c.l.b16 %v2876
    %v2925 = vunpack.c.l.b16 %v2877
    %v2926 = vunpack.c.l.b16 %v2878
    %v2927 = vunpack.c.l.b16 %v2879
    %vm2928 = vcmask 1041409
    %v2929 = vsel %vm2928, %v2913, %v2912
    %vm2930 = vcmask 1042434
    %v2931 = vsel %vm2930, %v2914, %v2929
    %vm2932 = vcmask 1043459
    %v2933 = vsel %vm2932, %v2915, %v2931
    %vm2934 = vcmask 1044484
    %v2935 = vsel %vm2934, %v2916, %v2933
    %vm2936 = vcmask 1045509
    %v2937 = vsel %vm2936, %v2917, %v2935
    %vm2938 = vcmask 1046534
    %v2939 = vsel %vm2938, %v2918, %v2937
    %vm2940 = vcmask 1047559
    %v2941 = vsel %vm2940, %v2919, %v2939
    %v2942 = vsel %vm2928, %v2921, %v2920
    %v2943 = vsel %vm2930, %v2922, %v2942
    %v2944 = vsel %vm2932, %v2923, %v2943
    %v2945 = vsel %vm2934, %v2924, %v2944
    %v2946 = vsel %vm2936, %v2925, %v2945
    %v2947 = vsel %vm2938, %v2926, %v2946
    %v2948 = vsel %vm2940, %v2927, %v2947
    %v2949 = vpack.c.b16 %v2948, %v2941
    %v2951 = vsel %vm1292, %v2856, 0
    %v2954 = vsel %vm1292, %v2857, 0
    %v2957 = vsel %vm1292, %v2858, 0
    %v2960 = vsel %vm1292, %v2859, 0
    %v2963 = vsel %vm1292, %v2949, 0
    %2965 = vmatprep.subr.bf16.mxu0 0
    %2966 = vmatpush1.bf16.xpose.msra.mxu0 %v2963
    %2967 = vmatprep.subr.bf16.mxu0 0
    %2968 = vmatpush1.bf16.xpose.msra.mxu0 0
    %2969 = vmatprep.subr.bf16.mxu0 0
    %2970 = vmatpush1.bf16.xpose.msra.mxu0 0
    %2971 = vmatprep.subr.bf16.mxu0 0
    %2972 = vmatpush1.bf16.xpose.msra.mxu0 0
    %2973 = vmatprep.subr.bf16.mxu0 0
    %2974 = vmatpush1.bf16.xpose.msra.mxu0 0
    %2975 = vmatprep.subr.bf16.mxu0 0
    %2976 = vmatpush1.bf16.xpose.msra.mxu0 0
    %2977 = vmatprep.subr.bf16.mxu0 0
    %2978 = vmatpush1.bf16.xpose.msra.mxu0 0
    %2979 = vmatprep.subr.bf16.mxu0 0
    %2980 = vmatpush1.bf16.xpose.msra.mxu0 0
    %2981 = vmatprep.subr.bf16.mxu0 0
    %2982 = vmatpush1.bf16.xpose.msra.mxu0 0
    %2983 = vmatprep.subr.bf16.mxu0 0
    %2984 = vmatpush1.bf16.xpose.msra.mxu0 0
    %2985 = vmatprep.subr.bf16.mxu0 0
    %2986 = vmatpush1.bf16.xpose.msra.mxu0 0
    %2987 = vmatprep.subr.bf16.mxu0 0
    %2988 = vmatpush1.bf16.xpose.msra.mxu0 0
    %2989 = vmatprep.subr.bf16.mxu0 0
    %2990 = vmatpush1.bf16.xpose.msra.mxu0 0
    %2991 = vmatprep.subr.bf16.mxu0 0
    %2992 = vmatpush1.bf16.xpose.msra.mxu0 0
    %2993 = vmatprep.subr.bf16.mxu0 0
    %2994 = vmatpush1.bf16.xpose.msra.mxu0 0
    %2995 = vmatprep.subr.bf16.mxu0 0
    %2996 = vmatpush1.bf16.xpose.msra.mxu0 0
    %2997 = vmatprep.mubr.bf16.mxu0 0
    %2998 = vmatmul.mubr.bf16.gmra.mrb[0].mxu0 %v2951
    %v2999 = vpop.f32.mrb[0].mxu0
    %v3000 = vadd.f32 0.0, %v2999
    %v3001 = vpop.f32.mrb[0].mxu0
    %v3002 = vpop.f32.mrb[0].mxu0
    %v3003 = vadd.f32 0.0, %v3002
    %v3004 = vpop.f32.mrb[0].mxu0
    %3005 = vmatprep.mubr.bf16.mxu0 0
    %3006 = vmatmul.mubr.bf16.gmra.mrb[0].mxu0 %v2954
    %v3007 = vpop.f32.mrb[0].mxu0
    %v3008 = vadd.f32 0.0, %v3007
    %v3009 = vpop.f32.mrb[0].mxu0
    %v3010 = vpop.f32.mrb[0].mxu0
    %v3011 = vadd.f32 0.0, %v3010
    %v3012 = vpop.f32.mrb[0].mxu0
    %3013 = vmatprep.mubr.bf16.mxu0 0
    %3014 = vmatmul.mubr.bf16.gmra.mrb[0].mxu0 %v2957
    %v3015 = vpop.f32.mrb[0].mxu0
    %v3016 = vadd.f32 0.0, %v3015
    %v3017 = vpop.f32.mrb[0].mxu0
    %v3018 = vpop.f32.mrb[0].mxu0
    %v3019 = vadd.f32 0.0, %v3018
    %v3020 = vpop.f32.mrb[0].mxu0
    %3021 = vmatprep.mubr.bf16.mxu0 0
    %3022 = vmatmul.mubr.bf16.gmra.mrb[0].mxu0 %v2960
    %v3023 = vpop.f32.mrb[0].mxu0
    %v3024 = vadd.f32 0.0, %v3023
    %v3025 = vpop.f32.mrb[0].mxu0
    %v3026 = vpop.f32.mrb[0].mxu0
    %v3027 = vadd.f32 0.0, %v3026
    %v3028 = vpop.f32.mrb[0].mxu0
    %3029 = vdwg.mxu0
    %v3046 = vunpack.c.l.b16 %v2880
    %v3047 = vunpack.c.l.b16 %v2881
    %v3048 = vunpack.c.l.b16 %v2882
    %v3049 = vunpack.c.l.b16 %v2883
    %v3050 = vunpack.c.l.b16 %v2884
    %v3051 = vunpack.c.l.b16 %v2885
    %v3052 = vunpack.c.l.b16 %v2886
    %v3053 = vunpack.c.l.b16 %v2887
    %v3054 = vunpack.c.l.b16 %v2888
    %v3055 = vunpack.c.l.b16 %v2889
    %v3056 = vunpack.c.l.b16 %v2890
    %v3057 = vunpack.c.l.b16 %v2891
    %v3058 = vunpack.c.l.b16 %v2892
    %v3059 = vunpack.c.l.b16 %v2893
    %v3060 = vunpack.c.l.b16 %v2894
    %v3061 = vunpack.c.l.b16 %v2895
    %v3062 = vsel %vm2928, %v3047, %v3046
    %v3063 = vsel %vm2930, %v3048, %v3062
    %v3064 = vsel %vm2932, %v3049, %v3063
    %v3065 = vsel %vm2934, %v3050, %v3064
    %v3066 = vsel %vm2936, %v3051, %v3065
    %v3067 = vsel %vm2938, %v3052, %v3066
    %v3068 = vsel %vm2940, %v3053, %v3067
    %v3069 = vsel %vm2928, %v3055, %v3054
    %v3070 = vsel %vm2930, %v3056, %v3069
    %v3071 = vsel %vm2932, %v3057, %v3070
    %v3072 = vsel %vm2934, %v3058, %v3071
    %v3073 = vsel %vm2936, %v3059, %v3072
    %v3074 = vsel %vm2938, %v3060, %v3073
    %v3075 = vsel %vm2940, %v3061, %v3074
    %v3076 = vpack.c.b16 %v3075, %v3068
    %v3078 = vsel %vm1292, %v2860, 0
    %v3081 = vsel %vm1292, %v2861, 0
    %v3084 = vsel %vm1292, %v2862, 0
    %v3087 = vsel %vm1292, %v2863, 0
    %v3090 = vsel %vm1292, %v3076, 0
    %3092 = vmatprep.subr.bf16.mxu0 0
    %3093 = vmatpush1.bf16.xpose.msra.mxu0 %v3090
    %3094 = vmatprep.subr.bf16.mxu0 0
    %3095 = vmatpush1.bf16.xpose.msra.mxu0 0
    %3096 = vmatprep.subr.bf16.mxu0 0
    %3097 = vmatpush1.bf16.xpose.msra.mxu0 0
    %3098 = vmatprep.subr.bf16.mxu0 0
    %3099 = vmatpush1.bf16.xpose.msra.mxu0 0
    %3100 = vmatprep.subr.bf16.mxu0 0
    %3101 = vmatpush1.bf16.xpose.msra.mxu0 0
    %3102 = vmatprep.subr.bf16.mxu0 0
    %3103 = vmatpush1.bf16.xpose.msra.mxu0 0
    %3104 = vmatprep.subr.bf16.mxu0 0
    %3105 = vmatpush1.bf16.xpose.msra.mxu0 0
    %3106 = vmatprep.subr.bf16.mxu0 0
    %3107 = vmatpush1.bf16.xpose.msra.mxu0 0
    %3108 = vmatprep.subr.bf16.mxu0 0
    %3109 = vmatpush1.bf16.xpose.msra.mxu0 0
    %3110 = vmatprep.subr.bf16.mxu0 0
    %3111 = vmatpush1.bf16.xpose.msra.mxu0 0
    %3112 = vmatprep.subr.bf16.mxu0 0
    %3113 = vmatpush1.bf16.xpose.msra.mxu0 0
    %3114 = vmatprep.subr.bf16.mxu0 0
    %3115 = vmatpush1.bf16.xpose.msra.mxu0 0
    %3116 = vmatprep.subr.bf16.mxu0 0
    %3117 = vmatpush1.bf16.xpose.msra.mxu0 0
    %3118 = vmatprep.subr.bf16.mxu0 0
    %3119 = vmatpush1.bf16.xpose.msra.mxu0 0
    %3120 = vmatprep.subr.bf16.mxu0 0
    %3121 = vmatpush1.bf16.xpose.msra.mxu0 0
    %3122 = vmatprep.subr.bf16.mxu0 0
    %3123 = vmatpush1.bf16.xpose.msra.mxu0 0
    %3124 = vmatprep.mubr.bf16.mxu0 0
    %3125 = vmatmul.mubr.bf16.gmra.mrb[0].mxu0 %v3078
    %v3126 = vpop.f32.mrb[0].mxu0
    %v3127 = vadd.f32 0.0, %v3126
    %v3128 = vpop.f32.mrb[0].mxu0
    %v3129 = vpop.f32.mrb[0].mxu0
    %v3130 = vadd.f32 0.0, %v3129
    %v3131 = vpop.f32.mrb[0].mxu0
    %3132 = vmatprep.mubr.bf16.mxu0 0
    %3133 = vmatmul.mubr.bf16.gmra.mrb[0].mxu0 %v3081
    %v3134 = vpop.f32.mrb[0].mxu0
    %v3135 = vadd.f32 0.0, %v3134
    %v3136 = vpop.f32.mrb[0].mxu0
    %v3137 = vpop.f32.mrb[0].mxu0
    %v3138 = vadd.f32 0.0, %v3137
    %v3139 = vpop.f32.mrb[0].mxu0
    %3140 = vmatprep.mubr.bf16.mxu0 0
    %3141 = vmatmul.mubr.bf16.gmra.mrb[0].mxu0 %v3084
    %v3142 = vpop.f32.mrb[0].mxu0
    %v3143 = vadd.f32 0.0, %v3142
    %v3144 = vpop.f32.mrb[0].mxu0
    %v3145 = vpop.f32.mrb[0].mxu0
    %v3146 = vadd.f32 0.0, %v3145
    %v3147 = vpop.f32.mrb[0].mxu0
    %3148 = vmatprep.mubr.bf16.mxu0 0
    %3149 = vmatmul.mubr.bf16.gmra.mrb[0].mxu0 %v3087
    %v3150 = vpop.f32.mrb[0].mxu0
    %v3151 = vadd.f32 0.0, %v3150
    %v3152 = vpop.f32.mrb[0].mxu0
    %v3153 = vpop.f32.mrb[0].mxu0
    %v3154 = vadd.f32 0.0, %v3153
    %v3155 = vpop.f32.mrb[0].mxu0
    %3156 = vdwg.mxu0
    %vm3157 = vcmask 130048
    %v3158 = vsel %vm3157, %v3000, -inf
    %3159 = vmax.xlane.f32.xlu0 %v3158
    %v3160 = vpop.xlane.xlu0 %3159
    %v3161 = vsel %vm3157, %v3003, -inf
    %3162 = vmax.xlane.f32.xlu0 %v3161
    %v3163 = vpop.xlane.xlu0 %3162
    %v3164 = vsel %vm3157, %v3008, -inf
    %3165 = vmax.xlane.f32.xlu0 %v3164
    %v3166 = vpop.xlane.xlu0 %3165
    %v3167 = vsel %vm3157, %v3011, -inf
    %3168 = vmax.xlane.f32.xlu0 %v3167
    %v3169 = vpop.xlane.xlu0 %3168
    %v3170 = vsel %vm3157, %v3016, -inf
    %3171 = vmax.xlane.f32.xlu0 %v3170
    %v3172 = vpop.xlane.xlu0 %3171
    %v3173 = vsel %vm3157, %v3019, -inf
    %3174 = vmax.xlane.f32.xlu0 %v3173
    %v3175 = vpop.xlane.xlu0 %3174
    %v3176 = vsel %vm3157, %v3024, -inf
    %3177 = vmax.xlane.f32.xlu0 %v3176
    %v3178 = vpop.xlane.xlu0 %3177
    %v3179 = vsel %vm3157, %v3027, -inf
    %3180 = vmax.xlane.f32.xlu0 %v3179
    %v3181 = vpop.xlane.xlu0 %3180
    %v3182 = vsel %vm3157, %v3127, -inf
    %3183 = vmax.xlane.f32.xlu0 %v3182
    %v3184 = vpop.xlane.xlu0 %3183
    %v3185 = vsel %vm3157, %v3130, -inf
    %3186 = vmax.xlane.f32.xlu0 %v3185
    %v3187 = vpop.xlane.xlu0 %3186
    %v3188 = vsel %vm3157, %v3135, -inf
    %3189 = vmax.xlane.f32.xlu0 %v3188
    %v3190 = vpop.xlane.xlu0 %3189
    %v3191 = vsel %vm3157, %v3138, -inf
    %3192 = vmax.xlane.f32.xlu0 %v3191
    %v3193 = vpop.xlane.xlu0 %3192
    %v3194 = vsel %vm3157, %v3143, -inf
    %3195 = vmax.xlane.f32.xlu0 %v3194
    %v3196 = vpop.xlane.xlu0 %3195
    %v3197 = vsel %vm3157, %v3146, -inf
    %3198 = vmax.xlane.f32.xlu0 %v3197
    %v3199 = vpop.xlane.xlu0 %3198
    %v3200 = vsel %vm3157, %v3151, -inf
    %3201 = vmax.xlane.f32.xlu0 %v3200
    %v3202 = vpop.xlane.xlu0 %3201
    %v3203 = vsel %vm3157, %v3154, -inf
    %3204 = vmax.xlane.f32.xlu0 %v3203
    %v3205 = vpop.xlane.xlu0 %3204
    %v3206 = vsub.f32 %v3000, %v3160
    %v3207 = vsub.f32 %v3003, %v3163
    %v3208 = vsub.f32 %v3008, %v3166
    %v3209 = vsub.f32 %v3011, %v3169
    %v3210 = vsub.f32 %v3016, %v3172
    %v3211 = vsub.f32 %v3019, %v3175
    %v3212 = vsub.f32 %v3024, %v3178
    %v3213 = vsub.f32 %v3027, %v3181
    %v3214 = vsub.f32 %v3127, %v3184
    %v3215 = vsub.f32 %v3130, %v3187
    %v3216 = vsub.f32 %v3135, %v3190
    %v3217 = vsub.f32 %v3138, %v3193
    %v3218 = vsub.f32 %v3143, %v3196
    %v3219 = vsub.f32 %v3146, %v3199
    %v3220 = vsub.f32 %v3151, %v3202
    %v3221 = vsub.f32 %v3154, %v3205
    %v3222 = vmul.f32 %v3206, 1.442695
    %v3223 = vpow.pop %v3222
    %v3224 = vmul.f32 %v3207, 1.442695
    %v3225 = vpow.pop %v3224
    %v3226 = vmul.f32 %v3208, 1.442695
    %v3227 = vpow.pop %v3226
    %v3228 = vmul.f32 %v3209, 1.442695
    %v3229 = vpow.pop %v3228
    %v3230 = vmul.f32 %v3210, 1.442695
    %v3231 = vpow.pop %v3230
    %v3232 = vmul.f32 %v3211, 1.442695
    %v3233 = vpow.pop %v3232
    %v3234 = vmul.f32 %v3212, 1.442695
    %v3235 = vpow.pop %v3234
    %v3236 = vmul.f32 %v3213, 1.442695
    %v3237 = vpow.pop %v3236
    %v3238 = vmul.f32 %v3214, 1.442695
    %v3239 = vpow.pop %v3238
    %v3240 = vmul.f32 %v3215, 1.442695
    %v3241 = vpow.pop %v3240
    %v3242 = vmul.f32 %v3216, 1.442695
    %v3243 = vpow.pop %v3242
    %v3244 = vmul.f32 %v3217, 1.442695
    %v3245 = vpow.pop %v3244
    %v3246 = vmul.f32 %v3218, 1.442695
    %v3247 = vpow.pop %v3246
    %v3248 = vmul.f32 %v3219, 1.442695
    %v3249 = vpow.pop %v3248
    %v3250 = vmul.f32 %v3220, 1.442695
    %v3251 = vpow.pop %v3250
    %v3252 = vmul.f32 %v3221, 1.442695
    %v3253 = vpow.pop %v3252
    %v3254 = vsel %vm3157, %v3223, 0.0
    %3255 = vadd.xlane.f32.xlu0 %v3254
    %v3256 = vpop.xlane.xlu0 %3255
    %v3257 = vsel %vm3157, %v3225, 0.0
    %3258 = vadd.xlane.f32.xlu0 %v3257
    %v3259 = vpop.xlane.xlu0 %3258
    %v3260 = vsel %vm3157, %v3227, 0.0
    %3261 = vadd.xlane.f32.xlu0 %v3260
    %v3262 = vpop.xlane.xlu0 %3261
    %v3263 = vsel %vm3157, %v3229, 0.0
    %3264 = vadd.xlane.f32.xlu0 %v3263
    %v3265 = vpop.xlane.xlu0 %3264
    %v3266 = vsel %vm3157, %v3231, 0.0
    %3267 = vadd.xlane.f32.xlu0 %v3266
    %v3268 = vpop.xlane.xlu0 %3267
    %v3269 = vsel %vm3157, %v3233, 0.0
    %3270 = vadd.xlane.f32.xlu0 %v3269
    %v3271 = vpop.xlane.xlu0 %3270
    %v3272 = vsel %vm3157, %v3235, 0.0
    %3273 = vadd.xlane.f32.xlu0 %v3272
    %v3274 = vpop.xlane.xlu0 %3273
    %v3275 = vsel %vm3157, %v3237, 0.0
    %3276 = vadd.xlane.f32.xlu0 %v3275
    %v3277 = vpop.xlane.xlu0 %3276
    %v3278 = vsel %vm3157, %v3239, 0.0
    %3279 = vadd.xlane.f32.xlu0 %v3278
    %v3280 = vpop.xlane.xlu0 %3279
    %v3281 = vsel %vm3157, %v3241, 0.0
    %3282 = vadd.xlane.f32.xlu0 %v3281
    %v3283 = vpop.xlane.xlu0 %3282
    %v3284 = vsel %vm3157, %v3243, 0.0
    %3285 = vadd.xlane.f32.xlu0 %v3284
    %v3286 = vpop.xlane.xlu0 %3285
    %v3287 = vsel %vm3157, %v3245, 0.0
    %3288 = vadd.xlane.f32.xlu0 %v3287
    %v3289 = vpop.xlane.xlu0 %3288
    %v3290 = vsel %vm3157, %v3247, 0.0
    %3291 = vadd.xlane.f32.xlu0 %v3290
    %v3292 = vpop.xlane.xlu0 %3291
    %v3293 = vsel %vm3157, %v3249, 0.0
    %3294 = vadd.xlane.f32.xlu0 %v3293
    %v3295 = vpop.xlane.xlu0 %3294
    %v3296 = vsel %vm3157, %v3251, 0.0
    %3297 = vadd.xlane.f32.xlu0 %v3296
    %v3298 = vpop.xlane.xlu0 %3297
    %v3299 = vsel %vm3157, %v3253, 0.0
    %3300 = vadd.xlane.f32.xlu0 %v3299
    %v3301 = vpop.xlane.xlu0 %3300
    %v3302 = vrcp.pop %v3256
    %v3303 = vrcp.pop %v3259
    %v3304 = vrcp.pop %v3262
    %v3305 = vrcp.pop %v3265
    %v3306 = vrcp.pop %v3268
    %v3307 = vrcp.pop %v3271
    %v3308 = vrcp.pop %v3274
    %v3309 = vrcp.pop %v3277
    %v3310 = vrcp.pop %v3280
    %v3311 = vrcp.pop %v3283
    %v3312 = vrcp.pop %v3286
    %v3313 = vrcp.pop %v3289
    %v3314 = vrcp.pop %v3292
    %v3315 = vrcp.pop %v3295
    %v3316 = vrcp.pop %v3298
    %v3317 = vrcp.pop %v3301
    %v3318 = vmul.f32 %v3223, %v3302
    %v3319 = vmul.f32 %v3225, %v3303
    %v3320 = vmul.f32 %v3227, %v3304
    %v3321 = vmul.f32 %v3229, %v3305
    %v3322 = vmul.f32 %v3231, %v3306
    %v3323 = vmul.f32 %v3233, %v3307
    %v3324 = vmul.f32 %v3235, %v3308
    %v3325 = vmul.f32 %v3237, %v3309
    %v3326 = vmul.f32 %v3239, %v3310
    %v3327 = vmul.f32 %v3241, %v3311
    %v3328 = vmul.f32 %v3243, %v3312
    %v3329 = vmul.f32 %v3245, %v3313
    %v3330 = vmul.f32 %v3247, %v3314
    %v3331 = vmul.f32 %v3249, %v3315
    %v3332 = vmul.f32 %v3251, %v3316
    %v3333 = vmul.f32 %v3253, %v3317
    %v3334 = vsel %vm3157, %v3318, 0.0
    %v3335 = vsel %vm3157, %v3319, 0.0
    %v3336 = vadd.f32 %v3334, %v3335
    %v3337 = vsel %vm3157, %v3320, 0.0
    %v3338 = vadd.f32 %v3336, %v3337
    %v3339 = vsel %vm3157, %v3321, 0.0
    %v3340 = vadd.f32 %v3338, %v3339
    %v3341 = vsel %vm3157, %v3322, 0.0
    %v3342 = vadd.f32 %v3340, %v3341
    %v3343 = vsel %vm3157, %v3323, 0.0
    %v3344 = vadd.f32 %v3342, %v3343
    %v3345 = vsel %vm3157, %v3324, 0.0
    %v3346 = vadd.f32 %v3344, %v3345
    %v3347 = vsel %vm3157, %v3325, 0.0
    %v3348 = vadd.f32 %v3346, %v3347
    %v3349 = vrot.slane %v3348, 4
    %v3350 = vadd.f32 %v3348, %v3349
    %v3351 = vrot.slane %v3350, 2
    %v3352 = vadd.f32 %v3350, %v3351
    %v3353 = vrot.slane %v3352, 1
    %v3354 = vadd.f32 %v3352, %v3353
    %v3355 = vsel %vm3157, %v3326, 0.0
    %v3356 = vsel %vm3157, %v3327, 0.0
    %v3357 = vadd.f32 %v3355, %v3356
    %v3358 = vsel %vm3157, %v3328, 0.0
    %v3359 = vadd.f32 %v3357, %v3358
    %v3360 = vsel %vm3157, %v3329, 0.0
    %v3361 = vadd.f32 %v3359, %v3360
    %v3362 = vsel %vm3157, %v3330, 0.0
    %v3363 = vadd.f32 %v3361, %v3362
    %v3364 = vsel %vm3157, %v3331, 0.0
    %v3365 = vadd.f32 %v3363, %v3364
    %v3366 = vsel %vm3157, %v3332, 0.0
    %v3367 = vadd.f32 %v3365, %v3366
    %v3368 = vsel %vm3157, %v3333, 0.0
    %v3369 = vadd.f32 %v3367, %v3368
    %v3370 = vrot.slane %v3369, 4
    %v3371 = vadd.f32 %v3369, %v3370
    %v3372 = vrot.slane %v3371, 2
    %v3373 = vadd.f32 %v3371, %v3372
    %v3374 = vrot.slane %v3373, 1
    %v3375 = vadd.f32 %v3373, %v3374
    %v3376 = vmul.f32 %v3354, 0.015625
    %v3377 = vmul.f32 %v3375, 0.015625
    %v3378 = vpack.c.bf16 %v3376, %v3376
    %v3379 = vpack.c.bf16 %v3377, %v3377
    %v3396 = vunpack.c.l.b16 %v2638
    %v3397 = vunpack.c.l.b16 %v2645
    %v3398 = vunpack.c.l.b16 %v2652
    %v3399 = vunpack.c.l.b16 %v2659
    %v3400 = vunpack.c.l.b16 %v2666
    %v3401 = vunpack.c.l.b16 %v2673
    %v3402 = vunpack.c.l.b16 %v2680
    %v3403 = vunpack.c.l.b16 %v2687
    %v3404 = vunpack.c.l.b16 %v2694
    %v3405 = vunpack.c.l.b16 %v2701
    %v3406 = vunpack.c.l.b16 %v2708
    %v3407 = vunpack.c.l.b16 %v2715
    %v3408 = vunpack.c.l.b16 %v2722
    %v3409 = vunpack.c.l.b16 %v2729
    %v3410 = vunpack.c.l.b16 %v2736
    %v3411 = vunpack.c.l.b16 %v2743
    %v3412 = vsel %vm2928, %v3397, %v3396
    %v3413 = vsel %vm2930, %v3398, %v3412
    %v3414 = vsel %vm2932, %v3399, %v3413
    %v3415 = vsel %vm2934, %v3400, %v3414
    %v3416 = vsel %vm2936, %v3401, %v3415
    %v3417 = vsel %vm2938, %v3402, %v3416
    %v3418 = vsel %vm2940, %v3403, %v3417
    %v3419 = vsel %vm2928, %v3405, %v3404
    %v3420 = vsel %vm2930, %v3406, %v3419
    %v3421 = vsel %vm2932, %v3407, %v3420
    %v3422 = vsel %vm2934, %v3408, %v3421
    %v3423 = vsel %vm2936, %v3409, %v3422
    %v3424 = vsel %vm2938, %v3410, %v3423
    %v3425 = vsel %vm2940, %v3411, %v3424
    %v3426 = vpack.c.b16 %v3425, %v3418
    %v3429 = vsel %vm3157, %v3378, 0
    %3431 = vmatprep.subr.bf16.mxu0 0
    %3432 = vmatpush1.bf16.msra.mxu0 %v3426
    %3433 = vmatprep.subr.bf16.mxu0 0
    %3434 = vmatpush1.bf16.msra.mxu0 0
    %3435 = vmatprep.subr.bf16.mxu0 0
    %3436 = vmatpush1.bf16.msra.mxu0 0
    %3437 = vmatprep.subr.bf16.mxu0 0
    %3438 = vmatpush1.bf16.msra.mxu0 0
    %3439 = vmatprep.subr.bf16.mxu0 0
    %3440 = vmatpush1.bf16.msra.mxu0 0
    %3441 = vmatprep.subr.bf16.mxu0 0
    %3442 = vmatpush1.bf16.msra.mxu0 0
    %3443 = vmatprep.subr.bf16.mxu0 0
    %3444 = vmatpush1.bf16.msra.mxu0 0
    %3445 = vmatprep.subr.bf16.mxu0 0
    %3446 = vmatpush1.bf16.msra.mxu0 0
    %3447 = vmatprep.subr.bf16.mxu0 0
    %3448 = vmatpush1.bf16.msra.mxu0 0
    %3449 = vmatprep.subr.bf16.mxu0 0
    %3450 = vmatpush1.bf16.msra.mxu0 0
    %3451 = vmatprep.subr.bf16.mxu0 0
    %3452 = vmatpush1.bf16.msra.mxu0 0
    %3453 = vmatprep.subr.bf16.mxu0 0
    %3454 = vmatpush1.bf16.msra.mxu0 0
    %3455 = vmatprep.subr.bf16.mxu0 0
    %3456 = vmatpush1.bf16.msra.mxu0 0
    %3457 = vmatprep.subr.bf16.mxu0 0
    %3458 = vmatpush1.bf16.msra.mxu0 0
    %3459 = vmatprep.subr.bf16.mxu0 0
    %3460 = vmatpush1.bf16.msra.mxu0 0
    %3461 = vmatprep.subr.bf16.mxu0 0
    %3462 = vmatpush1.bf16.msra.mxu0 0
    %3463 = vmatprep.mubr.bf16.mxu0 0
    %3464 = vmatmul.mubr.bf16.gmra.mrb[0].mxu0 %v3429
    %v3465 = vpop.f32.mrb[0].mxu0
    %v3466 = vadd.f32 0.0, %v3465
    %v3467 = vpop.f32.mrb[0].mxu0
    %v3468 = vpop.f32.mrb[0].mxu0
    %v3469 = vpop.f32.mrb[0].mxu0
    %3470 = vdwg.mxu0
    %v3487 = vunpack.c.l.b16 %v2750
    %v3488 = vunpack.c.l.b16 %v2757
    %v3489 = vunpack.c.l.b16 %v2764
    %v3490 = vunpack.c.l.b16 %v2771
    %v3491 = vunpack.c.l.b16 %v2778
    %v3492 = vunpack.c.l.b16 %v2785
    %v3493 = vunpack.c.l.b16 %v2792
    %v3494 = vunpack.c.l.b16 %v2799
    %v3495 = vunpack.c.l.b16 %v2806
    %v3496 = vunpack.c.l.b16 %v2813
    %v3497 = vunpack.c.l.b16 %v2820
    %v3498 = vunpack.c.l.b16 %v2827
    %v3499 = vunpack.c.l.b16 %v2834
    %v3500 = vunpack.c.l.b16 %v2841
    %v3501 = vunpack.c.l.b16 %v2848
    %v3502 = vunpack.c.l.b16 %v2855
    %v3503 = vsel %vm2928, %v3488, %v3487
    %v3504 = vsel %vm2930, %v3489, %v3503
    %v3505 = vsel %vm2932, %v3490, %v3504
    %v3506 = vsel %vm2934, %v3491, %v3505
    %v3507 = vsel %vm2936, %v3492, %v3506
    %v3508 = vsel %vm2938, %v3493, %v3507
    %v3509 = vsel %vm2940, %v3494, %v3508
    %v3510 = vsel %vm2928, %v3496, %v3495
    %v3511 = vsel %vm2930, %v3497, %v3510
    %v3512 = vsel %vm2932, %v3498, %v3511
    %v3513 = vsel %vm2934, %v3499, %v3512
    %v3514 = vsel %vm2936, %v3500, %v3513
    %v3515 = vsel %vm2938, %v3501, %v3514
    %v3516 = vsel %vm2940, %v3502, %v3515
    %v3517 = vpack.c.b16 %v3516, %v3509
    %v3520 = vsel %vm3157, %v3379, 0
    %3522 = vmatprep.subr.bf16.mxu0 0
    %3523 = vmatpush1.bf16.msra.mxu0 %v3517
    %3524 = vmatprep.subr.bf16.mxu0 0
    %3525 = vmatpush1.bf16.msra.mxu0 0
    %3526 = vmatprep.subr.bf16.mxu0 0
    %3527 = vmatpush1.bf16.msra.mxu0 0
    %3528 = vmatprep.subr.bf16.mxu0 0
    %3529 = vmatpush1.bf16.msra.mxu0 0
    %3530 = vmatprep.subr.bf16.mxu0 0
    %3531 = vmatpush1.bf16.msra.mxu0 0
    %3532 = vmatprep.subr.bf16.mxu0 0
    %3533 = vmatpush1.bf16.msra.mxu0 0
    %3534 = vmatprep.subr.bf16.mxu0 0
    %3535 = vmatpush1.bf16.msra.mxu0 0
    %3536 = vmatprep.subr.bf16.mxu0 0
    %3537 = vmatpush1.bf16.msra.mxu0 0
    %3538 = vmatprep.subr.bf16.mxu0 0
    %3539 = vmatpush1.bf16.msra.mxu0 0
    %3540 = vmatprep.subr.bf16.mxu0 0
    %3541 = vmatpush1.bf16.msra.mxu0 0
    %3542 = vmatprep.subr.bf16.mxu0 0
    %3543 = vmatpush1.bf16.msra.mxu0 0
    %3544 = vmatprep.subr.bf16.mxu0 0
    %3545 = vmatpush1.bf16.msra.mxu0 0
    %3546 = vmatprep.subr.bf16.mxu0 0
    %3547 = vmatpush1.bf16.msra.mxu0 0
    %3548 = vmatprep.subr.bf16.mxu0 0
    %3549 = vmatpush1.bf16.msra.mxu0 0
    %3550 = vmatprep.subr.bf16.mxu0 0
    %3551 = vmatpush1.bf16.msra.mxu0 0
    %3552 = vmatprep.subr.bf16.mxu0 0
    %3553 = vmatpush1.bf16.msra.mxu0 0
    %3554 = vmatprep.mubr.bf16.mxu0 0
    %3555 = vmatmul.mubr.bf16.gmra.mrb[0].mxu0 %v3520
    %v3556 = vpop.f32.mrb[0].mxu0
    %v3557 = vadd.f32 0.0, %v3556
    %v3558 = vpop.f32.mrb[0].mxu0
    %v3559 = vpop.f32.mrb[0].mxu0
    %v3560 = vpop.f32.mrb[0].mxu0
    %3561 = vdwg.mxu0
    %v3564 = vrot.slane %v3557, 7
    %v3565 = vsel %vm2928, %v3564, %v3466
    %vm3567 = vcmask 254976
    %3568 = vst.msk [vmem:[#allocation2] sm:$0x3] %vm3567, %v3565
    %v3569 = vunpack.c.l.bf16 %v23
    %v3570 = vunpack.c.l.bf16 %v24
    %v3571 = vunpack.c.l.bf16 %v25
    %v3572 = vunpack.c.l.bf16 %v26
    %v3573 = vunpack.c.l.bf16 %v27
    %v3574 = vunpack.c.l.bf16 %v28
    %v3575 = vunpack.c.l.bf16 %v29
    %v3576 = vunpack.c.l.bf16 %v30
    %v3577 = vunpack.c.l.bf16 %v31
    %v3578 = vunpack.c.l.bf16 %v32
    %v3579 = vunpack.c.l.bf16 %v33
    %v3580 = vunpack.c.l.bf16 %v34
    %v3581 = vunpack.c.l.bf16 %v35
    %v3582 = vunpack.c.l.bf16 %v36
    %v3583 = vunpack.c.l.bf16 %v37
    %v3584 = vunpack.c.l.bf16 %v38
    %v3585 = vsel %vm111, %v3569, 0.0
    %v3586 = vsel %vm111, %v3570, 0.0
    %v3587 = vadd.f32 %v3585, %v3586
    %v3588 = vsel %vm111, %v3571, 0.0
    %v3589 = vadd.f32 %v3587, %v3588
    %v3590 = vsel %vm111, %v3572, 0.0
    %v3591 = vadd.f32 %v3589, %v3590
    %v3592 = vsel %vm111, %v3573, 0.0
    %v3593 = vadd.f32 %v3591, %v3592
    %v3594 = vsel %vm111, %v3574, 0.0
    %v3595 = vadd.f32 %v3593, %v3594
    %v3596 = vsel %vm111, %v3575, 0.0
    %v3597 = vadd.f32 %v3595, %v3596
    %v3598 = vsel %vm111, %v3576, 0.0
    %v3599 = vadd.f32 %v3597, %v3598
    %v3600 = vrot.slane %v3599, 4
    %v3601 = vadd.f32 %v3599, %v3600
    %v3602 = vrot.slane %v3601, 2
    %v3603 = vadd.f32 %v3601, %v3602
    %v3604 = vrot.slane %v3603, 1
    %v3605 = vadd.f32 %v3603, %v3604
    %v3606 = vsel %vm111, %v3577, 0.0
    %v3607 = vsel %vm111, %v3578, 0.0
    %v3608 = vadd.f32 %v3606, %v3607
    %v3609 = vsel %vm111, %v3579, 0.0
    %v3610 = vadd.f32 %v3608, %v3609
    %v3611 = vsel %vm111, %v3580, 0.0
    %v3612 = vadd.f32 %v3610, %v3611
    %v3613 = vsel %vm111, %v3581, 0.0
    %v3614 = vadd.f32 %v3612, %v3613
    %v3615 = vsel %vm111, %v3582, 0.0
    %v3616 = vadd.f32 %v3614, %v3615
    %v3617 = vsel %vm111, %v3583, 0.0
    %v3618 = vadd.f32 %v3616, %v3617
    %v3619 = vsel %vm111, %v3584, 0.0
    %v3620 = vadd.f32 %v3618, %v3619
    %v3621 = vrot.slane %v3620, 4
    %v3622 = vadd.f32 %v3620, %v3621
    %v3623 = vrot.slane %v3622, 2
    %v3624 = vadd.f32 %v3622, %v3623
    %v3625 = vrot.slane %v3624, 1
    %v3626 = vadd.f32 %v3624, %v3625
    %v3627 = vmul.f32 %v3605, 0.015625
    %v3628 = vmul.f32 %v3626, 0.015625
    %v3631 = vsel %vm2928, %v3628, %v3627
    %vm3633 = vcmask 517120
    %3634 = vst.msk [vmem:[#allocation4] sm:$0x3] %vm3633, %v3631
    // Predicated region
    $region18: #{tpu_custom_call.1} parent=1 // pred_check
      _
    $region19: #{tpu_custom_call.1} parent=1 // pred_check_branch
      %3636 = sbr.rel (0) target = $region21
    $region20: #{tpu_custom_call.1} parent=1 // pred_region
      %s3638 = ssub.s32 32, 32
      %3639 = vsyncadd [#allocation3], %s3638
      %s3641 = sshll.u32 [#allocation2], 4
      %s3642 = int_to_ptr.vmem [resolvable:$true] %s3641
      %3644 = dma.vmem_to_hbm [thread:$0]  %s3642, 32, %s4, [#allocation3]
    $region21: #{tpu_custom_call.1} parent=1 // pred_fallthru
      _
    // Predicated region
    $region22: #{tpu_custom_call.1} parent=1 // pred_check
      _
    $region23: #{tpu_custom_call.1} parent=1 // pred_check_branch
      %3646 = sbr.rel (0) target = $region25
    $region24: #{tpu_custom_call.1} parent=1 // pred_region
      %s3648 = ssub.s32 32, 32
      %3649 = vsyncadd [#allocation5], %s3648
      %s3651 = sshll.u32 [#allocation4], 4
      %s3652 = int_to_ptr.vmem [resolvable:$true] %s3651
      %3654 = dma.vmem_to_hbm [thread:$0]  %s3652, 32, %s5, [#allocation5]
    $region25: #{tpu_custom_call.1} parent=1 // pred_fallthru
      _
    // Predicated region
    $region26: #{tpu_custom_call.1} parent=1 // pred_check
      _
    $region27: #{tpu_custom_call.1} parent=1 // pred_check_branch
      %3656 = sbr.rel (0) target = $region29
    $region28: #{tpu_custom_call.1} parent=1 // pred_region
      %3657 = dma.done [#allocation3], 32
    $region29: #{tpu_custom_call.1} parent=1 // pred_fallthru
      _
    // Predicated region
    $region30: #{tpu_custom_call.1} parent=1 // pred_check
      _
    $region31: #{tpu_custom_call.1} parent=1 // pred_check_branch
      %3659 = sbr.rel (0) target = $region33
    $region32: #{tpu_custom_call.1} parent=1 // pred_region
      %3660 = dma.done [#allocation5], 32
    $region33: #{tpu_custom_call.1} parent=1 // pred_fallthru
      _
    %3661 = vsyncpa [#allocation3], 1
    %3662 = vsyncpa [#allocation5], 1

</llo_original>
